<compile_context>
chip_gen: v7x
topology: tpu7x:2x2x1
jax: 0.10.0
libtpu: 0.0.40
codegen_flags: <defaults>
</compile_context>

<pallas_src>
import math
import functools
import jax
import jax.numpy as jnp
from jax import lax
from jax.experimental import pallas as pl
from jax.experimental.pallas import tpu as pltpu

HIDDEN = 32
NUM_HEADS = 4
HEAD_DIM = HIDDEN // NUM_HEADS       # 8
CHUNKS = HIDDEN // HEAD_DIM          # 4 column chunks of width HEAD_DIM
NUM_LAYERS = 2
POS_ENC = 2
FEAT = 4
OUT_SIZE = 4
N_NODES = 16                         # two graphs of 8 nodes each (batched graph)
N_GRAPHS = 2
NODES_PER_GRAPH = N_NODES // N_GRAPHS
P64 = NUM_HEADS * N_NODES            # rows of the flattened (chunk, node) layout = 64
EPS = 1e-5
SCALING = HEAD_DIM ** (-0.5)
NEG_INF = -1e30
LANES = 128                          # lane-padded width of all packed operands

# ---- packed weight-slab entry indices -------------------------------------------
W_IN = 0
def W_QKV(l): return 1 + 4 * l + 0
def W_O(l):   return 1 + 4 * l + 1
def W_F1(l):  return 1 + 4 * l + 2
def W_F2(l):  return 1 + 4 * l + 3
W_MLP1 = 1 + 4 * NUM_LAYERS
W_MLP2 = W_MLP1 + 1
N_WSLAB = W_MLP2 + 1

# ---- packed bias/BN-slab row indices ---------------------------------------------
V_BIN = 0
def V_LAYER(l):
    base = 1 + 8 * l
    return dict(bqkv=base, bo=base + 1, g1=base + 2, be1=base + 3,
                bf1=base + 4, bf2=base + 5, g2=base + 6, be2=base + 7)
V_MLP_B1 = 1 + 8 * NUM_LAYERS
V_MLP_B2 = V_MLP_B1 + 1
N_VSLAB = ((V_MLP_B2 + 1 + 7) // 8) * 8


# ----------------------------- fused Pallas kernel --------------------------------

def fused_gt_kernel(x_ref, mask_ref, w_ref, v_ref, out_ref, q_s, k_s, v_s, ao_s):
    f32 = jnp.float32
    bf16 = jnp.bfloat16
    dot = functools.partial(jnp.dot, preferred_element_type=f32)

    def vec(row):                                  # (1, 128) f32 bias / BN row
        return v_ref[pl.ds(row, 1), :]

    amul = mask_ref[0]                             # (64, 64) multiplicative A mask
    aadd = mask_ref[1]                             # (64, 64) additive cross-head mask

    # merged-attention scratch: zero the lane padding once; only cols 0:HIDDEN are
    # rewritten per layer, so the pad columns stay exactly 0 for the full matmuls.
    ao_s[...] = jnp.zeros((N_NODES, LANES), f32)

    # input projection: h = [X | pos_enc | 0] @ [Wp; Wpe; 0] + (bp + bpe)
    h = dot(x_ref[...].astype(bf16), w_ref[W_IN]) + vec(V_BIN)      # (16, 128)

    for li in range(NUM_LAYERS):
        V = V_LAYER(li)
        h1 = h

        # fused q/k/v projection (q part pre-scaled by head_dim**-0.5 at pack time)
        qkv = dot(h.astype(bf16), w_ref[W_QKV(li)]) + vec(V['bqkv'])  # (16, 128)

        # relayout (16, 3*HIDDEN) -> three (64, HEAD_DIM) tensors, chunk-major row
        # order p = 16*c + n (node n, column-chunk c).  With masks built in the
        # same ordering this reproduces PyTorch's q.reshape(num_heads, N, head_dim)
        # semantics exactly (no selector matmuls, no value reshapes).
        for c in range(CHUNKS):
            rows = pl.ds(N_NODES * c, N_NODES)
            q_s[rows, :] = qkv[:, HEAD_DIM * c:HEAD_DIM * (c + 1)]
            k_s[rows, :] = qkv[:, HIDDEN + HEAD_DIM * c:HIDDEN + HEAD_DIM * (c + 1)]
            v_s[rows, :] = qkv[:, 2 * HIDDEN + HEAD_DIM * c:2 * HIDDEN + HEAD_DIM * (c + 1)]
        q64 = q_s[...].astype(bf16)
        k64 = k_s[...].astype(bf16)
        v64 = v_s[...].astype(bf16)

        # all heads at once: per-head q @ k^T lives in same-head blocks of the
        # (64, 64) score matrix; cross-head entries are pushed to -inf.
        s = lax.dot_general(q64, k64, (((1,), (1,)), ((), ())),
                            preferred_element_type=f32)               # (64, 64)
        s = s * amul + aadd                       # attn = t * A ; cross-head -> -inf
        m = jnp.max(s, axis=-1, keepdims=True)
        e = jnp.exp(s - m)
        p = e * pl.reciprocal(jnp.sum(e, axis=-1, keepdims=True), approx=True)
        o64 = dot(p.astype(bf16), v64)                                 # (64, 8) f32

        # merge heads back to (16, HIDDEN) inside the lane-padded scratch
        for c in range(CHUNKS):
            ao_s[:, pl.ds(HEAD_DIM * c, HEAD_DIM)] = o64[N_NODES * c:N_NODES * (c + 1), :]

        # out_proj + residual
        y = dot(ao_s[...].astype(bf16), w_ref[W_O(li)]) + vec(V['bo']) + h1

        # BatchNorm1d #1 (training-mode batch statistics, biased variance)
        mu = jnp.mean(y, axis=0, keepdims=True)
        var = jnp.mean((y - mu) ** 2, axis=0, keepdims=True)
        h2 = (y - mu) * lax.rsqrt(var + EPS) * vec(V['g1']) + vec(V['be1'])

        # FFN(relu) + residual + BatchNorm1d #2
        f = jnp.maximum(dot(h2.astype(bf16), w_ref[W_F1(li)]) + vec(V['bf1']), 0.0)
        f = dot(f.astype(bf16), w_ref[W_F2(li)]) + vec(V['bf2'])
        y2 = h2 + f
        mu2 = jnp.mean(y2, axis=0, keepdims=True)
        var2 = jnp.mean((y2 - mu2) ** 2, axis=0, keepdims=True)
        h = (y2 - mu2) * lax.rsqrt(var2 + EPS) * vec(V['g2']) + vec(V['be2'])

    # SumNode pooling (per-graph node sum) + MLP head
    # TODO(synk): DGL batched-graph bookkeeping (dgl.unbatch) has no Pallas analogue;
    # graphs are contiguous 8-node row blocks, so the per-graph sum is a row-block sum.
    for g in range(N_GRAPHS):
        pooled = jnp.sum(h[NODES_PER_GRAPH * g:NODES_PER_GRAPH * (g + 1), :],
                         axis=0, keepdims=True)                         # (1, 128)
        z = jnp.maximum(dot(pooled.astype(bf16), w_ref[W_MLP1]) + vec(V_MLP_B1), 0.0)
        o = dot(z.astype(bf16), w_ref[W_MLP2]) + vec(V_MLP_B2)          # (1, 128)
        out_ref[pl.ds(g, 1), :] = o[:, 0:OUT_SIZE]


# --------------------------------- packing ----------------------------------------

def pack_weights(params):
    """One-time host-side packing of all weights into two lane-dense slabs."""
    def entry(w):
        e = jnp.zeros((LANES, LANES), jnp.float32)
        return e.at[:w.shape[0], :w.shape[1]].set(w)

    def row(v):
        r = jnp.zeros((LANES,), jnp.float32)
        return r.at[:v.shape[-1]].set(v.reshape(-1))

    wlist = [jnp.zeros((LANES, LANES), jnp.float32)] * N_WSLAB
    vlist = [jnp.zeros((LANES,), jnp.float32)] * N_VSLAB

    wlist[W_IN] = entry(jnp.concatenate([params["wp"], params["wpe"]], axis=0))
    vlist[V_BIN] = row(params["bp"] + params["bpe"])
    for li, l in enumerate(params["layers"]):
        V = V_LAYER(li)
        wqkv = jnp.concatenate([l["wq"] * SCALING, l["wk"], l["wv"]], axis=1)
        bqkv = jnp.concatenate([l["bq"] * SCALING, l["bk"], l["bv"]], axis=1)
        wlist[W_QKV(li)] = entry(wqkv)
        wlist[W_O(li)] = entry(l["wo"])
        wlist[W_F1(li)] = entry(l["wf1"])
        wlist[W_F2(li)] = entry(l["wf2"])
        vlist[V["bqkv"]] = row(bqkv)
        vlist[V["bo"]] = row(l["bo"])
        vlist[V["g1"]] = row(l["g1"])
        vlist[V["be1"]] = row(l["be1"])
        vlist[V["bf1"]] = row(l["bf1"])
        vlist[V["bf2"]] = row(l["bf2"])
        vlist[V["g2"]] = row(l["g2"])
        vlist[V["be2"]] = row(l["be2"])
    wlist[W_MLP1] = entry(params["mlp_w1"])
    wlist[W_MLP2] = entry(params["mlp_w2"])
    vlist[V_MLP_B1] = row(params["mlp_b1"])
    vlist[V_MLP_B2] = row(params["mlp_b2"])

    wslab = jnp.stack(wlist).astype(jnp.bfloat16)       # (11, 128, 128) bf16
    vslab = jnp.stack(vlist)                            # (24, 128) f32
    return wslab, vslab


@jax.jit
def gt_model_forward(wslab, vslab, A, X, pos_enc):
    # per-call (data / adjacency dependent) packing only
    x_in = jnp.zeros((N_NODES, LANES), jnp.float32)
    x_in = x_in.at[:, :FEAT].set(X)
    x_in = x_in.at[:, FEAT:FEAT + POS_ENC].set(pos_enc)

    # masks in the chunk-major flattened-head ordering p = 16*c + n:
    #   head(p) = (NUM_HEADS*n + c) // N_NODES,  n2(p) = (NUM_HEADS*n + c) % N_NODES
    p = jnp.arange(P64)
    c = p // N_NODES
    n = p % N_NODES
    head = (NUM_HEADS * n + c) // N_NODES
    n2 = (NUM_HEADS * n + c) % N_NODES
    same = head[:, None] == head[None, :]
    amul = jnp.where(same, A[n2[:, None], n2[None, :]], 0.0)
    aadd = jnp.where(same, 0.0, NEG_INF)
    masks = jnp.stack([amul, aadd]).astype(jnp.float32)  # (2, 64, 64)

    return pl.pallas_call(
        fused_gt_kernel,
        out_shape=jax.ShapeDtypeStruct((N_GRAPHS, OUT_SIZE), jnp.float32),
        scratch_shapes=[
            pltpu.VMEM((P64, HEAD_DIM), jnp.float32),    # q (chunk-major)
            pltpu.VMEM((P64, HEAD_DIM), jnp.float32),    # k
            pltpu.VMEM((P64, HEAD_DIM), jnp.float32),    # v
            pltpu.VMEM((N_NODES, LANES), jnp.float32),   # merged attention output
        ],
    )(x_in, masks, wslab, vslab)


# ------------------------------ params / data --------------------------------------

def init_linear(key, fan_in, fan_out):
    k1, k2 = jax.random.split(key)
    bound = 1.0 / math.sqrt(fan_in)
    w = jax.random.uniform(k1, (fan_in, fan_out), jnp.float32, -bound, bound)
    b = jax.random.uniform(k2, (1, fan_out), jnp.float32, -bound, bound)
    return w, b


def init_params(key):
    keys = jax.random.split(key, 4 + NUM_LAYERS)
    wp, bp = init_linear(keys[0], FEAT, HIDDEN)
    wpe, bpe = init_linear(keys[1], POS_ENC, HIDDEN)
    mlp_w1, mlp_b1 = init_linear(keys[2], HIDDEN, HIDDEN)
    mlp_w2, mlp_b2 = init_linear(keys[3], HIDDEN, OUT_SIZE)
    layers = []
    for li in range(NUM_LAYERS):
        lk = jax.random.split(keys[4 + li], 6)
        wq, bq = init_linear(lk[0], HIDDEN, HIDDEN)
        wk, bk = init_linear(lk[1], HIDDEN, HIDDEN)
        wv, bv = init_linear(lk[2], HIDDEN, HIDDEN)
        wo, bo = init_linear(lk[3], HIDDEN, HIDDEN)
        wf1, bf1 = init_linear(lk[4], HIDDEN, 2 * HIDDEN)
        wf2, bf2 = init_linear(lk[5], 2 * HIDDEN, HIDDEN)
        layers.append(dict(
            wq=wq, bq=bq, wk=wk, bk=bk, wv=wv, bv=bv, wo=wo, bo=bo,
            wf1=wf1, bf1=bf1, wf2=wf2, bf2=bf2,
            g1=jnp.ones((1, HIDDEN), jnp.float32), be1=jnp.zeros((1, HIDDEN), jnp.float32),
            g2=jnp.ones((1, HIDDEN), jnp.float32), be2=jnp.zeros((1, HIDDEN), jnp.float32)))
    return dict(wp=wp, bp=bp, wpe=wpe, bpe=bpe,
                mlp_w1=mlp_w1, mlp_b1=mlp_b1, mlp_w2=mlp_w2, mlp_b2=mlp_b2,
                layers=layers)


if __name__ == "__main__":
    key = jax.random.PRNGKey(0)
    kp, kx, kpe, ka = jax.random.split(key, 4)

    params = init_params(kp)
    wslab, vslab = pack_weights(params)          # one-time packing, outside the jitted path

    X = jax.random.normal(kx, (N_NODES, FEAT), jnp.float32)
    pos_enc = jax.random.normal(kpe, (N_NODES, POS_ENC), jnp.float32)

    # Dense 0/1 adjacency of a batched graph: block-diagonal (two graphs of 8 nodes).
    # TODO(synk): torch.sparse_coo_tensor would sum duplicate edges; we build a
    # simple 0/1 dense adjacency directly (no duplicate edges).
    block_mask = jnp.kron(jnp.eye(N_GRAPHS, dtype=jnp.float32),
                          jnp.ones((NODES_PER_GRAPH, NODES_PER_GRAPH), jnp.float32))
    A = jax.random.bernoulli(ka, 0.3, (N_NODES, N_NODES)).astype(jnp.float32) * block_mask

    out = gt_model_forward(wslab, vslab, A, X, pos_enc)
    out = jax.block_until_ready(out)
    assert out.shape == (N_GRAPHS, OUT_SIZE)
    assert bool(jnp.all(jnp.isfinite(out)))
    print("KERNEL_OK")
</pallas_src>

<mosaic_0001>
module attributes {stable_mosaic.version = 11 : i64} {
  func.func @fused_gt_kernel(%arg0: memref<16x128xf32, #tpu.memory_space<vmem>>, %arg1: memref<2x64x64xf32, #tpu.memory_space<vmem>>, %arg2: memref<11x128x128xbf16, #tpu.memory_space<vmem>>, %arg3: memref<24x128xf32, #tpu.memory_space<vmem>>, %arg4: memref<2x4xf32, #tpu.memory_space<vmem>>, %arg5: memref<64x8xf32, #tpu.memory_space<vmem>>, %arg6: memref<64x8xf32, #tpu.memory_space<vmem>>, %arg7: memref<64x8xf32, #tpu.memory_space<vmem>>, %arg8: memref<16x128xf32, #tpu.memory_space<vmem>>) attributes {dimension_semantics = [], scalar_prefetch = 0 : i64, scratch_operands = 4 : i64, tpu.core_type = #tpu.core_type<tc>} {
    %c0 = arith.constant 0 : index
    %c0_0 = arith.constant 0 : index
    %c0_1 = arith.constant 0 : index
    %0 = vector.load %arg1[%c0, %c0_0, %c0_1] : memref<2x64x64xf32, #tpu.memory_space<vmem>>, vector<1x64x64xf32>
    %1 = vector.shape_cast %0 : vector<1x64x64xf32> to vector<64x64xf32>
    %c1 = arith.constant 1 : index
    %c0_2 = arith.constant 0 : index
    %c0_3 = arith.constant 0 : index
    %2 = vector.load %arg1[%c1, %c0_2, %c0_3] : memref<2x64x64xf32, #tpu.memory_space<vmem>>, vector<1x64x64xf32>
    %3 = vector.shape_cast %2 : vector<1x64x64xf32> to vector<64x64xf32>
    %cst = arith.constant 0.000000e+00 : f32
    %4 = vector.broadcast %cst : f32 to vector<16x128xf32>
    %c0_4 = arith.constant 0 : index
    %c0_5 = arith.constant 0 : index
    %5 = vector.load %arg8[%c0_4, %c0_5] : memref<16x128xf32, #tpu.memory_space<vmem>>, vector<16x128xf32>
    tpu.vector_store %arg8[%c0_4, %c0_5], %4 {strides = array<i32>} : memref<16x128xf32, #tpu.memory_space<vmem>>, vector<16x128xf32>,
    %c0_6 = arith.constant 0 : index
    %c0_7 = arith.constant 0 : index
    %6 = vector.load %arg0[%c0_6, %c0_7] : memref<16x128xf32, #tpu.memory_space<vmem>>, vector<16x128xf32>
    %7 = arith.truncf %6 : vector<16x128xf32> to vector<16x128xbf16>
    %c0_8 = arith.constant 0 : index
    %c0_9 = arith.constant 0 : index
    %c0_10 = arith.constant 0 : index
    %8 = vector.load %arg2[%c0_8, %c0_9, %c0_10] : memref<11x128x128xbf16, #tpu.memory_space<vmem>>, vector<1x128x128xbf16>
    %9 = vector.shape_cast %8 : vector<1x128x128xbf16> to vector<128x128xbf16>
    %cst_11 = arith.constant dense<0.000000e+00> : vector<16x128xf32>
    %10 = tpu.matmul %7, %9, %cst_11 {dimension_numbers = #tpu.dot_dimension_numbers<[1], [0], [0], [1], [0, 0, 1, 1], [], []>} : vector<16x128xbf16>, vector<128x128xbf16>, vector<16x128xf32> -> vector<16x128xf32>
    %c0_12 = arith.constant 0 : index
    %c0_13 = arith.constant 0 : index
    %11 = vector.load %arg3[%c0_12, %c0_13] : memref<24x128xf32, #tpu.memory_space<vmem>>, vector<1x128xf32>
    %12 = vector.broadcast %11 : vector<1x128xf32> to vector<16x128xf32>
    %13 = arith.addf %10, %12 : vector<16x128xf32>
    %14 = arith.truncf %13 : vector<16x128xf32> to vector<16x128xbf16>
    %c1_14 = arith.constant 1 : index
    %c0_15 = arith.constant 0 : index
    %c0_16 = arith.constant 0 : index
    %15 = vector.load %arg2[%c1_14, %c0_15, %c0_16] : memref<11x128x128xbf16, #tpu.memory_space<vmem>>, vector<1x128x128xbf16>
    %16 = vector.shape_cast %15 : vector<1x128x128xbf16> to vector<128x128xbf16>
    %cst_17 = arith.constant dense<0.000000e+00> : vector<16x128xf32>
    %17 = tpu.matmul %14, %16, %cst_17 {dimension_numbers = #tpu.dot_dimension_numbers<[1], [0], [0], [1], [0, 0, 1, 1], [], []>} : vector<16x128xbf16>, vector<128x128xbf16>, vector<16x128xf32> -> vector<16x128xf32>
    %c1_18 = arith.constant 1 : index
    %c0_19 = arith.constant 0 : index
    %18 = vector.load %arg3[%c1_18, %c0_19] : memref<24x128xf32, #tpu.memory_space<vmem>>, vector<1x128xf32>
    %19 = vector.broadcast %18 : vector<1x128xf32> to vector<16x128xf32>
    %20 = arith.addf %17, %19 : vector<16x128xf32>
    %21 = vector.extract_strided_slice %20 {offsets = [0, 0], sizes = [16, 8], strides = [1, 1]} : vector<16x128xf32> to vector<16x8xf32>
    %c0_20 = arith.constant 0 : index
    %c0_21 = arith.constant 0 : index
    %22 = vector.load %arg5[%c0_20, %c0_21] : memref<64x8xf32, #tpu.memory_space<vmem>>, vector<16x8xf32>
    tpu.vector_store %arg5[%c0_20, %c0_21], %21 {strides = array<i32>} : memref<64x8xf32, #tpu.memory_space<vmem>>, vector<16x8xf32>,
    %23 = vector.extract_strided_slice %20 {offsets = [0, 32], sizes = [16, 8], strides = [1, 1]} : vector<16x128xf32> to vector<16x8xf32>
    %c0_22 = arith.constant 0 : index
    %c0_23 = arith.constant 0 : index
    %24 = vector.load %arg6[%c0_22, %c0_23] : memref<64x8xf32, #tpu.memory_space<vmem>>, vector<16x8xf32>
    tpu.vector_store %arg6[%c0_22, %c0_23], %23 {strides = array<i32>} : memref<64x8xf32, #tpu.memory_space<vmem>>, vector<16x8xf32>,
    %25 = vector.extract_strided_slice %20 {offsets = [0, 64], sizes = [16, 8], strides = [1, 1]} : vector<16x128xf32> to vector<16x8xf32>
    %c0_24 = arith.constant 0 : index
    %c0_25 = arith.constant 0 : index
    %26 = vector.load %arg7[%c0_24, %c0_25] : memref<64x8xf32, #tpu.memory_space<vmem>>, vector<16x8xf32>
    tpu.vector_store %arg7[%c0_24, %c0_25], %25 {strides = array<i32>} : memref<64x8xf32, #tpu.memory_space<vmem>>, vector<16x8xf32>,
    %27 = vector.extract_strided_slice %20 {offsets = [0, 8], sizes = [16, 8], strides = [1, 1]} : vector<16x128xf32> to vector<16x8xf32>
    %c16 = arith.constant 16 : index
    %c0_26 = arith.constant 0 : index
    %28 = vector.load %arg5[%c16, %c0_26] : memref<64x8xf32, #tpu.memory_space<vmem>>, vector<16x8xf32>
    tpu.vector_store %arg5[%c16, %c0_26], %27 {strides = array<i32>} : memref<64x8xf32, #tpu.memory_space<vmem>>, vector<16x8xf32>,
    %29 = vector.extract_strided_slice %20 {offsets = [0, 40], sizes = [16, 8], strides = [1, 1]} : vector<16x128xf32> to vector<16x8xf32>
    %c16_27 = arith.constant 16 : index
    %c0_28 = arith.constant 0 : index
    %30 = vector.load %arg6[%c16_27, %c0_28] : memref<64x8xf32, #tpu.memory_space<vmem>>, vector<16x8xf32>
    tpu.vector_store %arg6[%c16_27, %c0_28], %29 {strides = array<i32>} : memref<64x8xf32, #tpu.memory_space<vmem>>, vector<16x8xf32>,
    %31 = vector.extract_strided_slice %20 {offsets = [0, 72], sizes = [16, 8], strides = [1, 1]} : vector<16x128xf32> to vector<16x8xf32>
    %c16_29 = arith.constant 16 : index
    %c0_30 = arith.constant 0 : index
    %32 = vector.load %arg7[%c16_29, %c0_30] : memref<64x8xf32, #tpu.memory_space<vmem>>, vector<16x8xf32>
    tpu.vector_store %arg7[%c16_29, %c0_30], %31 {strides = array<i32>} : memref<64x8xf32, #tpu.memory_space<vmem>>, vector<16x8xf32>,
    %33 = vector.extract_strided_slice %20 {offsets = [0, 16], sizes = [16, 8], strides = [1, 1]} : vector<16x128xf32> to vector<16x8xf32>
    %c32 = arith.constant 32 : index
    %c0_31 = arith.constant 0 : index
    %34 = vector.load %arg5[%c32, %c0_31] : memref<64x8xf32, #tpu.memory_space<vmem>>, vector<16x8xf32>
    tpu.vector_store %arg5[%c32, %c0_31], %33 {strides = array<i32>} : memref<64x8xf32, #tpu.memory_space<vmem>>, vector<16x8xf32>,
    %35 = vector.extract_strided_slice %20 {offsets = [0, 48], sizes = [16, 8], strides = [1, 1]} : vector<16x128xf32> to vector<16x8xf32>
    %c32_32 = arith.constant 32 : index
    %c0_33 = arith.constant 0 : index
    %36 = vector.load %arg6[%c32_32, %c0_33] : memref<64x8xf32, #tpu.memory_space<vmem>>, vector<16x8xf32>
    tpu.vector_store %arg6[%c32_32, %c0_33], %35 {strides = array<i32>} : memref<64x8xf32, #tpu.memory_space<vmem>>, vector<16x8xf32>,
    %37 = vector.extract_strided_slice %20 {offsets = [0, 80], sizes = [16, 8], strides = [1, 1]} : vector<16x128xf32> to vector<16x8xf32>
    %c32_34 = arith.constant 32 : index
    %c0_35 = arith.constant 0 : index
    %38 = vector.load %arg7[%c32_34, %c0_35] : memref<64x8xf32, #tpu.memory_space<vmem>>, vector<16x8xf32>
    tpu.vector_store %arg7[%c32_34, %c0_35], %37 {strides = array<i32>} : memref<64x8xf32, #tpu.memory_space<vmem>>, vector<16x8xf32>,
    %39 = vector.extract_strided_slice %20 {offsets = [0, 24], sizes = [16, 8], strides = [1, 1]} : vector<16x128xf32> to vector<16x8xf32>
    %c48 = arith.constant 48 : index
    %c0_36 = arith.constant 0 : index
    %40 = vector.load %arg5[%c48, %c0_36] : memref<64x8xf32, #tpu.memory_space<vmem>>, vector<16x8xf32>
    tpu.vector_store %arg5[%c48, %c0_36], %39 {strides = array<i32>} : memref<64x8xf32, #tpu.memory_space<vmem>>, vector<16x8xf32>,
    %41 = vector.extract_strided_slice %20 {offsets = [0, 56], sizes = [16, 8], strides = [1, 1]} : vector<16x128xf32> to vector<16x8xf32>
    %c48_37 = arith.constant 48 : index
    %c0_38 = arith.constant 0 : index
    %42 = vector.load %arg6[%c48_37, %c0_38] : memref<64x8xf32, #tpu.memory_space<vmem>>, vector<16x8xf32>
    tpu.vector_store %arg6[%c48_37, %c0_38], %41 {strides = array<i32>} : memref<64x8xf32, #tpu.memory_space<vmem>>, vector<16x8xf32>,
    %43 = vector.extract_strided_slice %20 {offsets = [0, 88], sizes = [16, 8], strides = [1, 1]} : vector<16x128xf32> to vector<16x8xf32>
    %c48_39 = arith.constant 48 : index
    %c0_40 = arith.constant 0 : index
    %44 = vector.load %arg7[%c48_39, %c0_40] : memref<64x8xf32, #tpu.memory_space<vmem>>, vector<16x8xf32>
    tpu.vector_store %arg7[%c48_39, %c0_40], %43 {strides = array<i32>} : memref<64x8xf32, #tpu.memory_space<vmem>>, vector<16x8xf32>,
    %c0_41 = arith.constant 0 : index
    %c0_42 = arith.constant 0 : index
    %45 = vector.load %arg5[%c0_41, %c0_42] : memref<64x8xf32, #tpu.memory_space<vmem>>, vector<64x8xf32>
    %46 = arith.truncf %45 : vector<64x8xf32> to vector<64x8xbf16>
    %c0_43 = arith.constant 0 : index
    %c0_44 = arith.constant 0 : index
    %47 = vector.load %arg6[%c0_43, %c0_44] : memref<64x8xf32, #tpu.memory_space<vmem>>, vector<64x8xf32>
    %48 = arith.truncf %47 : vector<64x8xf32> to vector<64x8xbf16>
    %c0_45 = arith.constant 0 : index
    %c0_46 = arith.constant 0 : index
    %49 = vector.load %arg7[%c0_45, %c0_46] : memref<64x8xf32, #tpu.memory_space<vmem>>, vector<64x8xf32>
    %50 = arith.truncf %49 : vector<64x8xf32> to vector<64x8xbf16>
    %cst_47 = arith.constant dense<0.000000e+00> : vector<64x64xf32>
    %51 = tpu.matmul %46, %48, %cst_47 {dimension_numbers = #tpu.dot_dimension_numbers<[1], [1], [0], [0], [0, 0, 1, 0], [], []>} : vector<64x8xbf16>, vector<64x8xbf16>, vector<64x64xf32> -> vector<64x64xf32>
    %52 = arith.mulf %51, %1 : vector<64x64xf32>
    %53 = arith.addf %52, %3 : vector<64x64xf32>
    %cst_48 = arith.constant dense<0xFF800000> : vector<64xf32>
    %54 = vector.multi_reduction <maximumf>, %53, %cst_48 [1] : vector<64x64xf32> to vector<64xf32>
    %55 = vector.shape_cast %54 : vector<64xf32> to vector<64x1xf32>
    %56 = vector.broadcast %55 : vector<64x1xf32> to vector<64x64xf32>
    %57 = arith.subf %53, %56 : vector<64x64xf32>
    %58 = math.exp %57 : vector<64x64xf32>
    %cst_49 = arith.constant dense<0.000000e+00> : vector<64xf32>
    %59 = vector.multi_reduction <add>, %58, %cst_49 [1] : vector<64x64xf32> to vector<64xf32>
    %60 = vector.shape_cast %59 : vector<64xf32> to vector<64x1xf32>
    %61 = tpu.reciprocal %60 {approx = true} : vector<64x1xf32> -> vector<64x1xf32>
    %62 = vector.broadcast %61 : vector<64x1xf32> to vector<64x64xf32>
    %63 = arith.mulf %58, %62 : vector<64x64xf32>
    %64 = arith.truncf %63 : vector<64x64xf32> to vector<64x64xbf16>
    %cst_50 = arith.constant dense<0.000000e+00> : vector<64x8xf32>
    %65 = tpu.matmul %64, %50, %cst_50 {dimension_numbers = #tpu.dot_dimension_numbers<[1], [0], [0], [1], [0, 0, 1, 1], [], []>} : vector<64x64xbf16>, vector<64x8xbf16>, vector<64x8xf32> -> vector<64x8xf32>
    %66 = vector.extract_strided_slice %65 {offsets = [0, 0], sizes = [16, 8], strides = [1, 1]} : vector<64x8xf32> to vector<16x8xf32>
    %c0_51 = arith.constant 0 : index
    %c0_52 = arith.constant 0 : index
    %67 = vector.load %arg8[%c0_51, %c0_52] : memref<16x128xf32, #tpu.memory_space<vmem>>, vector<16x8xf32>
    tpu.vector_store %arg8[%c0_51, %c0_52], %66 {strides = array<i32>} : memref<16x128xf32, #tpu.memory_space<vmem>>, vector<16x8xf32>,
    %68 = vector.extract_strided_slice %65 {offsets = [16, 0], sizes = [16, 8], strides = [1, 1]} : vector<64x8xf32> to vector<16x8xf32>
    %c0_53 = arith.constant 0 : index
    %c8 = arith.constant 8 : index
    %69 = vector.load %arg8[%c0_53, %c8] : memref<16x128xf32, #tpu.memory_space<vmem>>, vector<16x8xf32>
    tpu.vector_store %arg8[%c0_53, %c8], %68 {strides = array<i32>} : memref<16x128xf32, #tpu.memory_space<vmem>>, vector<16x8xf32>,
    %70 = vector.extract_strided_slice %65 {offsets = [32, 0], sizes = [16, 8], strides = [1, 1]} : vector<64x8xf32> to vector<16x8xf32>
    %c0_54 = arith.constant 0 : index
    %c16_55 = arith.constant 16 : index
    %71 = vector.load %arg8[%c0_54, %c16_55] : memref<16x128xf32, #tpu.memory_space<vmem>>, vector<16x8xf32>
    tpu.vector_store %arg8[%c0_54, %c16_55], %70 {strides = array<i32>} : memref<16x128xf32, #tpu.memory_space<vmem>>, vector<16x8xf32>,
    %72 = vector.extract_strided_slice %65 {offsets = [48, 0], sizes = [16, 8], strides = [1, 1]} : vector<64x8xf32> to vector<16x8xf32>
    %c0_56 = arith.constant 0 : index
    %c24 = arith.constant 24 : index
    %73 = vector.load %arg8[%c0_56, %c24] : memref<16x128xf32, #tpu.memory_space<vmem>>, vector<16x8xf32>
    tpu.vector_store %arg8[%c0_56, %c24], %72 {strides = array<i32>} : memref<16x128xf32, #tpu.memory_space<vmem>>, vector<16x8xf32>,
    %c0_57 = arith.constant 0 : index
    %c0_58 = arith.constant 0 : index
    %74 = vector.load %arg8[%c0_57, %c0_58] : memref<16x128xf32, #tpu.memory_space<vmem>>, vector<16x128xf32>
    %75 = arith.truncf %74 : vector<16x128xf32> to vector<16x128xbf16>
    %c2 = arith.constant 2 : index
    %c0_59 = arith.constant 0 : index
    %c0_60 = arith.constant 0 : index
    %76 = vector.load %arg2[%c2, %c0_59, %c0_60] : memref<11x128x128xbf16, #tpu.memory_space<vmem>>, vector<1x128x128xbf16>
    %77 = vector.shape_cast %76 : vector<1x128x128xbf16> to vector<128x128xbf16>
    %cst_61 = arith.constant dense<0.000000e+00> : vector<16x128xf32>
    %78 = tpu.matmul %75, %77, %cst_61 {dimension_numbers = #tpu.dot_dimension_numbers<[1], [0], [0], [1], [0, 0, 1, 1], [], []>} : vector<16x128xbf16>, vector<128x128xbf16>, vector<16x128xf32> -> vector<16x128xf32>
    %c2_62 = arith.constant 2 : index
    %c0_63 = arith.constant 0 : index
    %79 = vector.load %arg3[%c2_62, %c0_63] : memref<24x128xf32, #tpu.memory_space<vmem>>, vector<1x128xf32>
    %80 = vector.broadcast %79 : vector<1x128xf32> to vector<16x128xf32>
    %81 = arith.addf %78, %80 : vector<16x128xf32>
    %82 = arith.addf %81, %13 : vector<16x128xf32>
    %cst_64 = arith.constant dense<0.000000e+00> : vector<128xf32>
    %83 = vector.multi_reduction <add>, %82, %cst_64 [0] : vector<16x128xf32> to vector<128xf32>
    %84 = vector.shape_cast %83 : vector<128xf32> to vector<1x128xf32>
    %cst_65 = arith.constant 1.600000e+01 : f32
    %85 = vector.broadcast %cst_65 : f32 to vector<1x128xf32>
    %86 = arith.divf %84, %85 : vector<1x128xf32>
    %87 = vector.broadcast %86 : vector<1x128xf32> to vector<16x128xf32>
    %88 = arith.subf %82, %87 : vector<16x128xf32>
    %89 = arith.mulf %88, %88 : vector<16x128xf32>
    %cst_66 = arith.constant dense<0.000000e+00> : vector<128xf32>
    %90 = vector.multi_reduction <add>, %89, %cst_66 [0] : vector<16x128xf32> to vector<128xf32>
    %91 = vector.shape_cast %90 : vector<128xf32> to vector<1x128xf32>
    %cst_67 = arith.constant 1.600000e+01 : f32
    %92 = vector.broadcast %cst_67 : f32 to vector<1x128xf32>
    %93 = arith.divf %91, %92 : vector<1x128xf32>
    %94 = vector.broadcast %86 : vector<1x128xf32> to vector<16x128xf32>
    %95 = arith.subf %82, %94 : vector<16x128xf32>
    %cst_68 = arith.constant 9.99999974E-6 : f32
    %96 = vector.broadcast %cst_68 : f32 to vector<1x128xf32>
    %97 = arith.addf %93, %96 : vector<1x128xf32>
    %98 = math.rsqrt %97 : vector<1x128xf32>
    %99 = vector.broadcast %98 : vector<1x128xf32> to vector<16x128xf32>
    %100 = arith.mulf %95, %99 : vector<16x128xf32>
    %c3 = arith.constant 3 : index
    %c0_69 = arith.constant 0 : index
    %101 = vector.load %arg3[%c3, %c0_69] : memref<24x128xf32, #tpu.memory_space<vmem>>, vector<1x128xf32>
    %102 = vector.broadcast %101 : vector<1x128xf32> to vector<16x128xf32>
    %103 = arith.mulf %100, %102 : vector<16x128xf32>
    %c4 = arith.constant 4 : index
    %c0_70 = arith.constant 0 : index
    %104 = vector.load %arg3[%c4, %c0_70] : memref<24x128xf32, #tpu.memory_space<vmem>>, vector<1x128xf32>
    %105 = vector.broadcast %104 : vector<1x128xf32> to vector<16x128xf32>
    %106 = arith.addf %103, %105 : vector<16x128xf32>
    %107 = arith.truncf %106 : vector<16x128xf32> to vector<16x128xbf16>
    %c3_71 = arith.constant 3 : index
    %c0_72 = arith.constant 0 : index
    %c0_73 = arith.constant 0 : index
    %108 = vector.load %arg2[%c3_71, %c0_72, %c0_73] : memref<11x128x128xbf16, #tpu.memory_space<vmem>>, vector<1x128x128xbf16>
    %109 = vector.shape_cast %108 : vector<1x128x128xbf16> to vector<128x128xbf16>
    %cst_74 = arith.constant dense<0.000000e+00> : vector<16x128xf32>
    %110 = tpu.matmul %107, %109, %cst_74 {dimension_numbers = #tpu.dot_dimension_numbers<[1], [0], [0], [1], [0, 0, 1, 1], [], []>} : vector<16x128xbf16>, vector<128x128xbf16>, vector<16x128xf32> -> vector<16x128xf32>
    %c5 = arith.constant 5 : index
    %c0_75 = arith.constant 0 : index
    %111 = vector.load %arg3[%c5, %c0_75] : memref<24x128xf32, #tpu.memory_space<vmem>>, vector<1x128xf32>
    %112 = vector.broadcast %111 : vector<1x128xf32> to vector<16x128xf32>
    %113 = arith.addf %110, %112 : vector<16x128xf32>
    %cst_76 = arith.constant 0.000000e+00 : f32
    %114 = vector.broadcast %cst_76 : f32 to vector<16x128xf32>
    %115 = arith.maximumf %113, %114 : vector<16x128xf32>
    %116 = arith.truncf %115 : vector<16x128xf32> to vector<16x128xbf16>
    %c4_77 = arith.constant 4 : index
    %c0_78 = arith.constant 0 : index
    %c0_79 = arith.constant 0 : index
    %117 = vector.load %arg2[%c4_77, %c0_78, %c0_79] : memref<11x128x128xbf16, #tpu.memory_space<vmem>>, vector<1x128x128xbf16>
    %118 = vector.shape_cast %117 : vector<1x128x128xbf16> to vector<128x128xbf16>
    %cst_80 = arith.constant dense<0.000000e+00> : vector<16x128xf32>
    %119 = tpu.matmul %116, %118, %cst_80 {dimension_numbers = #tpu.dot_dimension_numbers<[1], [0], [0], [1], [0, 0, 1, 1], [], []>} : vector<16x128xbf16>, vector<128x128xbf16>, vector<16x128xf32> -> vector<16x128xf32>
    %c6 = arith.constant 6 : index
    %c0_81 = arith.constant 0 : index
    %120 = vector.load %arg3[%c6, %c0_81] : memref<24x128xf32, #tpu.memory_space<vmem>>, vector<1x128xf32>
    %121 = vector.broadcast %120 : vector<1x128xf32> to vector<16x128xf32>
    %122 = arith.addf %119, %121 : vector<16x128xf32>
    %123 = arith.addf %106, %122 : vector<16x128xf32>
    %cst_82 = arith.constant dense<0.000000e+00> : vector<128xf32>
    %124 = vector.multi_reduction <add>, %123, %cst_82 [0] : vector<16x128xf32> to vector<128xf32>
    %125 = vector.shape_cast %124 : vector<128xf32> to vector<1x128xf32>
    %cst_83 = arith.constant 1.600000e+01 : f32
    %126 = vector.broadcast %cst_83 : f32 to vector<1x128xf32>
    %127 = arith.divf %125, %126 : vector<1x128xf32>
    %128 = vector.broadcast %127 : vector<1x128xf32> to vector<16x128xf32>
    %129 = arith.subf %123, %128 : vector<16x128xf32>
    %130 = arith.mulf %129, %129 : vector<16x128xf32>
    %cst_84 = arith.constant dense<0.000000e+00> : vector<128xf32>
    %131 = vector.multi_reduction <add>, %130, %cst_84 [0] : vector<16x128xf32> to vector<128xf32>
    %132 = vector.shape_cast %131 : vector<128xf32> to vector<1x128xf32>
    %cst_85 = arith.constant 1.600000e+01 : f32
    %133 = vector.broadcast %cst_85 : f32 to vector<1x128xf32>
    %134 = arith.divf %132, %133 : vector<1x128xf32>
    %135 = vector.broadcast %127 : vector<1x128xf32> to vector<16x128xf32>
    %136 = arith.subf %123, %135 : vector<16x128xf32>
    %cst_86 = arith.constant 9.99999974E-6 : f32
    %137 = vector.broadcast %cst_86 : f32 to vector<1x128xf32>
    %138 = arith.addf %134, %137 : vector<1x128xf32>
    %139 = math.rsqrt %138 : vector<1x128xf32>
    %140 = vector.broadcast %139 : vector<1x128xf32> to vector<16x128xf32>
    %141 = arith.mulf %136, %140 : vector<16x128xf32>
    %c7 = arith.constant 7 : index
    %c0_87 = arith.constant 0 : index
    %142 = vector.load %arg3[%c7, %c0_87] : memref<24x128xf32, #tpu.memory_space<vmem>>, vector<1x128xf32>
    %143 = vector.broadcast %142 : vector<1x128xf32> to vector<16x128xf32>
    %144 = arith.mulf %141, %143 : vector<16x128xf32>
    %c8_88 = arith.constant 8 : index
    %c0_89 = arith.constant 0 : index
    %145 = vector.load %arg3[%c8_88, %c0_89] : memref<24x128xf32, #tpu.memory_space<vmem>>, vector<1x128xf32>
    %146 = vector.broadcast %145 : vector<1x128xf32> to vector<16x128xf32>
    %147 = arith.addf %144, %146 : vector<16x128xf32>
    %148 = arith.truncf %147 : vector<16x128xf32> to vector<16x128xbf16>
    %c5_90 = arith.constant 5 : index
    %c0_91 = arith.constant 0 : index
    %c0_92 = arith.constant 0 : index
    %149 = vector.load %arg2[%c5_90, %c0_91, %c0_92] : memref<11x128x128xbf16, #tpu.memory_space<vmem>>, vector<1x128x128xbf16>
    %150 = vector.shape_cast %149 : vector<1x128x128xbf16> to vector<128x128xbf16>
    %cst_93 = arith.constant dense<0.000000e+00> : vector<16x128xf32>
    %151 = tpu.matmul %148, %150, %cst_93 {dimension_numbers = #tpu.dot_dimension_numbers<[1], [0], [0], [1], [0, 0, 1, 1], [], []>} : vector<16x128xbf16>, vector<128x128xbf16>, vector<16x128xf32> -> vector<16x128xf32>
    %c9 = arith.constant 9 : index
    %c0_94 = arith.constant 0 : index
    %152 = vector.load %arg3[%c9, %c0_94] : memref<24x128xf32, #tpu.memory_space<vmem>>, vector<1x128xf32>
    %153 = vector.broadcast %152 : vector<1x128xf32> to vector<16x128xf32>
    %154 = arith.addf %151, %153 : vector<16x128xf32>
    %155 = vector.extract_strided_slice %154 {offsets = [0, 0], sizes = [16, 8], strides = [1, 1]} : vector<16x128xf32> to vector<16x8xf32>
    %c0_95 = arith.constant 0 : index
    %c0_96 = arith.constant 0 : index
    %156 = vector.load %arg5[%c0_95, %c0_96] : memref<64x8xf32, #tpu.memory_space<vmem>>, vector<16x8xf32>
    tpu.vector_store %arg5[%c0_95, %c0_96], %155 {strides = array<i32>} : memref<64x8xf32, #tpu.memory_space<vmem>>, vector<16x8xf32>,
    %157 = vector.extract_strided_slice %154 {offsets = [0, 32], sizes = [16, 8], strides = [1, 1]} : vector<16x128xf32> to vector<16x8xf32>
    %c0_97 = arith.constant 0 : index
    %c0_98 = arith.constant 0 : index
    %158 = vector.load %arg6[%c0_97, %c0_98] : memref<64x8xf32, #tpu.memory_space<vmem>>, vector<16x8xf32>
    tpu.vector_store %arg6[%c0_97, %c0_98], %157 {strides = array<i32>} : memref<64x8xf32, #tpu.memory_space<vmem>>, vector<16x8xf32>,
    %159 = vector.extract_strided_slice %154 {offsets = [0, 64], sizes = [16, 8], strides = [1, 1]} : vector<16x128xf32> to vector<16x8xf32>
    %c0_99 = arith.constant 0 : index
    %c0_100 = arith.constant 0 : index
    %160 = vector.load %arg7[%c0_99, %c0_100] : memref<64x8xf32, #tpu.memory_space<vmem>>, vector<16x8xf32>
    tpu.vector_store %arg7[%c0_99, %c0_100], %159 {strides = array<i32>} : memref<64x8xf32, #tpu.memory_space<vmem>>, vector<16x8xf32>,
    %161 = vector.extract_strided_slice %154 {offsets = [0, 8], sizes = [16, 8], strides = [1, 1]} : vector<16x128xf32> to vector<16x8xf32>
    %c16_101 = arith.constant 16 : index
    %c0_102 = arith.constant 0 : index
    %162 = vector.load %arg5[%c16_101, %c0_102] : memref<64x8xf32, #tpu.memory_space<vmem>>, vector<16x8xf32>
    tpu.vector_store %arg5[%c16_101, %c0_102], %161 {strides = array<i32>} : memref<64x8xf32, #tpu.memory_space<vmem>>, vector<16x8xf32>,
    %163 = vector.extract_strided_slice %154 {offsets = [0, 40], sizes = [16, 8], strides = [1, 1]} : vector<16x128xf32> to vector<16x8xf32>
    %c16_103 = arith.constant 16 : index
    %c0_104 = arith.constant 0 : index
    %164 = vector.load %arg6[%c16_103, %c0_104] : memref<64x8xf32, #tpu.memory_space<vmem>>, vector<16x8xf32>
    tpu.vector_store %arg6[%c16_103, %c0_104], %163 {strides = array<i32>} : memref<64x8xf32, #tpu.memory_space<vmem>>, vector<16x8xf32>,
    %165 = vector.extract_strided_slice %154 {offsets = [0, 72], sizes = [16, 8], strides = [1, 1]} : vector<16x128xf32> to vector<16x8xf32>
    %c16_105 = arith.constant 16 : index
    %c0_106 = arith.constant 0 : index
    %166 = vector.load %arg7[%c16_105, %c0_106] : memref<64x8xf32, #tpu.memory_space<vmem>>, vector<16x8xf32>
    tpu.vector_store %arg7[%c16_105, %c0_106], %165 {strides = array<i32>} : memref<64x8xf32, #tpu.memory_space<vmem>>, vector<16x8xf32>,
    %167 = vector.extract_strided_slice %154 {offsets = [0, 16], sizes = [16, 8], strides = [1, 1]} : vector<16x128xf32> to vector<16x8xf32>
    %c32_107 = arith.constant 32 : index
    %c0_108 = arith.constant 0 : index
    %168 = vector.load %arg5[%c32_107, %c0_108] : memref<64x8xf32, #tpu.memory_space<vmem>>, vector<16x8xf32>
    tpu.vector_store %arg5[%c32_107, %c0_108], %167 {strides = array<i32>} : memref<64x8xf32, #tpu.memory_space<vmem>>, vector<16x8xf32>,
    %169 = vector.extract_strided_slice %154 {offsets = [0, 48], sizes = [16, 8], strides = [1, 1]} : vector<16x128xf32> to vector<16x8xf32>
    %c32_109 = arith.constant 32 : index
    %c0_110 = arith.constant 0 : index
    %170 = vector.load %arg6[%c32_109, %c0_110] : memref<64x8xf32, #tpu.memory_space<vmem>>, vector<16x8xf32>
    tpu.vector_store %arg6[%c32_109, %c0_110], %169 {strides = array<i32>} : memref<64x8xf32, #tpu.memory_space<vmem>>, vector<16x8xf32>,
    %171 = vector.extract_strided_slice %154 {offsets = [0, 80], sizes = [16, 8], strides = [1, 1]} : vector<16x128xf32> to vector<16x8xf32>
    %c32_111 = arith.constant 32 : index
    %c0_112 = arith.constant 0 : index
    %172 = vector.load %arg7[%c32_111, %c0_112] : memref<64x8xf32, #tpu.memory_space<vmem>>, vector<16x8xf32>
    tpu.vector_store %arg7[%c32_111, %c0_112], %171 {strides = array<i32>} : memref<64x8xf32, #tpu.memory_space<vmem>>, vector<16x8xf32>,
    %173 = vector.extract_strided_slice %154 {offsets = [0, 24], sizes = [16, 8], strides = [1, 1]} : vector<16x128xf32> to vector<16x8xf32>
    %c48_113 = arith.constant 48 : index
    %c0_114 = arith.constant 0 : index
    %174 = vector.load %arg5[%c48_113, %c0_114] : memref<64x8xf32, #tpu.memory_space<vmem>>, vector<16x8xf32>
    tpu.vector_store %arg5[%c48_113, %c0_114], %173 {strides = array<i32>} : memref<64x8xf32, #tpu.memory_space<vmem>>, vector<16x8xf32>,
    %175 = vector.extract_strided_slice %154 {offsets = [0, 56], sizes = [16, 8], strides = [1, 1]} : vector<16x128xf32> to vector<16x8xf32>
    %c48_115 = arith.constant 48 : index
    %c0_116 = arith.constant 0 : index
    %176 = vector.load %arg6[%c48_115, %c0_116] : memref<64x8xf32, #tpu.memory_space<vmem>>, vector<16x8xf32>
    tpu.vector_store %arg6[%c48_115, %c0_116], %175 {strides = array<i32>} : memref<64x8xf32, #tpu.memory_space<vmem>>, vector<16x8xf32>,
    %177 = vector.extract_strided_slice %154 {offsets = [0, 88], sizes = [16, 8], strides = [1, 1]} : vector<16x128xf32> to vector<16x8xf32>
    %c48_117 = arith.constant 48 : index
    %c0_118 = arith.constant 0 : index
    %178 = vector.load %arg7[%c48_117, %c0_118] : memref<64x8xf32, #tpu.memory_space<vmem>>, vector<16x8xf32>
    tpu.vector_store %arg7[%c48_117, %c0_118], %177 {strides = array<i32>} : memref<64x8xf32, #tpu.memory_space<vmem>>, vector<16x8xf32>,
    %c0_119 = arith.constant 0 : index
    %c0_120 = arith.constant 0 : index
    %179 = vector.load %arg5[%c0_119, %c0_120] : memref<64x8xf32, #tpu.memory_space<vmem>>, vector<64x8xf32>
    %180 = arith.truncf %179 : vector<64x8xf32> to vector<64x8xbf16>
    %c0_121 = arith.constant 0 : index
    %c0_122 = arith.constant 0 : index
    %181 = vector.load %arg6[%c0_121, %c0_122] : memref<64x8xf32, #tpu.memory_space<vmem>>, vector<64x8xf32>
    %182 = arith.truncf %181 : vector<64x8xf32> to vector<64x8xbf16>
    %c0_123 = arith.constant 0 : index
    %c0_124 = arith.constant 0 : index
    %183 = vector.load %arg7[%c0_123, %c0_124] : memref<64x8xf32, #tpu.memory_space<vmem>>, vector<64x8xf32>
    %184 = arith.truncf %183 : vector<64x8xf32> to vector<64x8xbf16>
    %cst_125 = arith.constant dense<0.000000e+00> : vector<64x64xf32>
    %185 = tpu.matmul %180, %182, %cst_125 {dimension_numbers = #tpu.dot_dimension_numbers<[1], [1], [0], [0], [0, 0, 1, 0], [], []>} : vector<64x8xbf16>, vector<64x8xbf16>, vector<64x64xf32> -> vector<64x64xf32>
    %186 = arith.mulf %185, %1 : vector<64x64xf32>
    %187 = arith.addf %186, %3 : vector<64x64xf32>
    %cst_126 = arith.constant dense<0xFF800000> : vector<64xf32>
    %188 = vector.multi_reduction <maximumf>, %187, %cst_126 [1] : vector<64x64xf32> to vector<64xf32>
    %189 = vector.shape_cast %188 : vector<64xf32> to vector<64x1xf32>
    %190 = vector.broadcast %189 : vector<64x1xf32> to vector<64x64xf32>
    %191 = arith.subf %187, %190 : vector<64x64xf32>
    %192 = math.exp %191 : vector<64x64xf32>
    %cst_127 = arith.constant dense<0.000000e+00> : vector<64xf32>
    %193 = vector.multi_reduction <add>, %192, %cst_127 [1] : vector<64x64xf32> to vector<64xf32>
    %194 = vector.shape_cast %193 : vector<64xf32> to vector<64x1xf32>
    %195 = tpu.reciprocal %194 {approx = true} : vector<64x1xf32> -> vector<64x1xf32>
    %196 = vector.broadcast %195 : vector<64x1xf32> to vector<64x64xf32>
    %197 = arith.mulf %192, %196 : vector<64x64xf32>
    %198 = arith.truncf %197 : vector<64x64xf32> to vector<64x64xbf16>
    %cst_128 = arith.constant dense<0.000000e+00> : vector<64x8xf32>
    %199 = tpu.matmul %198, %184, %cst_128 {dimension_numbers = #tpu.dot_dimension_numbers<[1], [0], [0], [1], [0, 0, 1, 1], [], []>} : vector<64x64xbf16>, vector<64x8xbf16>, vector<64x8xf32> -> vector<64x8xf32>
    %200 = vector.extract_strided_slice %199 {offsets = [0, 0], sizes = [16, 8], strides = [1, 1]} : vector<64x8xf32> to vector<16x8xf32>
    %c0_129 = arith.constant 0 : index
    %c0_130 = arith.constant 0 : index
    %201 = vector.load %arg8[%c0_129, %c0_130] : memref<16x128xf32, #tpu.memory_space<vmem>>, vector<16x8xf32>
    tpu.vector_store %arg8[%c0_129, %c0_130], %200 {strides = array<i32>} : memref<16x128xf32, #tpu.memory_space<vmem>>, vector<16x8xf32>,
    %202 = vector.extract_strided_slice %199 {offsets = [16, 0], sizes = [16, 8], strides = [1, 1]} : vector<64x8xf32> to vector<16x8xf32>
    %c0_131 = arith.constant 0 : index
    %c8_132 = arith.constant 8 : index
    %203 = vector.load %arg8[%c0_131, %c8_132] : memref<16x128xf32, #tpu.memory_space<vmem>>, vector<16x8xf32>
    tpu.vector_store %arg8[%c0_131, %c8_132], %202 {strides = array<i32>} : memref<16x128xf32, #tpu.memory_space<vmem>>, vector<16x8xf32>,
    %204 = vector.extract_strided_slice %199 {offsets = [32, 0], sizes = [16, 8], strides = [1, 1]} : vector<64x8xf32> to vector<16x8xf32>
    %c0_133 = arith.constant 0 : index
    %c16_134 = arith.constant 16 : index
    %205 = vector.load %arg8[%c0_133, %c16_134] : memref<16x128xf32, #tpu.memory_space<vmem>>, vector<16x8xf32>
    tpu.vector_store %arg8[%c0_133, %c16_134], %204 {strides = array<i32>} : memref<16x128xf32, #tpu.memory_space<vmem>>, vector<16x8xf32>,
    %206 = vector.extract_strided_slice %199 {offsets = [48, 0], sizes = [16, 8], strides = [1, 1]} : vector<64x8xf32> to vector<16x8xf32>
    %c0_135 = arith.constant 0 : index
    %c24_136 = arith.constant 24 : index
    %207 = vector.load %arg8[%c0_135, %c24_136] : memref<16x128xf32, #tpu.memory_space<vmem>>, vector<16x8xf32>
    tpu.vector_store %arg8[%c0_135, %c24_136], %206 {strides = array<i32>} : memref<16x128xf32, #tpu.memory_space<vmem>>, vector<16x8xf32>,
    %c0_137 = arith.constant 0 : index
    %c0_138 = arith.constant 0 : index
    %208 = vector.load %arg8[%c0_137, %c0_138] : memref<16x128xf32, #tpu.memory_space<vmem>>, vector<16x128xf32>
    %209 = arith.truncf %208 : vector<16x128xf32> to vector<16x128xbf16>
    %c6_139 = arith.constant 6 : index
    %c0_140 = arith.constant 0 : index
    %c0_141 = arith.constant 0 : index
    %210 = vector.load %arg2[%c6_139, %c0_140, %c0_141] : memref<11x128x128xbf16, #tpu.memory_space<vmem>>, vector<1x128x128xbf16>
    %211 = vector.shape_cast %210 : vector<1x128x128xbf16> to vector<128x128xbf16>
    %cst_142 = arith.constant dense<0.000000e+00> : vector<16x128xf32>
    %212 = tpu.matmul %209, %211, %cst_142 {dimension_numbers = #tpu.dot_dimension_numbers<[1], [0], [0], [1], [0, 0, 1, 1], [], []>} : vector<16x128xbf16>, vector<128x128xbf16>, vector<16x128xf32> -> vector<16x128xf32>
    %c10 = arith.constant 10 : index
    %c0_143 = arith.constant 0 : index
    %213 = vector.load %arg3[%c10, %c0_143] : memref<24x128xf32, #tpu.memory_space<vmem>>, vector<1x128xf32>
    %214 = vector.broadcast %213 : vector<1x128xf32> to vector<16x128xf32>
    %215 = arith.addf %212, %214 : vector<16x128xf32>
    %216 = arith.addf %215, %147 : vector<16x128xf32>
    %cst_144 = arith.constant dense<0.000000e+00> : vector<128xf32>
    %217 = vector.multi_reduction <add>, %216, %cst_144 [0] : vector<16x128xf32> to vector<128xf32>
    %218 = vector.shape_cast %217 : vector<128xf32> to vector<1x128xf32>
    %cst_145 = arith.constant 1.600000e+01 : f32
    %219 = vector.broadcast %cst_145 : f32 to vector<1x128xf32>
    %220 = arith.divf %218, %219 : vector<1x128xf32>
    %221 = vector.broadcast %220 : vector<1x128xf32> to vector<16x128xf32>
    %222 = arith.subf %216, %221 : vector<16x128xf32>
    %223 = arith.mulf %222, %222 : vector<16x128xf32>
    %cst_146 = arith.constant dense<0.000000e+00> : vector<128xf32>
    %224 = vector.multi_reduction <add>, %223, %cst_146 [0] : vector<16x128xf32> to vector<128xf32>
    %225 = vector.shape_cast %224 : vector<128xf32> to vector<1x128xf32>
    %cst_147 = arith.constant 1.600000e+01 : f32
    %226 = vector.broadcast %cst_147 : f32 to vector<1x128xf32>
    %227 = arith.divf %225, %226 : vector<1x128xf32>
    %228 = vector.broadcast %220 : vector<1x128xf32> to vector<16x128xf32>
    %229 = arith.subf %216, %228 : vector<16x128xf32>
    %cst_148 = arith.constant 9.99999974E-6 : f32
    %230 = vector.broadcast %cst_148 : f32 to vector<1x128xf32>
    %231 = arith.addf %227, %230 : vector<1x128xf32>
    %232 = math.rsqrt %231 : vector<1x128xf32>
    %233 = vector.broadcast %232 : vector<1x128xf32> to vector<16x128xf32>
    %234 = arith.mulf %229, %233 : vector<16x128xf32>
    %c11 = arith.constant 11 : index
    %c0_149 = arith.constant 0 : index
    %235 = vector.load %arg3[%c11, %c0_149] : memref<24x128xf32, #tpu.memory_space<vmem>>, vector<1x128xf32>
    %236 = vector.broadcast %235 : vector<1x128xf32> to vector<16x128xf32>
    %237 = arith.mulf %234, %236 : vector<16x128xf32>
    %c12 = arith.constant 12 : index
    %c0_150 = arith.constant 0 : index
    %238 = vector.load %arg3[%c12, %c0_150] : memref<24x128xf32, #tpu.memory_space<vmem>>, vector<1x128xf32>
    %239 = vector.broadcast %238 : vector<1x128xf32> to vector<16x128xf32>
    %240 = arith.addf %237, %239 : vector<16x128xf32>
    %241 = arith.truncf %240 : vector<16x128xf32> to vector<16x128xbf16>
    %c7_151 = arith.constant 7 : index
    %c0_152 = arith.constant 0 : index
    %c0_153 = arith.constant 0 : index
    %242 = vector.load %arg2[%c7_151, %c0_152, %c0_153] : memref<11x128x128xbf16, #tpu.memory_space<vmem>>, vector<1x128x128xbf16>
    %243 = vector.shape_cast %242 : vector<1x128x128xbf16> to vector<128x128xbf16>
    %cst_154 = arith.constant dense<0.000000e+00> : vector<16x128xf32>
    %244 = tpu.matmul %241, %243, %cst_154 {dimension_numbers = #tpu.dot_dimension_numbers<[1], [0], [0], [1], [0, 0, 1, 1], [], []>} : vector<16x128xbf16>, vector<128x128xbf16>, vector<16x128xf32> -> vector<16x128xf32>
    %c13 = arith.constant 13 : index
    %c0_155 = arith.constant 0 : index
    %245 = vector.load %arg3[%c13, %c0_155] : memref<24x128xf32, #tpu.memory_space<vmem>>, vector<1x128xf32>
    %246 = vector.broadcast %245 : vector<1x128xf32> to vector<16x128xf32>
    %247 = arith.addf %244, %246 : vector<16x128xf32>
    %cst_156 = arith.constant 0.000000e+00 : f32
    %248 = vector.broadcast %cst_156 : f32 to vector<16x128xf32>
    %249 = arith.maximumf %247, %248 : vector<16x128xf32>
    %250 = arith.truncf %249 : vector<16x128xf32> to vector<16x128xbf16>
    %c8_157 = arith.constant 8 : index
    %c0_158 = arith.constant 0 : index
    %c0_159 = arith.constant 0 : index
    %251 = vector.load %arg2[%c8_157, %c0_158, %c0_159] : memref<11x128x128xbf16, #tpu.memory_space<vmem>>, vector<1x128x128xbf16>
    %252 = vector.shape_cast %251 : vector<1x128x128xbf16> to vector<128x128xbf16>
    %cst_160 = arith.constant dense<0.000000e+00> : vector<16x128xf32>
    %253 = tpu.matmul %250, %252, %cst_160 {dimension_numbers = #tpu.dot_dimension_numbers<[1], [0], [0], [1], [0, 0, 1, 1], [], []>} : vector<16x128xbf16>, vector<128x128xbf16>, vector<16x128xf32> -> vector<16x128xf32>
    %c14 = arith.constant 14 : index
    %c0_161 = arith.constant 0 : index
    %254 = vector.load %arg3[%c14, %c0_161] : memref<24x128xf32, #tpu.memory_space<vmem>>, vector<1x128xf32>
    %255 = vector.broadcast %254 : vector<1x128xf32> to vector<16x128xf32>
    %256 = arith.addf %253, %255 : vector<16x128xf32>
    %257 = arith.addf %240, %256 : vector<16x128xf32>
    %cst_162 = arith.constant dense<0.000000e+00> : vector<128xf32>
    %258 = vector.multi_reduction <add>, %257, %cst_162 [0] : vector<16x128xf32> to vector<128xf32>
    %259 = vector.shape_cast %258 : vector<128xf32> to vector<1x128xf32>
    %cst_163 = arith.constant 1.600000e+01 : f32
    %260 = vector.broadcast %cst_163 : f32 to vector<1x128xf32>
    %261 = arith.divf %259, %260 : vector<1x128xf32>
    %262 = vector.broadcast %261 : vector<1x128xf32> to vector<16x128xf32>
    %263 = arith.subf %257, %262 : vector<16x128xf32>
    %264 = arith.mulf %263, %263 : vector<16x128xf32>
    %cst_164 = arith.constant dense<0.000000e+00> : vector<128xf32>
    %265 = vector.multi_reduction <add>, %264, %cst_164 [0] : vector<16x128xf32> to vector<128xf32>
    %266 = vector.shape_cast %265 : vector<128xf32> to vector<1x128xf32>
    %cst_165 = arith.constant 1.600000e+01 : f32
    %267 = vector.broadcast %cst_165 : f32 to vector<1x128xf32>
    %268 = arith.divf %266, %267 : vector<1x128xf32>
    %269 = vector.broadcast %261 : vector<1x128xf32> to vector<16x128xf32>
    %270 = arith.subf %257, %269 : vector<16x128xf32>
    %cst_166 = arith.constant 9.99999974E-6 : f32
    %271 = vector.broadcast %cst_166 : f32 to vector<1x128xf32>
    %272 = arith.addf %268, %271 : vector<1x128xf32>
    %273 = math.rsqrt %272 : vector<1x128xf32>
    %274 = vector.broadcast %273 : vector<1x128xf32> to vector<16x128xf32>
    %275 = arith.mulf %270, %274 : vector<16x128xf32>
    %c15 = arith.constant 15 : index
    %c0_167 = arith.constant 0 : index
    %276 = vector.load %arg3[%c15, %c0_167] : memref<24x128xf32, #tpu.memory_space<vmem>>, vector<1x128xf32>
    %277 = vector.broadcast %276 : vector<1x128xf32> to vector<16x128xf32>
    %278 = arith.mulf %275, %277 : vector<16x128xf32>
    %c16_168 = arith.constant 16 : index
    %c0_169 = arith.constant 0 : index
    %279 = vector.load %arg3[%c16_168, %c0_169] : memref<24x128xf32, #tpu.memory_space<vmem>>, vector<1x128xf32>
    %280 = vector.broadcast %279 : vector<1x128xf32> to vector<16x128xf32>
    %281 = arith.addf %278, %280 : vector<16x128xf32>
    %282 = vector.extract_strided_slice %281 {offsets = [0, 0], sizes = [8, 128], strides = [1, 1]} : vector<16x128xf32> to vector<8x128xf32>
    %cst_170 = arith.constant dense<0.000000e+00> : vector<128xf32>
    %283 = vector.multi_reduction <add>, %282, %cst_170 [0] : vector<8x128xf32> to vector<128xf32>
    %284 = vector.shape_cast %283 : vector<128xf32> to vector<1x128xf32>
    %285 = arith.truncf %284 : vector<1x128xf32> to vector<1x128xbf16>
    %c9_171 = arith.constant 9 : index
    %c0_172 = arith.constant 0 : index
    %c0_173 = arith.constant 0 : index
    %286 = vector.load %arg2[%c9_171, %c0_172, %c0_173] : memref<11x128x128xbf16, #tpu.memory_space<vmem>>, vector<1x128x128xbf16>
    %287 = vector.shape_cast %286 : vector<1x128x128xbf16> to vector<128x128xbf16>
    %cst_174 = arith.constant dense<0.000000e+00> : vector<1x128xf32>
    %288 = tpu.matmul %285, %287, %cst_174 {dimension_numbers = #tpu.dot_dimension_numbers<[1], [0], [0], [1], [0, 0, 1, 1], [], []>} : vector<1x128xbf16>, vector<128x128xbf16>, vector<1x128xf32> -> vector<1x128xf32>
    %c17 = arith.constant 17 : index
    %c0_175 = arith.constant 0 : index
    %289 = vector.load %arg3[%c17, %c0_175] : memref<24x128xf32, #tpu.memory_space<vmem>>, vector<1x128xf32>
    %290 = arith.addf %288, %289 : vector<1x128xf32>
    %cst_176 = arith.constant 0.000000e+00 : f32
    %291 = vector.broadcast %cst_176 : f32 to vector<1x128xf32>
    %292 = arith.maximumf %290, %291 : vector<1x128xf32>
    %293 = arith.truncf %292 : vector<1x128xf32> to vector<1x128xbf16>
    %c10_177 = arith.constant 10 : index
    %c0_178 = arith.constant 0 : index
    %c0_179 = arith.constant 0 : index
    %294 = vector.load %arg2[%c10_177, %c0_178, %c0_179] : memref<11x128x128xbf16, #tpu.memory_space<vmem>>, vector<1x128x128xbf16>
    %295 = vector.shape_cast %294 : vector<1x128x128xbf16> to vector<128x128xbf16>
    %cst_180 = arith.constant dense<0.000000e+00> : vector<1x128xf32>
    %296 = tpu.matmul %293, %295, %cst_180 {dimension_numbers = #tpu.dot_dimension_numbers<[1], [0], [0], [1], [0, 0, 1, 1], [], []>} : vector<1x128xbf16>, vector<128x128xbf16>, vector<1x128xf32> -> vector<1x128xf32>
    %c18 = arith.constant 18 : index
    %c0_181 = arith.constant 0 : index
    %297 = vector.load %arg3[%c18, %c0_181] : memref<24x128xf32, #tpu.memory_space<vmem>>, vector<1x128xf32>
    %298 = arith.addf %296, %297 : vector<1x128xf32>
    %299 = vector.extract_strided_slice %298 {offsets = [0, 0], sizes = [1, 4], strides = [1, 1]} : vector<1x128xf32> to vector<1x4xf32>
    %c0_182 = arith.constant 0 : index
    %c0_183 = arith.constant 0 : index
    %300 = vector.load %arg4[%c0_182, %c0_183] : memref<2x4xf32, #tpu.memory_space<vmem>>, vector<1x4xf32>
    tpu.vector_store %arg4[%c0_182, %c0_183], %299 {strides = array<i32>} : memref<2x4xf32, #tpu.memory_space<vmem>>, vector<1x4xf32>,
    %301 = vector.extract_strided_slice %281 {offsets = [8, 0], sizes = [8, 128], strides = [1, 1]} : vector<16x128xf32> to vector<8x128xf32>
    %cst_184 = arith.constant dense<0.000000e+00> : vector<128xf32>
    %302 = vector.multi_reduction <add>, %301, %cst_184 [0] : vector<8x128xf32> to vector<128xf32>
    %303 = vector.shape_cast %302 : vector<128xf32> to vector<1x128xf32>
    %304 = arith.truncf %303 : vector<1x128xf32> to vector<1x128xbf16>
    %c9_185 = arith.constant 9 : index
    %c0_186 = arith.constant 0 : index
    %c0_187 = arith.constant 0 : index
    %305 = vector.load %arg2[%c9_185, %c0_186, %c0_187] : memref<11x128x128xbf16, #tpu.memory_space<vmem>>, vector<1x128x128xbf16>
    %306 = vector.shape_cast %305 : vector<1x128x128xbf16> to vector<128x128xbf16>
    %cst_188 = arith.constant dense<0.000000e+00> : vector<1x128xf32>
    %307 = tpu.matmul %304, %306, %cst_188 {dimension_numbers = #tpu.dot_dimension_numbers<[1], [0], [0], [1], [0, 0, 1, 1], [], []>} : vector<1x128xbf16>, vector<128x128xbf16>, vector<1x128xf32> -> vector<1x128xf32>
    %c17_189 = arith.constant 17 : index
    %c0_190 = arith.constant 0 : index
    %308 = vector.load %arg3[%c17_189, %c0_190] : memref<24x128xf32, #tpu.memory_space<vmem>>, vector<1x128xf32>
    %309 = arith.addf %307, %308 : vector<1x128xf32>
    %cst_191 = arith.constant 0.000000e+00 : f32
    %310 = vector.broadcast %cst_191 : f32 to vector<1x128xf32>
    %311 = arith.maximumf %309, %310 : vector<1x128xf32>
    %312 = arith.truncf %311 : vector<1x128xf32> to vector<1x128xbf16>
    %c10_192 = arith.constant 10 : index
    %c0_193 = arith.constant 0 : index
    %c0_194 = arith.constant 0 : index
    %313 = vector.load %arg2[%c10_192, %c0_193, %c0_194] : memref<11x128x128xbf16, #tpu.memory_space<vmem>>, vector<1x128x128xbf16>
    %314 = vector.shape_cast %313 : vector<1x128x128xbf16> to vector<128x128xbf16>
    %cst_195 = arith.constant dense<0.000000e+00> : vector<1x128xf32>
    %315 = tpu.matmul %312, %314, %cst_195 {dimension_numbers = #tpu.dot_dimension_numbers<[1], [0], [0], [1], [0, 0, 1, 1], [], []>} : vector<1x128xbf16>, vector<128x128xbf16>, vector<1x128xf32> -> vector<1x128xf32>
    %c18_196 = arith.constant 18 : index
    %c0_197 = arith.constant 0 : index
    %316 = vector.load %arg3[%c18_196, %c0_197] : memref<24x128xf32, #tpu.memory_space<vmem>>, vector<1x128xf32>
    %317 = arith.addf %315, %316 : vector<1x128xf32>
    %318 = vector.extract_strided_slice %317 {offsets = [0, 0], sizes = [1, 4], strides = [1, 1]} : vector<1x128xf32> to vector<1x4xf32>
    %c1_198 = arith.constant 1 : index
    %c0_199 = arith.constant 0 : index
    %319 = vector.load %arg4[%c1_198, %c0_199] : memref<2x4xf32, #tpu.memory_space<vmem>>, vector<1x4xf32>
    tpu.vector_store %arg4[%c1_198, %c0_199], %318 {strides = array<i32>} : memref<2x4xf32, #tpu.memory_space<vmem>>, vector<1x4xf32>,
    return
  }
}

</mosaic_0001>

<llo_original>
// kernel: gt_model_forward.1
$region0: #{gt_model_forward.1}
  #allocation0 [shape = 'u32[]', space=smem, size = 0x4, offset = 0x4, fixed_abs, tag = 'smem constant byte address 0x4 - core index']
  #allocation1 [shape = 'u32[144,128]{1,0:T(1,128)}', space=vmem, size = 0x12000, scoped, tag = 'internal scratch']
  #allocation2 [shape = 'f32[64,8]{1,0:T(8,128)}', space=vmem, size = 0x8000, scoped, tag = 'scratch operand']
  #allocation3 [shape = 'f32[64,8]{1,0:T(8,128)}', space=vmem, size = 0x8000, scoped, tag = 'scratch operand']
  #allocation4 [shape = 'f32[64,8]{1,0:T(8,128)}', space=vmem, size = 0x8000, scoped, tag = 'scratch operand']
  #allocation5 [shape = 'f32[16,128]{1,0:T(8,128)}', space=vmem, size = 0x2000, scoped, tag = 'scratch operand']
  %s0 = inlined_call_operand.vmem [shape: f32[16,128], index: 0, kind: input, shape index: {}]
  %s1 = inlined_call_operand.vmem [shape: f32[2,64,64], index: 1, kind: input, shape index: {}]
  %s2 = inlined_call_operand.vmem [shape: bf16[11,128,128], index: 2, kind: input, shape index: {}]
  %s3 = inlined_call_operand.vmem [shape: f32[24,128], index: 3, kind: input, shape index: {}]
  %s4 = inlined_call_operand.hbm [shape: f32[2,4], index: 4, kind: output, shape index: {}]
  %s5 = sld [smem:[#allocation0]]
  $region26: #{gt_model_forward.1} parent=0
    _
  %s7 = ssub.s32 1, %s5
  %s8 = scalar_select 0, %s7, %s5
  $region1: #{gt_model_forward.1} parent=0
    #allocation6 [shape = 'u8[1024]{0}', space=vmem, size = 0x400, scoped, tag = 'output window, operand 0, single buffered']
    #allocation7 [shape = 's32[1]{0}', space=sflag, size = 0x4, scoped, tag = 'scoped memory for gt_model_forward.1']
    %9 = vsyncpa [#allocation7], 0
    // Predicated region
    $region2: #{gt_model_forward.1} parent=1 // pred_check
      _
    $region3: #{gt_model_forward.1} parent=1 // pred_check_branch
      %11 = sbr.rel (0) target = $region5
    $region4: #{gt_model_forward.1} parent=1 // pred_region
      _
    $region5: #{gt_model_forward.1} parent=1 // pred_fallthru
      _
    // Predicated region
    $region6: #{gt_model_forward.1} parent=1 // pred_check
      _
    $region7: #{gt_model_forward.1} parent=1 // pred_check_branch
      %13 = sbr.rel (0) target = $region9
    $region8: #{gt_model_forward.1} parent=1 // pred_region
      _
    $region9: #{gt_model_forward.1} parent=1 // pred_fallthru
      _
    // Predicated region
    $region10: #{gt_model_forward.1} parent=1 // pred_check
      _
    $region11: #{gt_model_forward.1} parent=1 // pred_check_branch
      %15 = sbr.rel (0) target = $region13
    $region12: #{gt_model_forward.1} parent=1 // pred_region
      _
    $region13: #{gt_model_forward.1} parent=1 // pred_fallthru
      _
    // Predicated region
    $region14: #{gt_model_forward.1} parent=1 // pred_check
      _
    $region15: #{gt_model_forward.1} parent=1 // pred_check_branch
      %17 = sbr.rel (0) target = $region17
    $region16: #{gt_model_forward.1} parent=1 // pred_region
      _
    $region17: #{gt_model_forward.1} parent=1 // pred_fallthru
      _
    %v19 = vld [vmem:[%s1] sm:$0xff]
    %v20 = vld [vmem:[%s1 + $0x8] sm:$0xff]
    %v21 = vld [vmem:[%s1 + $0x10] sm:$0xff]
    %v22 = vld [vmem:[%s1 + $0x18] sm:$0xff]
    %v23 = vld [vmem:[%s1 + $0x20] sm:$0xff]
    %v24 = vld [vmem:[%s1 + $0x28] sm:$0xff]
    %v25 = vld [vmem:[%s1 + $0x30] sm:$0xff]
    %v26 = vld [vmem:[%s1 + $0x38] sm:$0xff]
    %s27 = scalar_lea.vmem %s1, 64
    %v28 = vld [vmem:[%s27] sm:$0xff]
    %v29 = vld [vmem:[%s27 + $0x8] sm:$0xff]
    %v30 = vld [vmem:[%s27 + $0x10] sm:$0xff]
    %v31 = vld [vmem:[%s27 + $0x18] sm:$0xff]
    %v32 = vld [vmem:[%s27 + $0x20] sm:$0xff]
    %v33 = vld [vmem:[%s27 + $0x28] sm:$0xff]
    %v34 = vld [vmem:[%s27 + $0x30] sm:$0xff]
    %v35 = vld [vmem:[%s27 + $0x38] sm:$0xff]
    %36 = vst [vmem:[#allocation5] sm:$0xff] 0.0
    %37 = vst [vmem:[#allocation5 + $0x8] sm:$0xff] 0.0
    %v38 = vld [vmem:[%s0] sm:$0xff]
    %v39 = vld [vmem:[%s0 + $0x8] sm:$0xff]
    %v40 = vpack.c.bf16 %v39, %v38
    %v41 = vld [vmem:[%s2] sm:$0xf]
    %v42 = vld [vmem:[%s2 + $0x4] sm:$0xf]
    %v43 = vld [vmem:[%s2 + $0x8] sm:$0xf]
    %v44 = vld [vmem:[%s2 + $0xc] sm:$0xf]
    %v45 = vld [vmem:[%s2 + $0x10] sm:$0xf]
    %v46 = vld [vmem:[%s2 + $0x14] sm:$0xf]
    %v47 = vld [vmem:[%s2 + $0x18] sm:$0xf]
    %v48 = vld [vmem:[%s2 + $0x1c] sm:$0xf]
    %v49 = vld [vmem:[%s2 + $0x20] sm:$0xf]
    %v50 = vld [vmem:[%s2 + $0x24] sm:$0xf]
    %v51 = vld [vmem:[%s2 + $0x28] sm:$0xf]
    %v52 = vld [vmem:[%s2 + $0x2c] sm:$0xf]
    %v53 = vld [vmem:[%s2 + $0x30] sm:$0xf]
    %v54 = vld [vmem:[%s2 + $0x34] sm:$0xf]
    %v55 = vld [vmem:[%s2 + $0x38] sm:$0xf]
    %v56 = vld [vmem:[%s2 + $0x3c] sm:$0xf]
    %v57 = vld [vmem:[%s3] sm:$0x1]
    %v58 = vlaneseq
    %v59 = vshrl.u32 %v58, 7
    %v60 = vsub.s32 0, %v59
    %v61 = vrot.slane %v57, %v60
    %v78 = vunpack.c.l.b16 %v41
    %v79 = vunpack.c.l.b16 %v42
    %v80 = vunpack.c.l.b16 %v43
    %v81 = vunpack.c.l.b16 %v44
    %v82 = vunpack.c.l.b16 %v45
    %v83 = vunpack.c.l.b16 %v46
    %v84 = vunpack.c.l.b16 %v47
    %v85 = vunpack.c.l.b16 %v48
    %v86 = vunpack.c.l.b16 %v49
    %v87 = vunpack.c.l.b16 %v50
    %v88 = vunpack.c.l.b16 %v51
    %v89 = vunpack.c.l.b16 %v52
    %v90 = vunpack.c.l.b16 %v53
    %v91 = vunpack.c.l.b16 %v54
    %v92 = vunpack.c.l.b16 %v55
    %v93 = vunpack.c.l.b16 %v56
    %v94 = vpack.c.b16 %v79, %v78
    %v95 = vpack.c.b16 %v81, %v80
    %v96 = vpack.c.b16 %v83, %v82
    %v97 = vpack.c.b16 %v85, %v84
    %v98 = vpack.c.b16 %v87, %v86
    %v99 = vpack.c.b16 %v89, %v88
    %v100 = vpack.c.b16 %v91, %v90
    %v101 = vpack.c.b16 %v93, %v92
    %110 = vmatprep.subr.bf16.mxu0 0
    %111 = vmatpush1.bf16.msra.mxu0 %v94
    %112 = vmatprep.subr.bf16.mxu0 0
    %113 = vmatpush1.bf16.msra.mxu0 %v95
    %114 = vmatprep.subr.bf16.mxu0 0
    %115 = vmatpush1.bf16.msra.mxu0 %v96
    %116 = vmatprep.subr.bf16.mxu0 0
    %117 = vmatpush1.bf16.msra.mxu0 %v97
    %118 = vmatprep.subr.bf16.mxu0 0
    %119 = vmatpush1.bf16.msra.mxu0 %v98
    %120 = vmatprep.subr.bf16.mxu0 0
    %121 = vmatpush1.bf16.msra.mxu0 %v99
    %122 = vmatprep.subr.bf16.mxu0 0
    %123 = vmatpush1.bf16.msra.mxu0 %v100
    %124 = vmatprep.subr.bf16.mxu0 0
    %125 = vmatpush1.bf16.msra.mxu0 %v101
    %126 = vmatprep.subr.bf16.mxu0 0
    %127 = vmatpush1.bf16.msra.mxu0 0
    %128 = vmatprep.subr.bf16.mxu0 0
    %129 = vmatpush1.bf16.msra.mxu0 0
    %130 = vmatprep.subr.bf16.mxu0 0
    %131 = vmatpush1.bf16.msra.mxu0 0
    %132 = vmatprep.subr.bf16.mxu0 0
    %133 = vmatpush1.bf16.msra.mxu0 0
    %134 = vmatprep.subr.bf16.mxu0 0
    %135 = vmatpush1.bf16.msra.mxu0 0
    %136 = vmatprep.subr.bf16.mxu0 0
    %137 = vmatpush1.bf16.msra.mxu0 0
    %138 = vmatprep.subr.bf16.mxu0 0
    %139 = vmatpush1.bf16.msra.mxu0 0
    %140 = vmatprep.subr.bf16.mxu0 0
    %141 = vmatpush1.bf16.msra.mxu0 0
    %142 = vmatprep.mubr.bf16.mxu0 0
    %143 = vmatmul.mubr.bf16.gmra.mrb[0].mxu0 %v40
    %v144 = vpop.f32.mrb[0].mxu0
    %v145 = vadd.f32 %v61, %v144
    %v146 = vpop.f32.mrb[0].mxu0
    %v147 = vpop.f32.mrb[0].mxu0
    %v148 = vadd.f32 %v61, %v147
    %v149 = vpop.f32.mrb[0].mxu0
    %150 = vdwg.mxu0
    %v151 = vpack.c.bf16 %v148, %v145
    %s152 = scalar_lea.vmem %s2, 64
    %v153 = vld [vmem:[%s152] sm:$0xf]
    %v154 = vld [vmem:[%s152 + $0x4] sm:$0xf]
    %v155 = vld [vmem:[%s152 + $0x8] sm:$0xf]
    %v156 = vld [vmem:[%s152 + $0xc] sm:$0xf]
    %v157 = vld [vmem:[%s152 + $0x10] sm:$0xf]
    %v158 = vld [vmem:[%s152 + $0x14] sm:$0xf]
    %v159 = vld [vmem:[%s152 + $0x18] sm:$0xf]
    %v160 = vld [vmem:[%s152 + $0x1c] sm:$0xf]
    %v161 = vld [vmem:[%s152 + $0x20] sm:$0xf]
    %v162 = vld [vmem:[%s152 + $0x24] sm:$0xf]
    %v163 = vld [vmem:[%s152 + $0x28] sm:$0xf]
    %v164 = vld [vmem:[%s152 + $0x2c] sm:$0xf]
    %v165 = vld [vmem:[%s152 + $0x30] sm:$0xf]
    %v166 = vld [vmem:[%s152 + $0x34] sm:$0xf]
    %v167 = vld [vmem:[%s152 + $0x38] sm:$0xf]
    %v168 = vld [vmem:[%s152 + $0x3c] sm:$0xf]
    %v169 = vld [vmem:[%s3 + $0x1] sm:$0x1]
    %v170 = vlaneseq
    %v171 = vshrl.u32 %v170, 7
    %v172 = vsub.s32 0, %v171
    %v173 = vrot.slane %v169, %v172
    %v190 = vunpack.c.l.b16 %v153
    %v191 = vunpack.c.l.b16 %v154
    %v192 = vunpack.c.l.b16 %v155
    %v193 = vunpack.c.l.b16 %v156
    %v194 = vunpack.c.l.b16 %v157
    %v195 = vunpack.c.l.b16 %v158
    %v196 = vunpack.c.l.b16 %v159
    %v197 = vunpack.c.l.b16 %v160
    %v198 = vunpack.c.l.b16 %v161
    %v199 = vunpack.c.l.b16 %v162
    %v200 = vunpack.c.l.b16 %v163
    %v201 = vunpack.c.l.b16 %v164
    %v202 = vunpack.c.l.b16 %v165
    %v203 = vunpack.c.l.b16 %v166
    %v204 = vunpack.c.l.b16 %v167
    %v205 = vunpack.c.l.b16 %v168
    %v206 = vpack.c.b16 %v191, %v190
    %v207 = vpack.c.b16 %v193, %v192
    %v208 = vpack.c.b16 %v195, %v194
    %v209 = vpack.c.b16 %v197, %v196
    %v210 = vpack.c.b16 %v199, %v198
    %v211 = vpack.c.b16 %v201, %v200
    %v212 = vpack.c.b16 %v203, %v202
    %v213 = vpack.c.b16 %v205, %v204
    %222 = vmatprep.subr.bf16.mxu0 0
    %223 = vmatpush1.bf16.msra.mxu0 %v206
    %224 = vmatprep.subr.bf16.mxu0 0
    %225 = vmatpush1.bf16.msra.mxu0 %v207
    %226 = vmatprep.subr.bf16.mxu0 0
    %227 = vmatpush1.bf16.msra.mxu0 %v208
    %228 = vmatprep.subr.bf16.mxu0 0
    %229 = vmatpush1.bf16.msra.mxu0 %v209
    %230 = vmatprep.subr.bf16.mxu0 0
    %231 = vmatpush1.bf16.msra.mxu0 %v210
    %232 = vmatprep.subr.bf16.mxu0 0
    %233 = vmatpush1.bf16.msra.mxu0 %v211
    %234 = vmatprep.subr.bf16.mxu0 0
    %235 = vmatpush1.bf16.msra.mxu0 %v212
    %236 = vmatprep.subr.bf16.mxu0 0
    %237 = vmatpush1.bf16.msra.mxu0 %v213
    %238 = vmatprep.subr.bf16.mxu0 0
    %239 = vmatpush1.bf16.msra.mxu0 0
    %240 = vmatprep.subr.bf16.mxu0 0
    %241 = vmatpush1.bf16.msra.mxu0 0
    %242 = vmatprep.subr.bf16.mxu0 0
    %243 = vmatpush1.bf16.msra.mxu0 0
    %244 = vmatprep.subr.bf16.mxu0 0
    %245 = vmatpush1.bf16.msra.mxu0 0
    %246 = vmatprep.subr.bf16.mxu0 0
    %247 = vmatpush1.bf16.msra.mxu0 0
    %248 = vmatprep.subr.bf16.mxu0 0
    %249 = vmatpush1.bf16.msra.mxu0 0
    %250 = vmatprep.subr.bf16.mxu0 0
    %251 = vmatpush1.bf16.msra.mxu0 0
    %252 = vmatprep.subr.bf16.mxu0 0
    %253 = vmatpush1.bf16.msra.mxu0 0
    %254 = vmatprep.mubr.bf16.mxu0 0
    %255 = vmatmul.mubr.bf16.gmra.mrb[0].mxu0 %v151
    %v256 = vpop.f32.mrb[0].mxu0
    %v257 = vadd.f32 %v173, %v256
    %v258 = vpop.f32.mrb[0].mxu0
    %v259 = vpop.f32.mrb[0].mxu0
    %v260 = vadd.f32 %v173, %v259
    %v261 = vpop.f32.mrb[0].mxu0
    %262 = vdwg.mxu0
    %vm263 = vcmask 64512
    %264 = vst.msk [vmem:[#allocation2] sm:$0xff] %vm263, %v257
    %265 = vst.msk [vmem:[#allocation2 + $0x8] sm:$0xff] %vm263, %v260
    %268 = vrot.lane.b32.xlu0 %v257, 96
    %v269 = vpop.permute.xlu0 %268
    %270 = vrot.lane.b32.xlu0 %v260, 96
    %v271 = vpop.permute.xlu0 %270
    %274 = vst.msk [vmem:[#allocation3] sm:$0xff] %vm263, %v269
    %275 = vst.msk [vmem:[#allocation3 + $0x8] sm:$0xff] %vm263, %v271
    %276 = vrot.lane.b32.xlu0 %v257, 64
    %v277 = vpop.permute.xlu0 %276
    %278 = vrot.lane.b32.xlu0 %v260, 64
    %v279 = vpop.permute.xlu0 %278
    %282 = vst.msk [vmem:[#allocation4] sm:$0xff] %vm263, %v277
    %283 = vst.msk [vmem:[#allocation4 + $0x8] sm:$0xff] %vm263, %v279
    %284 = vrot.lane.b32.xlu0 %v257, 120
    %v285 = vpop.permute.xlu0 %284
    %286 = vrot.lane.b32.xlu0 %v260, 120
    %v287 = vpop.permute.xlu0 %286
    %290 = vst.msk [vmem:[#allocation2 + $0x10] sm:$0xff] %vm263, %v285
    %291 = vst.msk [vmem:[#allocation2 + $0x18] sm:$0xff] %vm263, %v287
    %292 = vrot.lane.b32.xlu0 %v257, 88
    %v293 = vpop.permute.xlu0 %292
    %294 = vrot.lane.b32.xlu0 %v260, 88
    %v295 = vpop.permute.xlu0 %294
    %298 = vst.msk [vmem:[#allocation3 + $0x10] sm:$0xff] %vm263, %v293
    %299 = vst.msk [vmem:[#allocation3 + $0x18] sm:$0xff] %vm263, %v295
    %300 = vrot.lane.b32.xlu0 %v257, 56
    %v301 = vpop.permute.xlu0 %300
    %302 = vrot.lane.b32.xlu0 %v260, 56
    %v303 = vpop.permute.xlu0 %302
    %306 = vst.msk [vmem:[#allocation4 + $0x10] sm:$0xff] %vm263, %v301
    %307 = vst.msk [vmem:[#allocation4 + $0x18] sm:$0xff] %vm263, %v303
    %308 = vrot.lane.b32.xlu0 %v257, 112
    %v309 = vpop.permute.xlu0 %308
    %310 = vrot.lane.b32.xlu0 %v260, 112
    %v311 = vpop.permute.xlu0 %310
    %314 = vst.msk [vmem:[#allocation2 + $0x20] sm:$0xff] %vm263, %v309
    %315 = vst.msk [vmem:[#allocation2 + $0x28] sm:$0xff] %vm263, %v311
    %316 = vrot.lane.b32.xlu0 %v257, 80
    %v317 = vpop.permute.xlu0 %316
    %318 = vrot.lane.b32.xlu0 %v260, 80
    %v319 = vpop.permute.xlu0 %318
    %322 = vst.msk [vmem:[#allocation3 + $0x20] sm:$0xff] %vm263, %v317
    %323 = vst.msk [vmem:[#allocation3 + $0x28] sm:$0xff] %vm263, %v319
    %324 = vrot.lane.b32.xlu0 %v257, 48
    %v325 = vpop.permute.xlu0 %324
    %326 = vrot.lane.b32.xlu0 %v260, 48
    %v327 = vpop.permute.xlu0 %326
    %330 = vst.msk [vmem:[#allocation4 + $0x20] sm:$0xff] %vm263, %v325
    %331 = vst.msk [vmem:[#allocation4 + $0x28] sm:$0xff] %vm263, %v327
    %332 = vrot.lane.b32.xlu0 %v257, 104
    %v333 = vpop.permute.xlu0 %332
    %334 = vrot.lane.b32.xlu0 %v260, 104
    %v335 = vpop.permute.xlu0 %334
    %338 = vst.msk [vmem:[#allocation2 + $0x30] sm:$0xff] %vm263, %v333
    %339 = vst.msk [vmem:[#allocation2 + $0x38] sm:$0xff] %vm263, %v335
    %340 = vrot.lane.b32.xlu0 %v257, 72
    %v341 = vpop.permute.xlu0 %340
    %342 = vrot.lane.b32.xlu0 %v260, 72
    %v343 = vpop.permute.xlu0 %342
    %346 = vst.msk [vmem:[#allocation3 + $0x30] sm:$0xff] %vm263, %v341
    %347 = vst.msk [vmem:[#allocation3 + $0x38] sm:$0xff] %vm263, %v343
    %348 = vrot.lane.b32.xlu0 %v257, 40
    %v349 = vpop.permute.xlu0 %348
    %350 = vrot.lane.b32.xlu0 %v260, 40
    %v351 = vpop.permute.xlu0 %350
    %354 = vst.msk [vmem:[#allocation4 + $0x30] sm:$0xff] %vm263, %v349
    %355 = vst.msk [vmem:[#allocation4 + $0x38] sm:$0xff] %vm263, %v351
    %v356 = vld [vmem:[#allocation2] sm:$0xff]
    %v357 = vld [vmem:[#allocation2 + $0x8] sm:$0xff]
    %v358 = vld [vmem:[#allocation2 + $0x10] sm:$0xff]
    %v359 = vld [vmem:[#allocation2 + $0x18] sm:$0xff]
    %v360 = vld [vmem:[#allocation2 + $0x20] sm:$0xff]
    %v361 = vld [vmem:[#allocation2 + $0x28] sm:$0xff]
    %v362 = vld [vmem:[#allocation2 + $0x30] sm:$0xff]
    %v363 = vld [vmem:[#allocation2 + $0x38] sm:$0xff]
    %v364 = vpack.c.bf16 %v357, %v356
    %v365 = vpack.c.bf16 %v359, %v358
    %v366 = vpack.c.bf16 %v361, %v360
    %v367 = vpack.c.bf16 %v363, %v362
    %v368 = vld [vmem:[#allocation3] sm:$0xff]
    %v369 = vld [vmem:[#allocation3 + $0x8] sm:$0xff]
    %v370 = vld [vmem:[#allocation3 + $0x10] sm:$0xff]
    %v371 = vld [vmem:[#allocation3 + $0x18] sm:$0xff]
    %v372 = vld [vmem:[#allocation3 + $0x20] sm:$0xff]
    %v373 = vld [vmem:[#allocation3 + $0x28] sm:$0xff]
    %v374 = vld [vmem:[#allocation3 + $0x30] sm:$0xff]
    %v375 = vld [vmem:[#allocation3 + $0x38] sm:$0xff]
    %v376 = vpack.c.bf16 %v369, %v368
    %v377 = vpack.c.bf16 %v371, %v370
    %v378 = vpack.c.bf16 %v373, %v372
    %v379 = vpack.c.bf16 %v375, %v374
    %v380 = vld [vmem:[#allocation4] sm:$0xff]
    %v381 = vld [vmem:[#allocation4 + $0x8] sm:$0xff]
    %v382 = vld [vmem:[#allocation4 + $0x10] sm:$0xff]
    %v383 = vld [vmem:[#allocation4 + $0x18] sm:$0xff]
    %v384 = vld [vmem:[#allocation4 + $0x20] sm:$0xff]
    %v385 = vld [vmem:[#allocation4 + $0x28] sm:$0xff]
    %v386 = vld [vmem:[#allocation4 + $0x30] sm:$0xff]
    %v387 = vld [vmem:[#allocation4 + $0x38] sm:$0xff]
    %v388 = vpack.c.bf16 %v381, %v380
    %v389 = vpack.c.bf16 %v383, %v382
    %v390 = vpack.c.bf16 %v385, %v384
    %v391 = vpack.c.bf16 %v387, %v386
    %v393 = vsel %vm263, %v364, 0
    %v396 = vsel %vm263, %v365, 0
    %v399 = vsel %vm263, %v366, 0
    %v402 = vsel %vm263, %v367, 0
    %v405 = vsel %vm263, %v376, 0
    %v408 = vsel %vm263, %v377, 0
    %v411 = vsel %vm263, %v378, 0
    %v414 = vsel %vm263, %v379, 0
    %416 = vmatprep.subr.bf16.mxu0 0
    %417 = vmatpush1.bf16.xpose.msra.mxu0 %v405
    %418 = vmatprep.subr.bf16.mxu0 0
    %419 = vmatpush1.bf16.xpose.msra.mxu0 %v408
    %420 = vmatprep.subr.bf16.mxu0 0
    %421 = vmatpush1.bf16.xpose.msra.mxu0 %v411
    %422 = vmatprep.subr.bf16.mxu0 0
    %423 = vmatpush1.bf16.xpose.msra.mxu0 %v414
    %424 = vmatprep.subr.bf16.mxu0 0
    %425 = vmatpush1.bf16.xpose.msra.mxu0 0
    %426 = vmatprep.subr.bf16.mxu0 0
    %427 = vmatpush1.bf16.xpose.msra.mxu0 0
    %428 = vmatprep.subr.bf16.mxu0 0
    %429 = vmatpush1.bf16.xpose.msra.mxu0 0
    %430 = vmatprep.subr.bf16.mxu0 0
    %431 = vmatpush1.bf16.xpose.msra.mxu0 0
    %432 = vmatprep.subr.bf16.mxu0 0
    %433 = vmatpush1.bf16.xpose.msra.mxu0 0
    %434 = vmatprep.subr.bf16.mxu0 0
    %435 = vmatpush1.bf16.xpose.msra.mxu0 0
    %436 = vmatprep.subr.bf16.mxu0 0
    %437 = vmatpush1.bf16.xpose.msra.mxu0 0
    %438 = vmatprep.subr.bf16.mxu0 0
    %439 = vmatpush1.bf16.xpose.msra.mxu0 0
    %440 = vmatprep.subr.bf16.mxu0 0
    %441 = vmatpush1.bf16.xpose.msra.mxu0 0
    %442 = vmatprep.subr.bf16.mxu0 0
    %443 = vmatpush1.bf16.xpose.msra.mxu0 0
    %444 = vmatprep.subr.bf16.mxu0 0
    %445 = vmatpush1.bf16.xpose.msra.mxu0 0
    %446 = vmatprep.subr.bf16.mxu0 0
    %447 = vmatpush1.bf16.xpose.msra.mxu0 0
    %448 = vmatprep.mubr.bf16.mxu0 0
    %449 = vmatmul.mubr.bf16.gmra.mrb[0].mxu0 %v393
    %v450 = vpop.f32.mrb[0].mxu0
    %v451 = vadd.f32 0.0, %v450
    %v452 = vpop.f32.mrb[0].mxu0
    %v453 = vpop.f32.mrb[0].mxu0
    %v454 = vadd.f32 0.0, %v453
    %v455 = vpop.f32.mrb[0].mxu0
    %456 = vmatprep.mubr.bf16.mxu0 0
    %457 = vmatmul.mubr.bf16.gmra.mrb[0].mxu0 %v396
    %v458 = vpop.f32.mrb[0].mxu0
    %v459 = vadd.f32 0.0, %v458
    %v460 = vpop.f32.mrb[0].mxu0
    %v461 = vpop.f32.mrb[0].mxu0
    %v462 = vadd.f32 0.0, %v461
    %v463 = vpop.f32.mrb[0].mxu0
    %464 = vmatprep.mubr.bf16.mxu0 0
    %465 = vmatmul.mubr.bf16.gmra.mrb[0].mxu0 %v399
    %v466 = vpop.f32.mrb[0].mxu0
    %v467 = vadd.f32 0.0, %v466
    %v468 = vpop.f32.mrb[0].mxu0
    %v469 = vpop.f32.mrb[0].mxu0
    %v470 = vadd.f32 0.0, %v469
    %v471 = vpop.f32.mrb[0].mxu0
    %472 = vmatprep.mubr.bf16.mxu0 0
    %473 = vmatmul.mubr.bf16.gmra.mrb[0].mxu0 %v402
    %v474 = vpop.f32.mrb[0].mxu0
    %v475 = vadd.f32 0.0, %v474
    %v476 = vpop.f32.mrb[0].mxu0
    %v477 = vpop.f32.mrb[0].mxu0
    %v478 = vadd.f32 0.0, %v477
    %v479 = vpop.f32.mrb[0].mxu0
    %480 = vdwg.mxu0
    %v481 = vmul.f32 %v451, %v19
    %v482 = vmul.f32 %v454, %v20
    %v483 = vmul.f32 %v459, %v21
    %v484 = vmul.f32 %v462, %v22
    %v485 = vmul.f32 %v467, %v23
    %v486 = vmul.f32 %v470, %v24
    %v487 = vmul.f32 %v475, %v25
    %v488 = vmul.f32 %v478, %v26
    %v489 = vadd.f32 %v481, %v28
    %v490 = vadd.f32 %v482, %v29
    %v491 = vadd.f32 %v483, %v30
    %v492 = vadd.f32 %v484, %v31
    %v493 = vadd.f32 %v485, %v32
    %v494 = vadd.f32 %v486, %v33
    %v495 = vadd.f32 %v487, %v34
    %v496 = vadd.f32 %v488, %v35
    %vm497 = vcmask 523264
    %v498 = vsel %vm497, %v489, -inf
    %499 = vmax.xlane.f32.xlu0 %v498
    %v500 = vpop.xlane.xlu0 %499
    %v501 = vsel %vm497, %v490, -inf
    %502 = vmax.xlane.f32.xlu0 %v501
    %v503 = vpop.xlane.xlu0 %502
    %v504 = vsel %vm497, %v491, -inf
    %505 = vmax.xlane.f32.xlu0 %v504
    %v506 = vpop.xlane.xlu0 %505
    %v507 = vsel %vm497, %v492, -inf
    %508 = vmax.xlane.f32.xlu0 %v507
    %v509 = vpop.xlane.xlu0 %508
    %v510 = vsel %vm497, %v493, -inf
    %511 = vmax.xlane.f32.xlu0 %v510
    %v512 = vpop.xlane.xlu0 %511
    %v513 = vsel %vm497, %v494, -inf
    %514 = vmax.xlane.f32.xlu0 %v513
    %v515 = vpop.xlane.xlu0 %514
    %v516 = vsel %vm497, %v495, -inf
    %517 = vmax.xlane.f32.xlu0 %v516
    %v518 = vpop.xlane.xlu0 %517
    %v519 = vsel %vm497, %v496, -inf
    %520 = vmax.xlane.f32.xlu0 %v519
    %v521 = vpop.xlane.xlu0 %520
    %v522 = vsub.f32 %v489, %v500
    %v523 = vsub.f32 %v490, %v503
    %v524 = vsub.f32 %v491, %v506
    %v525 = vsub.f32 %v492, %v509
    %v526 = vsub.f32 %v493, %v512
    %v527 = vsub.f32 %v494, %v515
    %v528 = vsub.f32 %v495, %v518
    %v529 = vsub.f32 %v496, %v521
    %v530 = vmul.f32 %v522, 1.442695
    %v531 = vpow.pop %v530
    %v532 = vmul.f32 %v523, 1.442695
    %v533 = vpow.pop %v532
    %v534 = vmul.f32 %v524, 1.442695
    %v535 = vpow.pop %v534
    %v536 = vmul.f32 %v525, 1.442695
    %v537 = vpow.pop %v536
    %v538 = vmul.f32 %v526, 1.442695
    %v539 = vpow.pop %v538
    %v540 = vmul.f32 %v527, 1.442695
    %v541 = vpow.pop %v540
    %v542 = vmul.f32 %v528, 1.442695
    %v543 = vpow.pop %v542
    %v544 = vmul.f32 %v529, 1.442695
    %v545 = vpow.pop %v544
    %v546 = vsel %vm497, %v531, 0.0
    %547 = vadd.xlane.f32.xlu0 %v546
    %v548 = vpop.xlane.xlu0 %547
    %v549 = vsel %vm497, %v533, 0.0
    %550 = vadd.xlane.f32.xlu0 %v549
    %v551 = vpop.xlane.xlu0 %550
    %v552 = vsel %vm497, %v535, 0.0
    %553 = vadd.xlane.f32.xlu0 %v552
    %v554 = vpop.xlane.xlu0 %553
    %v555 = vsel %vm497, %v537, 0.0
    %556 = vadd.xlane.f32.xlu0 %v555
    %v557 = vpop.xlane.xlu0 %556
    %v558 = vsel %vm497, %v539, 0.0
    %559 = vadd.xlane.f32.xlu0 %v558
    %v560 = vpop.xlane.xlu0 %559
    %v561 = vsel %vm497, %v541, 0.0
    %562 = vadd.xlane.f32.xlu0 %v561
    %v563 = vpop.xlane.xlu0 %562
    %v564 = vsel %vm497, %v543, 0.0
    %565 = vadd.xlane.f32.xlu0 %v564
    %v566 = vpop.xlane.xlu0 %565
    %v567 = vsel %vm497, %v545, 0.0
    %568 = vadd.xlane.f32.xlu0 %v567
    %v569 = vpop.xlane.xlu0 %568
    %v570 = vrcp.pop %v548
    %v571 = vrcp.pop %v551
    %v572 = vrcp.pop %v554
    %v573 = vrcp.pop %v557
    %v574 = vrcp.pop %v560
    %v575 = vrcp.pop %v563
    %v576 = vrcp.pop %v566
    %v577 = vrcp.pop %v569
    %v578 = vmul.f32 %v531, %v570
    %v579 = vmul.f32 %v533, %v571
    %v580 = vmul.f32 %v535, %v572
    %v581 = vmul.f32 %v537, %v573
    %v582 = vmul.f32 %v539, %v574
    %v583 = vmul.f32 %v541, %v575
    %v584 = vmul.f32 %v543, %v576
    %v585 = vmul.f32 %v545, %v577
    %v586 = vpack.c.bf16 %v579, %v578
    %v587 = vpack.c.bf16 %v581, %v580
    %v588 = vpack.c.bf16 %v583, %v582
    %v589 = vpack.c.bf16 %v585, %v584
    %v591 = vsel %vm497, %v586, 0
    %v594 = vsel %vm497, %v587, 0
    %v597 = vsel %vm497, %v588, 0
    %v600 = vsel %vm497, %v589, 0
    %602 = vmatprep.subr.bf16.mxu0 0
    %603 = vmatpush1.bf16.msra.mxu0 %v388
    %604 = vmatprep.subr.bf16.mxu0 0
    %605 = vmatpush1.bf16.msra.mxu0 %v389
    %606 = vmatprep.subr.bf16.mxu0 0
    %607 = vmatpush1.bf16.msra.mxu0 %v390
    %608 = vmatprep.subr.bf16.mxu0 0
    %609 = vmatpush1.bf16.msra.mxu0 %v391
    %610 = vmatprep.subr.bf16.mxu0 0
    %611 = vmatpush1.bf16.msra.mxu0 0
    %612 = vmatprep.subr.bf16.mxu0 0
    %613 = vmatpush1.bf16.msra.mxu0 0
    %614 = vmatprep.subr.bf16.mxu0 0
    %615 = vmatpush1.bf16.msra.mxu0 0
    %616 = vmatprep.subr.bf16.mxu0 0
    %617 = vmatpush1.bf16.msra.mxu0 0
    %618 = vmatprep.subr.bf16.mxu0 0
    %619 = vmatpush1.bf16.msra.mxu0 0
    %620 = vmatprep.subr.bf16.mxu0 0
    %621 = vmatpush1.bf16.msra.mxu0 0
    %622 = vmatprep.subr.bf16.mxu0 0
    %623 = vmatpush1.bf16.msra.mxu0 0
    %624 = vmatprep.subr.bf16.mxu0 0
    %625 = vmatpush1.bf16.msra.mxu0 0
    %626 = vmatprep.subr.bf16.mxu0 0
    %627 = vmatpush1.bf16.msra.mxu0 0
    %628 = vmatprep.subr.bf16.mxu0 0
    %629 = vmatpush1.bf16.msra.mxu0 0
    %630 = vmatprep.subr.bf16.mxu0 0
    %631 = vmatpush1.bf16.msra.mxu0 0
    %632 = vmatprep.subr.bf16.mxu0 0
    %633 = vmatpush1.bf16.msra.mxu0 0
    %634 = vmatprep.mubr.bf16.mxu0 0
    %635 = vmatmul.mubr.bf16.gmra.mrb[0].mxu0 %v591
    %v636 = vpop.f32.mrb[0].mxu0
    %v637 = vadd.f32 0.0, %v636
    %v638 = vpop.f32.mrb[0].mxu0
    %v639 = vpop.f32.mrb[0].mxu0
    %v640 = vadd.f32 0.0, %v639
    %v641 = vpop.f32.mrb[0].mxu0
    %642 = vmatprep.mubr.bf16.mxu0 0
    %643 = vmatmul.mubr.bf16.gmra.mrb[0].mxu0 %v594
    %v644 = vpop.f32.mrb[0].mxu0
    %v645 = vadd.f32 0.0, %v644
    %v646 = vpop.f32.mrb[0].mxu0
    %v647 = vpop.f32.mrb[0].mxu0
    %v648 = vadd.f32 0.0, %v647
    %v649 = vpop.f32.mrb[0].mxu0
    %650 = vmatprep.mubr.bf16.mxu0 0
    %651 = vmatmul.mubr.bf16.gmra.mrb[0].mxu0 %v597
    %v652 = vpop.f32.mrb[0].mxu0
    %v653 = vadd.f32 0.0, %v652
    %v654 = vpop.f32.mrb[0].mxu0
    %v655 = vpop.f32.mrb[0].mxu0
    %v656 = vadd.f32 0.0, %v655
    %v657 = vpop.f32.mrb[0].mxu0
    %658 = vmatprep.mubr.bf16.mxu0 0
    %659 = vmatmul.mubr.bf16.gmra.mrb[0].mxu0 %v600
    %v660 = vpop.f32.mrb[0].mxu0
    %v661 = vadd.f32 0.0, %v660
    %v662 = vpop.f32.mrb[0].mxu0
    %v663 = vpop.f32.mrb[0].mxu0
    %v664 = vadd.f32 0.0, %v663
    %v665 = vpop.f32.mrb[0].mxu0
    %666 = vdwg.mxu0
    %667 = vst.msk [vmem:[#allocation5] sm:$0xff] %vm263, %v637
    %668 = vst.msk [vmem:[#allocation5 + $0x8] sm:$0xff] %vm263, %v640
    %671 = vrot.lane.b32.xlu0 %v645, 8
    %v672 = vpop.permute.xlu0 %671
    %673 = vrot.lane.b32.xlu0 %v648, 8
    %v674 = vpop.permute.xlu0 %673
    %vm677 = vcmask 130112
    %678 = vst.msk [vmem:[#allocation5] sm:$0xff] %vm677, %v672
    %679 = vst.msk [vmem:[#allocation5 + $0x8] sm:$0xff] %vm677, %v674
    %682 = vrot.lane.b32.xlu0 %v653, 16
    %v683 = vpop.permute.xlu0 %682
    %684 = vrot.lane.b32.xlu0 %v656, 16
    %v685 = vpop.permute.xlu0 %684
    %vm688 = vcmask 195712
    %689 = vst.msk [vmem:[#allocation5] sm:$0xff] %vm688, %v683
    %690 = vst.msk [vmem:[#allocation5 + $0x8] sm:$0xff] %vm688, %v685
    %693 = vrot.lane.b32.xlu0 %v661, 24
    %v694 = vpop.permute.xlu0 %693
    %695 = vrot.lane.b32.xlu0 %v664, 24
    %v696 = vpop.permute.xlu0 %695
    %vm699 = vcmask 261312
    %700 = vst.msk [vmem:[#allocation5] sm:$0xff] %vm699, %v694
    %701 = vst.msk [vmem:[#allocation5 + $0x8] sm:$0xff] %vm699, %v696
    %v702 = vld [vmem:[#allocation5] sm:$0xff]
    %v703 = vld [vmem:[#allocation5 + $0x8] sm:$0xff]
    %v704 = vpack.c.bf16 %v703, %v702
    %s705 = scalar_lea.vmem %s2, 128
    %v706 = vld [vmem:[%s705] sm:$0xf]
    %v707 = vld [vmem:[%s705 + $0x4] sm:$0xf]
    %v708 = vld [vmem:[%s705 + $0x8] sm:$0xf]
    %v709 = vld [vmem:[%s705 + $0xc] sm:$0xf]
    %v710 = vld [vmem:[%s705 + $0x10] sm:$0xf]
    %v711 = vld [vmem:[%s705 + $0x14] sm:$0xf]
    %v712 = vld [vmem:[%s705 + $0x18] sm:$0xf]
    %v713 = vld [vmem:[%s705 + $0x1c] sm:$0xf]
    %v714 = vld [vmem:[%s705 + $0x20] sm:$0xf]
    %v715 = vld [vmem:[%s705 + $0x24] sm:$0xf]
    %v716 = vld [vmem:[%s705 + $0x28] sm:$0xf]
    %v717 = vld [vmem:[%s705 + $0x2c] sm:$0xf]
    %v718 = vld [vmem:[%s705 + $0x30] sm:$0xf]
    %v719 = vld [vmem:[%s705 + $0x34] sm:$0xf]
    %v720 = vld [vmem:[%s705 + $0x38] sm:$0xf]
    %v721 = vld [vmem:[%s705 + $0x3c] sm:$0xf]
    %v722 = vld [vmem:[%s3 + $0x2] sm:$0x1]
    %v723 = vlaneseq
    %v724 = vshrl.u32 %v723, 7
    %v725 = vsub.s32 0, %v724
    %v726 = vrot.slane %v722, %v725
    %v743 = vunpack.c.l.b16 %v706
    %v744 = vunpack.c.l.b16 %v707
    %v745 = vunpack.c.l.b16 %v708
    %v746 = vunpack.c.l.b16 %v709
    %v747 = vunpack.c.l.b16 %v710
    %v748 = vunpack.c.l.b16 %v711
    %v749 = vunpack.c.l.b16 %v712
    %v750 = vunpack.c.l.b16 %v713
    %v751 = vunpack.c.l.b16 %v714
    %v752 = vunpack.c.l.b16 %v715
    %v753 = vunpack.c.l.b16 %v716
    %v754 = vunpack.c.l.b16 %v717
    %v755 = vunpack.c.l.b16 %v718
    %v756 = vunpack.c.l.b16 %v719
    %v757 = vunpack.c.l.b16 %v720
    %v758 = vunpack.c.l.b16 %v721
    %v759 = vpack.c.b16 %v744, %v743
    %v760 = vpack.c.b16 %v746, %v745
    %v761 = vpack.c.b16 %v748, %v747
    %v762 = vpack.c.b16 %v750, %v749
    %v763 = vpack.c.b16 %v752, %v751
    %v764 = vpack.c.b16 %v754, %v753
    %v765 = vpack.c.b16 %v756, %v755
    %v766 = vpack.c.b16 %v758, %v757
    %775 = vmatprep.subr.bf16.mxu0 0
    %776 = vmatpush1.bf16.msra.mxu0 %v759
    %777 = vmatprep.subr.bf16.mxu0 0
    %778 = vmatpush1.bf16.msra.mxu0 %v760
    %779 = vmatprep.subr.bf16.mxu0 0
    %780 = vmatpush1.bf16.msra.mxu0 %v761
    %781 = vmatprep.subr.bf16.mxu0 0
    %782 = vmatpush1.bf16.msra.mxu0 %v762
    %783 = vmatprep.subr.bf16.mxu0 0
    %784 = vmatpush1.bf16.msra.mxu0 %v763
    %785 = vmatprep.subr.bf16.mxu0 0
    %786 = vmatpush1.bf16.msra.mxu0 %v764
    %787 = vmatprep.subr.bf16.mxu0 0
    %788 = vmatpush1.bf16.msra.mxu0 %v765
    %789 = vmatprep.subr.bf16.mxu0 0
    %790 = vmatpush1.bf16.msra.mxu0 %v766
    %791 = vmatprep.subr.bf16.mxu0 0
    %792 = vmatpush1.bf16.msra.mxu0 0
    %793 = vmatprep.subr.bf16.mxu0 0
    %794 = vmatpush1.bf16.msra.mxu0 0
    %795 = vmatprep.subr.bf16.mxu0 0
    %796 = vmatpush1.bf16.msra.mxu0 0
    %797 = vmatprep.subr.bf16.mxu0 0
    %798 = vmatpush1.bf16.msra.mxu0 0
    %799 = vmatprep.subr.bf16.mxu0 0
    %800 = vmatpush1.bf16.msra.mxu0 0
    %801 = vmatprep.subr.bf16.mxu0 0
    %802 = vmatpush1.bf16.msra.mxu0 0
    %803 = vmatprep.subr.bf16.mxu0 0
    %804 = vmatpush1.bf16.msra.mxu0 0
    %805 = vmatprep.subr.bf16.mxu0 0
    %806 = vmatpush1.bf16.msra.mxu0 0
    %807 = vmatprep.mubr.bf16.mxu0 0
    %808 = vmatmul.mubr.bf16.gmra.mrb[0].mxu0 %v704
    %v809 = vpop.f32.mrb[0].mxu0
    %v810 = vadd.f32 %v726, %v809
    %v811 = vpop.f32.mrb[0].mxu0
    %v812 = vpop.f32.mrb[0].mxu0
    %v813 = vadd.f32 %v726, %v812
    %v814 = vpop.f32.mrb[0].mxu0
    %815 = vdwg.mxu0
    %v816 = vadd.f32 %v810, %v145
    %v817 = vadd.f32 %v813, %v148
    %v818 = vadd.f32 %v816, %v817
    %v819 = vrot.slane %v818, 4
    %v820 = vadd.f32 %v818, %v819
    %v821 = vrot.slane %v820, 2
    %v822 = vadd.f32 %v820, %v821
    %v823 = vrot.slane %v822, 1
    %v824 = vadd.f32 %v822, %v823
    %v825 = vrcp.pop 16.0
    %v826 = vmul.f32 %v824, %v825
    %v827 = vsub.f32 %v816, %v826
    %v828 = vsub.f32 %v817, %v826
    %v829 = vmul.f32 %v827, %v827
    %v830 = vmul.f32 %v828, %v828
    %v831 = vadd.f32 %v829, %v830
    %v832 = vrot.slane %v831, 4
    %v833 = vadd.f32 %v831, %v832
    %v834 = vrot.slane %v833, 2
    %v835 = vadd.f32 %v833, %v834
    %v836 = vrot.slane %v835, 1
    %v837 = vadd.f32 %v835, %v836
    %v838 = vmul.f32 %v837, %v825
    %v839 = vadd.f32 %v838, 1e-05
    %v840 = vrsqrt.pop %v839
    %v841 = vmul.f32 %v827, %v840
    %v842 = vmul.f32 %v828, %v840
    %v843 = vld [vmem:[%s3 + $0x3] sm:$0x1]
    %v844 = vlaneseq
    %v845 = vshrl.u32 %v844, 7
    %v846 = vsub.s32 0, %v845
    %v847 = vrot.slane %v843, %v846
    %v848 = vmul.f32 %v841, %v847
    %v849 = vmul.f32 %v842, %v847
    %v850 = vld [vmem:[%s3 + $0x4] sm:$0x1]
    %v851 = vlaneseq
    %v852 = vshrl.u32 %v851, 7
    %v853 = vsub.s32 0, %v852
    %v854 = vrot.slane %v850, %v853
    %v855 = vadd.f32 %v848, %v854
    %v856 = vadd.f32 %v849, %v854
    %v857 = vpack.c.bf16 %v856, %v855
    %s858 = scalar_lea.vmem %s2, 192
    %v859 = vld [vmem:[%s858] sm:$0xf]
    %v860 = vld [vmem:[%s858 + $0x4] sm:$0xf]
    %v861 = vld [vmem:[%s858 + $0x8] sm:$0xf]
    %v862 = vld [vmem:[%s858 + $0xc] sm:$0xf]
    %v863 = vld [vmem:[%s858 + $0x10] sm:$0xf]
    %v864 = vld [vmem:[%s858 + $0x14] sm:$0xf]
    %v865 = vld [vmem:[%s858 + $0x18] sm:$0xf]
    %v866 = vld [vmem:[%s858 + $0x1c] sm:$0xf]
    %v867 = vld [vmem:[%s858 + $0x20] sm:$0xf]
    %v868 = vld [vmem:[%s858 + $0x24] sm:$0xf]
    %v869 = vld [vmem:[%s858 + $0x28] sm:$0xf]
    %v870 = vld [vmem:[%s858 + $0x2c] sm:$0xf]
    %v871 = vld [vmem:[%s858 + $0x30] sm:$0xf]
    %v872 = vld [vmem:[%s858 + $0x34] sm:$0xf]
    %v873 = vld [vmem:[%s858 + $0x38] sm:$0xf]
    %v874 = vld [vmem:[%s858 + $0x3c] sm:$0xf]
    %v875 = vld [vmem:[%s3 + $0x5] sm:$0x1]
    %v876 = vlaneseq
    %v877 = vshrl.u32 %v876, 7
    %v878 = vsub.s32 0, %v877
    %v879 = vrot.slane %v875, %v878
    %v896 = vunpack.c.l.b16 %v859
    %v897 = vunpack.c.l.b16 %v860
    %v898 = vunpack.c.l.b16 %v861
    %v899 = vunpack.c.l.b16 %v862
    %v900 = vunpack.c.l.b16 %v863
    %v901 = vunpack.c.l.b16 %v864
    %v902 = vunpack.c.l.b16 %v865
    %v903 = vunpack.c.l.b16 %v866
    %v904 = vunpack.c.l.b16 %v867
    %v905 = vunpack.c.l.b16 %v868
    %v906 = vunpack.c.l.b16 %v869
    %v907 = vunpack.c.l.b16 %v870
    %v908 = vunpack.c.l.b16 %v871
    %v909 = vunpack.c.l.b16 %v872
    %v910 = vunpack.c.l.b16 %v873
    %v911 = vunpack.c.l.b16 %v874
    %v912 = vpack.c.b16 %v897, %v896
    %v913 = vpack.c.b16 %v899, %v898
    %v914 = vpack.c.b16 %v901, %v900
    %v915 = vpack.c.b16 %v903, %v902
    %v916 = vpack.c.b16 %v905, %v904
    %v917 = vpack.c.b16 %v907, %v906
    %v918 = vpack.c.b16 %v909, %v908
    %v919 = vpack.c.b16 %v911, %v910
    %928 = vmatprep.subr.bf16.mxu0 0
    %929 = vmatpush1.bf16.msra.mxu0 %v912
    %930 = vmatprep.subr.bf16.mxu0 0
    %931 = vmatpush1.bf16.msra.mxu0 %v913
    %932 = vmatprep.subr.bf16.mxu0 0
    %933 = vmatpush1.bf16.msra.mxu0 %v914
    %934 = vmatprep.subr.bf16.mxu0 0
    %935 = vmatpush1.bf16.msra.mxu0 %v915
    %936 = vmatprep.subr.bf16.mxu0 0
    %937 = vmatpush1.bf16.msra.mxu0 %v916
    %938 = vmatprep.subr.bf16.mxu0 0
    %939 = vmatpush1.bf16.msra.mxu0 %v917
    %940 = vmatprep.subr.bf16.mxu0 0
    %941 = vmatpush1.bf16.msra.mxu0 %v918
    %942 = vmatprep.subr.bf16.mxu0 0
    %943 = vmatpush1.bf16.msra.mxu0 %v919
    %944 = vmatprep.subr.bf16.mxu0 0
    %945 = vmatpush1.bf16.msra.mxu0 0
    %946 = vmatprep.subr.bf16.mxu0 0
    %947 = vmatpush1.bf16.msra.mxu0 0
    %948 = vmatprep.subr.bf16.mxu0 0
    %949 = vmatpush1.bf16.msra.mxu0 0
    %950 = vmatprep.subr.bf16.mxu0 0
    %951 = vmatpush1.bf16.msra.mxu0 0
    %952 = vmatprep.subr.bf16.mxu0 0
    %953 = vmatpush1.bf16.msra.mxu0 0
    %954 = vmatprep.subr.bf16.mxu0 0
    %955 = vmatpush1.bf16.msra.mxu0 0
    %956 = vmatprep.subr.bf16.mxu0 0
    %957 = vmatpush1.bf16.msra.mxu0 0
    %958 = vmatprep.subr.bf16.mxu0 0
    %959 = vmatpush1.bf16.msra.mxu0 0
    %960 = vmatprep.mubr.bf16.mxu0 0
    %961 = vmatmul.mubr.bf16.gmra.mrb[0].mxu0 %v857
    %v962 = vpop.f32.mrb[0].mxu0
    %v963 = vadd.f32 %v879, %v962
    %v964 = vpop.f32.mrb[0].mxu0
    %v965 = vpop.f32.mrb[0].mxu0
    %v966 = vadd.f32 %v879, %v965
    %v967 = vpop.f32.mrb[0].mxu0
    %968 = vdwg.mxu0
    %v969 = vmax.f32 %v963, 0.0
    %v970 = vmax.f32 %v966, 0.0
    %v971 = vpack.c.bf16 %v970, %v969
    %s972 = scalar_lea.vmem %s2, 256
    %v973 = vld [vmem:[%s972] sm:$0xf]
    %v974 = vld [vmem:[%s972 + $0x4] sm:$0xf]
    %v975 = vld [vmem:[%s972 + $0x8] sm:$0xf]
    %v976 = vld [vmem:[%s972 + $0xc] sm:$0xf]
    %v977 = vld [vmem:[%s972 + $0x10] sm:$0xf]
    %v978 = vld [vmem:[%s972 + $0x14] sm:$0xf]
    %v979 = vld [vmem:[%s972 + $0x18] sm:$0xf]
    %v980 = vld [vmem:[%s972 + $0x1c] sm:$0xf]
    %v981 = vld [vmem:[%s972 + $0x20] sm:$0xf]
    %v982 = vld [vmem:[%s972 + $0x24] sm:$0xf]
    %v983 = vld [vmem:[%s972 + $0x28] sm:$0xf]
    %v984 = vld [vmem:[%s972 + $0x2c] sm:$0xf]
    %v985 = vld [vmem:[%s972 + $0x30] sm:$0xf]
    %v986 = vld [vmem:[%s972 + $0x34] sm:$0xf]
    %v987 = vld [vmem:[%s972 + $0x38] sm:$0xf]
    %v988 = vld [vmem:[%s972 + $0x3c] sm:$0xf]
    %v989 = vld [vmem:[%s3 + $0x6] sm:$0x1]
    %v990 = vlaneseq
    %v991 = vshrl.u32 %v990, 7
    %v992 = vsub.s32 0, %v991
    %v993 = vrot.slane %v989, %v992
    %v1010 = vunpack.c.l.b16 %v973
    %v1011 = vunpack.c.l.b16 %v974
    %v1012 = vunpack.c.l.b16 %v975
    %v1013 = vunpack.c.l.b16 %v976
    %v1014 = vunpack.c.l.b16 %v977
    %v1015 = vunpack.c.l.b16 %v978
    %v1016 = vunpack.c.l.b16 %v979
    %v1017 = vunpack.c.l.b16 %v980
    %v1018 = vunpack.c.l.b16 %v981
    %v1019 = vunpack.c.l.b16 %v982
    %v1020 = vunpack.c.l.b16 %v983
    %v1021 = vunpack.c.l.b16 %v984
    %v1022 = vunpack.c.l.b16 %v985
    %v1023 = vunpack.c.l.b16 %v986
    %v1024 = vunpack.c.l.b16 %v987
    %v1025 = vunpack.c.l.b16 %v988
    %v1026 = vpack.c.b16 %v1011, %v1010
    %v1027 = vpack.c.b16 %v1013, %v1012
    %v1028 = vpack.c.b16 %v1015, %v1014
    %v1029 = vpack.c.b16 %v1017, %v1016
    %v1030 = vpack.c.b16 %v1019, %v1018
    %v1031 = vpack.c.b16 %v1021, %v1020
    %v1032 = vpack.c.b16 %v1023, %v1022
    %v1033 = vpack.c.b16 %v1025, %v1024
    %1042 = vmatprep.subr.bf16.mxu0 0
    %1043 = vmatpush1.bf16.msra.mxu0 %v1026
    %1044 = vmatprep.subr.bf16.mxu0 0
    %1045 = vmatpush1.bf16.msra.mxu0 %v1027
    %1046 = vmatprep.subr.bf16.mxu0 0
    %1047 = vmatpush1.bf16.msra.mxu0 %v1028
    %1048 = vmatprep.subr.bf16.mxu0 0
    %1049 = vmatpush1.bf16.msra.mxu0 %v1029
    %1050 = vmatprep.subr.bf16.mxu0 0
    %1051 = vmatpush1.bf16.msra.mxu0 %v1030
    %1052 = vmatprep.subr.bf16.mxu0 0
    %1053 = vmatpush1.bf16.msra.mxu0 %v1031
    %1054 = vmatprep.subr.bf16.mxu0 0
    %1055 = vmatpush1.bf16.msra.mxu0 %v1032
    %1056 = vmatprep.subr.bf16.mxu0 0
    %1057 = vmatpush1.bf16.msra.mxu0 %v1033
    %1058 = vmatprep.subr.bf16.mxu0 0
    %1059 = vmatpush1.bf16.msra.mxu0 0
    %1060 = vmatprep.subr.bf16.mxu0 0
    %1061 = vmatpush1.bf16.msra.mxu0 0
    %1062 = vmatprep.subr.bf16.mxu0 0
    %1063 = vmatpush1.bf16.msra.mxu0 0
    %1064 = vmatprep.subr.bf16.mxu0 0
    %1065 = vmatpush1.bf16.msra.mxu0 0
    %1066 = vmatprep.subr.bf16.mxu0 0
    %1067 = vmatpush1.bf16.msra.mxu0 0
    %1068 = vmatprep.subr.bf16.mxu0 0
    %1069 = vmatpush1.bf16.msra.mxu0 0
    %1070 = vmatprep.subr.bf16.mxu0 0
    %1071 = vmatpush1.bf16.msra.mxu0 0
    %1072 = vmatprep.subr.bf16.mxu0 0
    %1073 = vmatpush1.bf16.msra.mxu0 0
    %1074 = vmatprep.mubr.bf16.mxu0 0
    %1075 = vmatmul.mubr.bf16.gmra.mrb[0].mxu0 %v971
    %v1076 = vpop.f32.mrb[0].mxu0
    %v1077 = vadd.f32 %v993, %v1076
    %v1078 = vpop.f32.mrb[0].mxu0
    %v1079 = vpop.f32.mrb[0].mxu0
    %v1080 = vadd.f32 %v993, %v1079
    %v1081 = vpop.f32.mrb[0].mxu0
    %1082 = vdwg.mxu0
    %v1083 = vadd.f32 %v855, %v1077
    %v1084 = vadd.f32 %v856, %v1080
    %v1085 = vadd.f32 %v1083, %v1084
    %v1086 = vrot.slane %v1085, 4
    %v1087 = vadd.f32 %v1085, %v1086
    %v1088 = vrot.slane %v1087, 2
    %v1089 = vadd.f32 %v1087, %v1088
    %v1090 = vrot.slane %v1089, 1
    %v1091 = vadd.f32 %v1089, %v1090
    %v1092 = vmul.f32 %v1091, %v825
    %v1093 = vsub.f32 %v1083, %v1092
    %v1094 = vsub.f32 %v1084, %v1092
    %v1095 = vmul.f32 %v1093, %v1093
    %v1096 = vmul.f32 %v1094, %v1094
    %v1097 = vadd.f32 %v1095, %v1096
    %v1098 = vrot.slane %v1097, 4
    %v1099 = vadd.f32 %v1097, %v1098
    %v1100 = vrot.slane %v1099, 2
    %v1101 = vadd.f32 %v1099, %v1100
    %v1102 = vrot.slane %v1101, 1
    %v1103 = vadd.f32 %v1101, %v1102
    %v1104 = vmul.f32 %v1103, %v825
    %v1105 = vadd.f32 %v1104, 1e-05
    %v1106 = vrsqrt.pop %v1105
    %v1107 = vmul.f32 %v1093, %v1106
    %v1108 = vmul.f32 %v1094, %v1106
    %v1109 = vld [vmem:[%s3 + $0x7] sm:$0x1]
    %v1110 = vlaneseq
    %v1111 = vshrl.u32 %v1110, 7
    %v1112 = vsub.s32 0, %v1111
    %v1113 = vrot.slane %v1109, %v1112
    %v1114 = vmul.f32 %v1107, %v1113
    %v1115 = vmul.f32 %v1108, %v1113
    %v1116 = vld [vmem:[%s3 + $0x8] sm:$0x1]
    %v1117 = vlaneseq
    %v1118 = vshrl.u32 %v1117, 7
    %v1119 = vsub.s32 0, %v1118
    %v1120 = vrot.slane %v1116, %v1119
    %v1121 = vadd.f32 %v1114, %v1120
    %v1122 = vadd.f32 %v1115, %v1120
    %v1123 = vpack.c.bf16 %v1122, %v1121
    %s1124 = scalar_lea.vmem %s2, 320
    %v1125 = vld [vmem:[%s1124] sm:$0xf]
    %v1126 = vld [vmem:[%s1124 + $0x4] sm:$0xf]
    %v1127 = vld [vmem:[%s1124 + $0x8] sm:$0xf]
    %v1128 = vld [vmem:[%s1124 + $0xc] sm:$0xf]
    %v1129 = vld [vmem:[%s1124 + $0x10] sm:$0xf]
    %v1130 = vld [vmem:[%s1124 + $0x14] sm:$0xf]
    %v1131 = vld [vmem:[%s1124 + $0x18] sm:$0xf]
    %v1132 = vld [vmem:[%s1124 + $0x1c] sm:$0xf]
    %v1133 = vld [vmem:[%s1124 + $0x20] sm:$0xf]
    %v1134 = vld [vmem:[%s1124 + $0x24] sm:$0xf]
    %v1135 = vld [vmem:[%s1124 + $0x28] sm:$0xf]
    %v1136 = vld [vmem:[%s1124 + $0x2c] sm:$0xf]
    %v1137 = vld [vmem:[%s1124 + $0x30] sm:$0xf]
    %v1138 = vld [vmem:[%s1124 + $0x34] sm:$0xf]
    %v1139 = vld [vmem:[%s1124 + $0x38] sm:$0xf]
    %v1140 = vld [vmem:[%s1124 + $0x3c] sm:$0xf]
    %v1141 = vld [vmem:[%s3 + $0x9] sm:$0x1]
    %v1142 = vlaneseq
    %v1143 = vshrl.u32 %v1142, 7
    %v1144 = vsub.s32 0, %v1143
    %v1145 = vrot.slane %v1141, %v1144
    %v1162 = vunpack.c.l.b16 %v1125
    %v1163 = vunpack.c.l.b16 %v1126
    %v1164 = vunpack.c.l.b16 %v1127
    %v1165 = vunpack.c.l.b16 %v1128
    %v1166 = vunpack.c.l.b16 %v1129
    %v1167 = vunpack.c.l.b16 %v1130
    %v1168 = vunpack.c.l.b16 %v1131
    %v1169 = vunpack.c.l.b16 %v1132
    %v1170 = vunpack.c.l.b16 %v1133
    %v1171 = vunpack.c.l.b16 %v1134
    %v1172 = vunpack.c.l.b16 %v1135
    %v1173 = vunpack.c.l.b16 %v1136
    %v1174 = vunpack.c.l.b16 %v1137
    %v1175 = vunpack.c.l.b16 %v1138
    %v1176 = vunpack.c.l.b16 %v1139
    %v1177 = vunpack.c.l.b16 %v1140
    %v1178 = vpack.c.b16 %v1163, %v1162
    %v1179 = vpack.c.b16 %v1165, %v1164
    %v1180 = vpack.c.b16 %v1167, %v1166
    %v1181 = vpack.c.b16 %v1169, %v1168
    %v1182 = vpack.c.b16 %v1171, %v1170
    %v1183 = vpack.c.b16 %v1173, %v1172
    %v1184 = vpack.c.b16 %v1175, %v1174
    %v1185 = vpack.c.b16 %v1177, %v1176
    %1194 = vmatprep.subr.bf16.mxu0 0
    %1195 = vmatpush1.bf16.msra.mxu0 %v1178
    %1196 = vmatprep.subr.bf16.mxu0 0
    %1197 = vmatpush1.bf16.msra.mxu0 %v1179
    %1198 = vmatprep.subr.bf16.mxu0 0
    %1199 = vmatpush1.bf16.msra.mxu0 %v1180
    %1200 = vmatprep.subr.bf16.mxu0 0
    %1201 = vmatpush1.bf16.msra.mxu0 %v1181
    %1202 = vmatprep.subr.bf16.mxu0 0
    %1203 = vmatpush1.bf16.msra.mxu0 %v1182
    %1204 = vmatprep.subr.bf16.mxu0 0
    %1205 = vmatpush1.bf16.msra.mxu0 %v1183
    %1206 = vmatprep.subr.bf16.mxu0 0
    %1207 = vmatpush1.bf16.msra.mxu0 %v1184
    %1208 = vmatprep.subr.bf16.mxu0 0
    %1209 = vmatpush1.bf16.msra.mxu0 %v1185
    %1210 = vmatprep.subr.bf16.mxu0 0
    %1211 = vmatpush1.bf16.msra.mxu0 0
    %1212 = vmatprep.subr.bf16.mxu0 0
    %1213 = vmatpush1.bf16.msra.mxu0 0
    %1214 = vmatprep.subr.bf16.mxu0 0
    %1215 = vmatpush1.bf16.msra.mxu0 0
    %1216 = vmatprep.subr.bf16.mxu0 0
    %1217 = vmatpush1.bf16.msra.mxu0 0
    %1218 = vmatprep.subr.bf16.mxu0 0
    %1219 = vmatpush1.bf16.msra.mxu0 0
    %1220 = vmatprep.subr.bf16.mxu0 0
    %1221 = vmatpush1.bf16.msra.mxu0 0
    %1222 = vmatprep.subr.bf16.mxu0 0
    %1223 = vmatpush1.bf16.msra.mxu0 0
    %1224 = vmatprep.subr.bf16.mxu0 0
    %1225 = vmatpush1.bf16.msra.mxu0 0
    %1226 = vmatprep.mubr.bf16.mxu0 0
    %1227 = vmatmul.mubr.bf16.gmra.mrb[0].mxu0 %v1123
    %v1228 = vpop.f32.mrb[0].mxu0
    %v1229 = vadd.f32 %v1145, %v1228
    %v1230 = vpop.f32.mrb[0].mxu0
    %v1231 = vpop.f32.mrb[0].mxu0
    %v1232 = vadd.f32 %v1145, %v1231
    %v1233 = vpop.f32.mrb[0].mxu0
    %1234 = vdwg.mxu0
    %1235 = vst.msk [vmem:[#allocation2] sm:$0xff] %vm263, %v1229
    %1236 = vst.msk [vmem:[#allocation2 + $0x8] sm:$0xff] %vm263, %v1232
    %1239 = vrot.lane.b32.xlu0 %v1229, 96
    %v1240 = vpop.permute.xlu0 %1239
    %1241 = vrot.lane.b32.xlu0 %v1232, 96
    %v1242 = vpop.permute.xlu0 %1241
    %1245 = vst.msk [vmem:[#allocation3] sm:$0xff] %vm263, %v1240
    %1246 = vst.msk [vmem:[#allocation3 + $0x8] sm:$0xff] %vm263, %v1242
    %1247 = vrot.lane.b32.xlu0 %v1229, 64
    %v1248 = vpop.permute.xlu0 %1247
    %1249 = vrot.lane.b32.xlu0 %v1232, 64
    %v1250 = vpop.permute.xlu0 %1249
    %1253 = vst.msk [vmem:[#allocation4] sm:$0xff] %vm263, %v1248
    %1254 = vst.msk [vmem:[#allocation4 + $0x8] sm:$0xff] %vm263, %v1250
    %1255 = vrot.lane.b32.xlu0 %v1229, 120
    %v1256 = vpop.permute.xlu0 %1255
    %1257 = vrot.lane.b32.xlu0 %v1232, 120
    %v1258 = vpop.permute.xlu0 %1257
    %1261 = vst.msk [vmem:[#allocation2 + $0x10] sm:$0xff] %vm263, %v1256
    %1262 = vst.msk [vmem:[#allocation2 + $0x18] sm:$0xff] %vm263, %v1258
    %1263 = vrot.lane.b32.xlu0 %v1229, 88
    %v1264 = vpop.permute.xlu0 %1263
    %1265 = vrot.lane.b32.xlu0 %v1232, 88
    %v1266 = vpop.permute.xlu0 %1265
    %1269 = vst.msk [vmem:[#allocation3 + $0x10] sm:$0xff] %vm263, %v1264
    %1270 = vst.msk [vmem:[#allocation3 + $0x18] sm:$0xff] %vm263, %v1266
    %1271 = vrot.lane.b32.xlu0 %v1229, 56
    %v1272 = vpop.permute.xlu0 %1271
    %1273 = vrot.lane.b32.xlu0 %v1232, 56
    %v1274 = vpop.permute.xlu0 %1273
    %1277 = vst.msk [vmem:[#allocation4 + $0x10] sm:$0xff] %vm263, %v1272
    %1278 = vst.msk [vmem:[#allocation4 + $0x18] sm:$0xff] %vm263, %v1274
    %1279 = vrot.lane.b32.xlu0 %v1229, 112
    %v1280 = vpop.permute.xlu0 %1279
    %1281 = vrot.lane.b32.xlu0 %v1232, 112
    %v1282 = vpop.permute.xlu0 %1281
    %1285 = vst.msk [vmem:[#allocation2 + $0x20] sm:$0xff] %vm263, %v1280
    %1286 = vst.msk [vmem:[#allocation2 + $0x28] sm:$0xff] %vm263, %v1282
    %1287 = vrot.lane.b32.xlu0 %v1229, 80
    %v1288 = vpop.permute.xlu0 %1287
    %1289 = vrot.lane.b32.xlu0 %v1232, 80
    %v1290 = vpop.permute.xlu0 %1289
    %1293 = vst.msk [vmem:[#allocation3 + $0x20] sm:$0xff] %vm263, %v1288
    %1294 = vst.msk [vmem:[#allocation3 + $0x28] sm:$0xff] %vm263, %v1290
    %1295 = vrot.lane.b32.xlu0 %v1229, 48
    %v1296 = vpop.permute.xlu0 %1295
    %1297 = vrot.lane.b32.xlu0 %v1232, 48
    %v1298 = vpop.permute.xlu0 %1297
    %1301 = vst.msk [vmem:[#allocation4 + $0x20] sm:$0xff] %vm263, %v1296
    %1302 = vst.msk [vmem:[#allocation4 + $0x28] sm:$0xff] %vm263, %v1298
    %1303 = vrot.lane.b32.xlu0 %v1229, 104
    %v1304 = vpop.permute.xlu0 %1303
    %1305 = vrot.lane.b32.xlu0 %v1232, 104
    %v1306 = vpop.permute.xlu0 %1305
    %1309 = vst.msk [vmem:[#allocation2 + $0x30] sm:$0xff] %vm263, %v1304
    %1310 = vst.msk [vmem:[#allocation2 + $0x38] sm:$0xff] %vm263, %v1306
    %1311 = vrot.lane.b32.xlu0 %v1229, 72
    %v1312 = vpop.permute.xlu0 %1311
    %1313 = vrot.lane.b32.xlu0 %v1232, 72
    %v1314 = vpop.permute.xlu0 %1313
    %1317 = vst.msk [vmem:[#allocation3 + $0x30] sm:$0xff] %vm263, %v1312
    %1318 = vst.msk [vmem:[#allocation3 + $0x38] sm:$0xff] %vm263, %v1314
    %1319 = vrot.lane.b32.xlu0 %v1229, 40
    %v1320 = vpop.permute.xlu0 %1319
    %1321 = vrot.lane.b32.xlu0 %v1232, 40
    %v1322 = vpop.permute.xlu0 %1321
    %1325 = vst.msk [vmem:[#allocation4 + $0x30] sm:$0xff] %vm263, %v1320
    %1326 = vst.msk [vmem:[#allocation4 + $0x38] sm:$0xff] %vm263, %v1322
    %v1327 = vld [vmem:[#allocation2] sm:$0xff]
    %v1328 = vld [vmem:[#allocation2 + $0x8] sm:$0xff]
    %v1329 = vld [vmem:[#allocation2 + $0x10] sm:$0xff]
    %v1330 = vld [vmem:[#allocation2 + $0x18] sm:$0xff]
    %v1331 = vld [vmem:[#allocation2 + $0x20] sm:$0xff]
    %v1332 = vld [vmem:[#allocation2 + $0x28] sm:$0xff]
    %v1333 = vld [vmem:[#allocation2 + $0x30] sm:$0xff]
    %v1334 = vld [vmem:[#allocation2 + $0x38] sm:$0xff]
    %v1335 = vpack.c.bf16 %v1328, %v1327
    %v1336 = vpack.c.bf16 %v1330, %v1329
    %v1337 = vpack.c.bf16 %v1332, %v1331
    %v1338 = vpack.c.bf16 %v1334, %v1333
    %v1339 = vld [vmem:[#allocation3] sm:$0xff]
    %v1340 = vld [vmem:[#allocation3 + $0x8] sm:$0xff]
    %v1341 = vld [vmem:[#allocation3 + $0x10] sm:$0xff]
    %v1342 = vld [vmem:[#allocation3 + $0x18] sm:$0xff]
    %v1343 = vld [vmem:[#allocation3 + $0x20] sm:$0xff]
    %v1344 = vld [vmem:[#allocation3 + $0x28] sm:$0xff]
    %v1345 = vld [vmem:[#allocation3 + $0x30] sm:$0xff]
    %v1346 = vld [vmem:[#allocation3 + $0x38] sm:$0xff]
    %v1347 = vpack.c.bf16 %v1340, %v1339
    %v1348 = vpack.c.bf16 %v1342, %v1341
    %v1349 = vpack.c.bf16 %v1344, %v1343
    %v1350 = vpack.c.bf16 %v1346, %v1345
    %v1351 = vld [vmem:[#allocation4] sm:$0xff]
    %v1352 = vld [vmem:[#allocation4 + $0x8] sm:$0xff]
    %v1353 = vld [vmem:[#allocation4 + $0x10] sm:$0xff]
    %v1354 = vld [vmem:[#allocation4 + $0x18] sm:$0xff]
    %v1355 = vld [vmem:[#allocation4 + $0x20] sm:$0xff]
    %v1356 = vld [vmem:[#allocation4 + $0x28] sm:$0xff]
    %v1357 = vld [vmem:[#allocation4 + $0x30] sm:$0xff]
    %v1358 = vld [vmem:[#allocation4 + $0x38] sm:$0xff]
    %v1359 = vpack.c.bf16 %v1352, %v1351
    %v1360 = vpack.c.bf16 %v1354, %v1353
    %v1361 = vpack.c.bf16 %v1356, %v1355
    %v1362 = vpack.c.bf16 %v1358, %v1357
    %v1364 = vsel %vm263, %v1335, 0
    %v1367 = vsel %vm263, %v1336, 0
    %v1370 = vsel %vm263, %v1337, 0
    %v1373 = vsel %vm263, %v1338, 0
    %v1376 = vsel %vm263, %v1347, 0
    %v1379 = vsel %vm263, %v1348, 0
    %v1382 = vsel %vm263, %v1349, 0
    %v1385 = vsel %vm263, %v1350, 0
    %1387 = vmatprep.subr.bf16.mxu0 0
    %1388 = vmatpush1.bf16.xpose.msra.mxu0 %v1376
    %1389 = vmatprep.subr.bf16.mxu0 0
    %1390 = vmatpush1.bf16.xpose.msra.mxu0 %v1379
    %1391 = vmatprep.subr.bf16.mxu0 0
    %1392 = vmatpush1.bf16.xpose.msra.mxu0 %v1382
    %1393 = vmatprep.subr.bf16.mxu0 0
    %1394 = vmatpush1.bf16.xpose.msra.mxu0 %v1385
    %1395 = vmatprep.subr.bf16.mxu0 0
    %1396 = vmatpush1.bf16.xpose.msra.mxu0 0
    %1397 = vmatprep.subr.bf16.mxu0 0
    %1398 = vmatpush1.bf16.xpose.msra.mxu0 0
    %1399 = vmatprep.subr.bf16.mxu0 0
    %1400 = vmatpush1.bf16.xpose.msra.mxu0 0
    %1401 = vmatprep.subr.bf16.mxu0 0
    %1402 = vmatpush1.bf16.xpose.msra.mxu0 0
    %1403 = vmatprep.subr.bf16.mxu0 0
    %1404 = vmatpush1.bf16.xpose.msra.mxu0 0
    %1405 = vmatprep.subr.bf16.mxu0 0
    %1406 = vmatpush1.bf16.xpose.msra.mxu0 0
    %1407 = vmatprep.subr.bf16.mxu0 0
    %1408 = vmatpush1.bf16.xpose.msra.mxu0 0
    %1409 = vmatprep.subr.bf16.mxu0 0
    %1410 = vmatpush1.bf16.xpose.msra.mxu0 0
    %1411 = vmatprep.subr.bf16.mxu0 0
    %1412 = vmatpush1.bf16.xpose.msra.mxu0 0
    %1413 = vmatprep.subr.bf16.mxu0 0
    %1414 = vmatpush1.bf16.xpose.msra.mxu0 0
    %1415 = vmatprep.subr.bf16.mxu0 0
    %1416 = vmatpush1.bf16.xpose.msra.mxu0 0
    %1417 = vmatprep.subr.bf16.mxu0 0
    %1418 = vmatpush1.bf16.xpose.msra.mxu0 0
    %1419 = vmatprep.mubr.bf16.mxu0 0
    %1420 = vmatmul.mubr.bf16.gmra.mrb[0].mxu0 %v1364
    %v1421 = vpop.f32.mrb[0].mxu0
    %v1422 = vadd.f32 0.0, %v1421
    %v1423 = vpop.f32.mrb[0].mxu0
    %v1424 = vpop.f32.mrb[0].mxu0
    %v1425 = vadd.f32 0.0, %v1424
    %v1426 = vpop.f32.mrb[0].mxu0
    %1427 = vmatprep.mubr.bf16.mxu0 0
    %1428 = vmatmul.mubr.bf16.gmra.mrb[0].mxu0 %v1367
    %v1429 = vpop.f32.mrb[0].mxu0
    %v1430 = vadd.f32 0.0, %v1429
    %v1431 = vpop.f32.mrb[0].mxu0
    %v1432 = vpop.f32.mrb[0].mxu0
    %v1433 = vadd.f32 0.0, %v1432
    %v1434 = vpop.f32.mrb[0].mxu0
    %1435 = vmatprep.mubr.bf16.mxu0 0
    %1436 = vmatmul.mubr.bf16.gmra.mrb[0].mxu0 %v1370
    %v1437 = vpop.f32.mrb[0].mxu0
    %v1438 = vadd.f32 0.0, %v1437
    %v1439 = vpop.f32.mrb[0].mxu0
    %v1440 = vpop.f32.mrb[0].mxu0
    %v1441 = vadd.f32 0.0, %v1440
    %v1442 = vpop.f32.mrb[0].mxu0
    %1443 = vmatprep.mubr.bf16.mxu0 0
    %1444 = vmatmul.mubr.bf16.gmra.mrb[0].mxu0 %v1373
    %v1445 = vpop.f32.mrb[0].mxu0
    %v1446 = vadd.f32 0.0, %v1445
    %v1447 = vpop.f32.mrb[0].mxu0
    %v1448 = vpop.f32.mrb[0].mxu0
    %v1449 = vadd.f32 0.0, %v1448
    %v1450 = vpop.f32.mrb[0].mxu0
    %1451 = vdwg.mxu0
    %v1452 = vmul.f32 %v1422, %v19
    %v1453 = vmul.f32 %v1425, %v20
    %v1454 = vmul.f32 %v1430, %v21
    %v1455 = vmul.f32 %v1433, %v22
    %v1456 = vmul.f32 %v1438, %v23
    %v1457 = vmul.f32 %v1441, %v24
    %v1458 = vmul.f32 %v1446, %v25
    %v1459 = vmul.f32 %v1449, %v26
    %v1460 = vadd.f32 %v1452, %v28
    %v1461 = vadd.f32 %v1453, %v29
    %v1462 = vadd.f32 %v1454, %v30
    %v1463 = vadd.f32 %v1455, %v31
    %v1464 = vadd.f32 %v1456, %v32
    %v1465 = vadd.f32 %v1457, %v33
    %v1466 = vadd.f32 %v1458, %v34
    %v1467 = vadd.f32 %v1459, %v35
    %v1468 = vsel %vm497, %v1460, -inf
    %1469 = vmax.xlane.f32.xlu0 %v1468
    %v1470 = vpop.xlane.xlu0 %1469
    %v1471 = vsel %vm497, %v1461, -inf
    %1472 = vmax.xlane.f32.xlu0 %v1471
    %v1473 = vpop.xlane.xlu0 %1472
    %v1474 = vsel %vm497, %v1462, -inf
    %1475 = vmax.xlane.f32.xlu0 %v1474
    %v1476 = vpop.xlane.xlu0 %1475
    %v1477 = vsel %vm497, %v1463, -inf
    %1478 = vmax.xlane.f32.xlu0 %v1477
    %v1479 = vpop.xlane.xlu0 %1478
    %v1480 = vsel %vm497, %v1464, -inf
    %1481 = vmax.xlane.f32.xlu0 %v1480
    %v1482 = vpop.xlane.xlu0 %1481
    %v1483 = vsel %vm497, %v1465, -inf
    %1484 = vmax.xlane.f32.xlu0 %v1483
    %v1485 = vpop.xlane.xlu0 %1484
    %v1486 = vsel %vm497, %v1466, -inf
    %1487 = vmax.xlane.f32.xlu0 %v1486
    %v1488 = vpop.xlane.xlu0 %1487
    %v1489 = vsel %vm497, %v1467, -inf
    %1490 = vmax.xlane.f32.xlu0 %v1489
    %v1491 = vpop.xlane.xlu0 %1490
    %v1492 = vsub.f32 %v1460, %v1470
    %v1493 = vsub.f32 %v1461, %v1473
    %v1494 = vsub.f32 %v1462, %v1476
    %v1495 = vsub.f32 %v1463, %v1479
    %v1496 = vsub.f32 %v1464, %v1482
    %v1497 = vsub.f32 %v1465, %v1485
    %v1498 = vsub.f32 %v1466, %v1488
    %v1499 = vsub.f32 %v1467, %v1491
    %v1500 = vmul.f32 %v1492, 1.442695
    %v1501 = vpow.pop %v1500
    %v1502 = vmul.f32 %v1493, 1.442695
    %v1503 = vpow.pop %v1502
    %v1504 = vmul.f32 %v1494, 1.442695
    %v1505 = vpow.pop %v1504
    %v1506 = vmul.f32 %v1495, 1.442695
    %v1507 = vpow.pop %v1506
    %v1508 = vmul.f32 %v1496, 1.442695
    %v1509 = vpow.pop %v1508
    %v1510 = vmul.f32 %v1497, 1.442695
    %v1511 = vpow.pop %v1510
    %v1512 = vmul.f32 %v1498, 1.442695
    %v1513 = vpow.pop %v1512
    %v1514 = vmul.f32 %v1499, 1.442695
    %v1515 = vpow.pop %v1514
    %v1516 = vsel %vm497, %v1501, 0.0
    %1517 = vadd.xlane.f32.xlu0 %v1516
    %v1518 = vpop.xlane.xlu0 %1517
    %v1519 = vsel %vm497, %v1503, 0.0
    %1520 = vadd.xlane.f32.xlu0 %v1519
    %v1521 = vpop.xlane.xlu0 %1520
    %v1522 = vsel %vm497, %v1505, 0.0
    %1523 = vadd.xlane.f32.xlu0 %v1522
    %v1524 = vpop.xlane.xlu0 %1523
    %v1525 = vsel %vm497, %v1507, 0.0
    %1526 = vadd.xlane.f32.xlu0 %v1525
    %v1527 = vpop.xlane.xlu0 %1526
    %v1528 = vsel %vm497, %v1509, 0.0
    %1529 = vadd.xlane.f32.xlu0 %v1528
    %v1530 = vpop.xlane.xlu0 %1529
    %v1531 = vsel %vm497, %v1511, 0.0
    %1532 = vadd.xlane.f32.xlu0 %v1531
    %v1533 = vpop.xlane.xlu0 %1532
    %v1534 = vsel %vm497, %v1513, 0.0
    %1535 = vadd.xlane.f32.xlu0 %v1534
    %v1536 = vpop.xlane.xlu0 %1535
    %v1537 = vsel %vm497, %v1515, 0.0
    %1538 = vadd.xlane.f32.xlu0 %v1537
    %v1539 = vpop.xlane.xlu0 %1538
    %v1540 = vrcp.pop %v1518
    %v1541 = vrcp.pop %v1521
    %v1542 = vrcp.pop %v1524
    %v1543 = vrcp.pop %v1527
    %v1544 = vrcp.pop %v1530
    %v1545 = vrcp.pop %v1533
    %v1546 = vrcp.pop %v1536
    %v1547 = vrcp.pop %v1539
    %v1548 = vmul.f32 %v1501, %v1540
    %v1549 = vmul.f32 %v1503, %v1541
    %v1550 = vmul.f32 %v1505, %v1542
    %v1551 = vmul.f32 %v1507, %v1543
    %v1552 = vmul.f32 %v1509, %v1544
    %v1553 = vmul.f32 %v1511, %v1545
    %v1554 = vmul.f32 %v1513, %v1546
    %v1555 = vmul.f32 %v1515, %v1547
    %v1556 = vpack.c.bf16 %v1549, %v1548
    %v1557 = vpack.c.bf16 %v1551, %v1550
    %v1558 = vpack.c.bf16 %v1553, %v1552
    %v1559 = vpack.c.bf16 %v1555, %v1554
    %v1561 = vsel %vm497, %v1556, 0
    %v1564 = vsel %vm497, %v1557, 0
    %v1567 = vsel %vm497, %v1558, 0
    %v1570 = vsel %vm497, %v1559, 0
    %1572 = vmatprep.subr.bf16.mxu0 0
    %1573 = vmatpush1.bf16.msra.mxu0 %v1359
    %1574 = vmatprep.subr.bf16.mxu0 0
    %1575 = vmatpush1.bf16.msra.mxu0 %v1360
    %1576 = vmatprep.subr.bf16.mxu0 0
    %1577 = vmatpush1.bf16.msra.mxu0 %v1361
    %1578 = vmatprep.subr.bf16.mxu0 0
    %1579 = vmatpush1.bf16.msra.mxu0 %v1362
    %1580 = vmatprep.subr.bf16.mxu0 0
    %1581 = vmatpush1.bf16.msra.mxu0 0
    %1582 = vmatprep.subr.bf16.mxu0 0
    %1583 = vmatpush1.bf16.msra.mxu0 0
    %1584 = vmatprep.subr.bf16.mxu0 0
    %1585 = vmatpush1.bf16.msra.mxu0 0
    %1586 = vmatprep.subr.bf16.mxu0 0
    %1587 = vmatpush1.bf16.msra.mxu0 0
    %1588 = vmatprep.subr.bf16.mxu0 0
    %1589 = vmatpush1.bf16.msra.mxu0 0
    %1590 = vmatprep.subr.bf16.mxu0 0
    %1591 = vmatpush1.bf16.msra.mxu0 0
    %1592 = vmatprep.subr.bf16.mxu0 0
    %1593 = vmatpush1.bf16.msra.mxu0 0
    %1594 = vmatprep.subr.bf16.mxu0 0
    %1595 = vmatpush1.bf16.msra.mxu0 0
    %1596 = vmatprep.subr.bf16.mxu0 0
    %1597 = vmatpush1.bf16.msra.mxu0 0
    %1598 = vmatprep.subr.bf16.mxu0 0
    %1599 = vmatpush1.bf16.msra.mxu0 0
    %1600 = vmatprep.subr.bf16.mxu0 0
    %1601 = vmatpush1.bf16.msra.mxu0 0
    %1602 = vmatprep.subr.bf16.mxu0 0
    %1603 = vmatpush1.bf16.msra.mxu0 0
    %1604 = vmatprep.mubr.bf16.mxu0 0
    %1605 = vmatmul.mubr.bf16.gmra.mrb[0].mxu0 %v1561
    %v1606 = vpop.f32.mrb[0].mxu0
    %v1607 = vadd.f32 0.0, %v1606
    %v1608 = vpop.f32.mrb[0].mxu0
    %v1609 = vpop.f32.mrb[0].mxu0
    %v1610 = vadd.f32 0.0, %v1609
    %v1611 = vpop.f32.mrb[0].mxu0
    %1612 = vmatprep.mubr.bf16.mxu0 0
    %1613 = vmatmul.mubr.bf16.gmra.mrb[0].mxu0 %v1564
    %v1614 = vpop.f32.mrb[0].mxu0
    %v1615 = vadd.f32 0.0, %v1614
    %v1616 = vpop.f32.mrb[0].mxu0
    %v1617 = vpop.f32.mrb[0].mxu0
    %v1618 = vadd.f32 0.0, %v1617
    %v1619 = vpop.f32.mrb[0].mxu0
    %1620 = vmatprep.mubr.bf16.mxu0 0
    %1621 = vmatmul.mubr.bf16.gmra.mrb[0].mxu0 %v1567
    %v1622 = vpop.f32.mrb[0].mxu0
    %v1623 = vadd.f32 0.0, %v1622
    %v1624 = vpop.f32.mrb[0].mxu0
    %v1625 = vpop.f32.mrb[0].mxu0
    %v1626 = vadd.f32 0.0, %v1625
    %v1627 = vpop.f32.mrb[0].mxu0
    %1628 = vmatprep.mubr.bf16.mxu0 0
    %1629 = vmatmul.mubr.bf16.gmra.mrb[0].mxu0 %v1570
    %v1630 = vpop.f32.mrb[0].mxu0
    %v1631 = vadd.f32 0.0, %v1630
    %v1632 = vpop.f32.mrb[0].mxu0
    %v1633 = vpop.f32.mrb[0].mxu0
    %v1634 = vadd.f32 0.0, %v1633
    %v1635 = vpop.f32.mrb[0].mxu0
    %1636 = vdwg.mxu0
    %1637 = vst.msk [vmem:[#allocation5] sm:$0xff] %vm263, %v1607
    %1638 = vst.msk [vmem:[#allocation5 + $0x8] sm:$0xff] %vm263, %v1610
    %1641 = vrot.lane.b32.xlu0 %v1615, 8
    %v1642 = vpop.permute.xlu0 %1641
    %1643 = vrot.lane.b32.xlu0 %v1618, 8
    %v1644 = vpop.permute.xlu0 %1643
    %1647 = vst.msk [vmem:[#allocation5] sm:$0xff] %vm677, %v1642
    %1648 = vst.msk [vmem:[#allocation5 + $0x8] sm:$0xff] %vm677, %v1644
    %1651 = vrot.lane.b32.xlu0 %v1623, 16
    %v1652 = vpop.permute.xlu0 %1651
    %1653 = vrot.lane.b32.xlu0 %v1626, 16
    %v1654 = vpop.permute.xlu0 %1653
    %1657 = vst.msk [vmem:[#allocation5] sm:$0xff] %vm688, %v1652
    %1658 = vst.msk [vmem:[#allocation5 + $0x8] sm:$0xff] %vm688, %v1654
    %1661 = vrot.lane.b32.xlu0 %v1631, 24
    %v1662 = vpop.permute.xlu0 %1661
    %1663 = vrot.lane.b32.xlu0 %v1634, 24
    %v1664 = vpop.permute.xlu0 %1663
    %1667 = vst.msk [vmem:[#allocation5] sm:$0xff] %vm699, %v1662
    %1668 = vst.msk [vmem:[#allocation5 + $0x8] sm:$0xff] %vm699, %v1664
    %v1669 = vld [vmem:[#allocation5] sm:$0xff]
    %v1670 = vld [vmem:[#allocation5 + $0x8] sm:$0xff]
    %v1671 = vpack.c.bf16 %v1670, %v1669
    %s1672 = scalar_lea.vmem %s2, 384
    %v1673 = vld [vmem:[%s1672] sm:$0xf]
    %v1674 = vld [vmem:[%s1672 + $0x4] sm:$0xf]
    %v1675 = vld [vmem:[%s1672 + $0x8] sm:$0xf]
    %v1676 = vld [vmem:[%s1672 + $0xc] sm:$0xf]
    %v1677 = vld [vmem:[%s1672 + $0x10] sm:$0xf]
    %v1678 = vld [vmem:[%s1672 + $0x14] sm:$0xf]
    %v1679 = vld [vmem:[%s1672 + $0x18] sm:$0xf]
    %v1680 = vld [vmem:[%s1672 + $0x1c] sm:$0xf]
    %v1681 = vld [vmem:[%s1672 + $0x20] sm:$0xf]
    %v1682 = vld [vmem:[%s1672 + $0x24] sm:$0xf]
    %v1683 = vld [vmem:[%s1672 + $0x28] sm:$0xf]
    %v1684 = vld [vmem:[%s1672 + $0x2c] sm:$0xf]
    %v1685 = vld [vmem:[%s1672 + $0x30] sm:$0xf]
    %v1686 = vld [vmem:[%s1672 + $0x34] sm:$0xf]
    %v1687 = vld [vmem:[%s1672 + $0x38] sm:$0xf]
    %v1688 = vld [vmem:[%s1672 + $0x3c] sm:$0xf]
    %v1689 = vld [vmem:[%s3 + $0xa] sm:$0x1]
    %v1690 = vlaneseq
    %v1691 = vshrl.u32 %v1690, 7
    %v1692 = vsub.s32 0, %v1691
    %v1693 = vrot.slane %v1689, %v1692
    %v1710 = vunpack.c.l.b16 %v1673
    %v1711 = vunpack.c.l.b16 %v1674
    %v1712 = vunpack.c.l.b16 %v1675
    %v1713 = vunpack.c.l.b16 %v1676
    %v1714 = vunpack.c.l.b16 %v1677
    %v1715 = vunpack.c.l.b16 %v1678
    %v1716 = vunpack.c.l.b16 %v1679
    %v1717 = vunpack.c.l.b16 %v1680
    %v1718 = vunpack.c.l.b16 %v1681
    %v1719 = vunpack.c.l.b16 %v1682
    %v1720 = vunpack.c.l.b16 %v1683
    %v1721 = vunpack.c.l.b16 %v1684
    %v1722 = vunpack.c.l.b16 %v1685
    %v1723 = vunpack.c.l.b16 %v1686
    %v1724 = vunpack.c.l.b16 %v1687
    %v1725 = vunpack.c.l.b16 %v1688
    %v1726 = vpack.c.b16 %v1711, %v1710
    %v1727 = vpack.c.b16 %v1713, %v1712
    %v1728 = vpack.c.b16 %v1715, %v1714
    %v1729 = vpack.c.b16 %v1717, %v1716
    %v1730 = vpack.c.b16 %v1719, %v1718
    %v1731 = vpack.c.b16 %v1721, %v1720
    %v1732 = vpack.c.b16 %v1723, %v1722
    %v1733 = vpack.c.b16 %v1725, %v1724
    %1742 = vmatprep.subr.bf16.mxu0 0
    %1743 = vmatpush1.bf16.msra.mxu0 %v1726
    %1744 = vmatprep.subr.bf16.mxu0 0
    %1745 = vmatpush1.bf16.msra.mxu0 %v1727
    %1746 = vmatprep.subr.bf16.mxu0 0
    %1747 = vmatpush1.bf16.msra.mxu0 %v1728
    %1748 = vmatprep.subr.bf16.mxu0 0
    %1749 = vmatpush1.bf16.msra.mxu0 %v1729
    %1750 = vmatprep.subr.bf16.mxu0 0
    %1751 = vmatpush1.bf16.msra.mxu0 %v1730
    %1752 = vmatprep.subr.bf16.mxu0 0
    %1753 = vmatpush1.bf16.msra.mxu0 %v1731
    %1754 = vmatprep.subr.bf16.mxu0 0
    %1755 = vmatpush1.bf16.msra.mxu0 %v1732
    %1756 = vmatprep.subr.bf16.mxu0 0
    %1757 = vmatpush1.bf16.msra.mxu0 %v1733
    %1758 = vmatprep.subr.bf16.mxu0 0
    %1759 = vmatpush1.bf16.msra.mxu0 0
    %1760 = vmatprep.subr.bf16.mxu0 0
    %1761 = vmatpush1.bf16.msra.mxu0 0
    %1762 = vmatprep.subr.bf16.mxu0 0
    %1763 = vmatpush1.bf16.msra.mxu0 0
    %1764 = vmatprep.subr.bf16.mxu0 0
    %1765 = vmatpush1.bf16.msra.mxu0 0
    %1766 = vmatprep.subr.bf16.mxu0 0
    %1767 = vmatpush1.bf16.msra.mxu0 0
    %1768 = vmatprep.subr.bf16.mxu0 0
    %1769 = vmatpush1.bf16.msra.mxu0 0
    %1770 = vmatprep.subr.bf16.mxu0 0
    %1771 = vmatpush1.bf16.msra.mxu0 0
    %1772 = vmatprep.subr.bf16.mxu0 0
    %1773 = vmatpush1.bf16.msra.mxu0 0
    %1774 = vmatprep.mubr.bf16.mxu0 0
    %1775 = vmatmul.mubr.bf16.gmra.mrb[0].mxu0 %v1671
    %v1776 = vpop.f32.mrb[0].mxu0
    %v1777 = vadd.f32 %v1693, %v1776
    %v1778 = vpop.f32.mrb[0].mxu0
    %v1779 = vpop.f32.mrb[0].mxu0
    %v1780 = vadd.f32 %v1693, %v1779
    %v1781 = vpop.f32.mrb[0].mxu0
    %1782 = vdwg.mxu0
    %v1783 = vadd.f32 %v1777, %v1121
    %v1784 = vadd.f32 %v1780, %v1122
    %v1785 = vadd.f32 %v1783, %v1784
    %v1786 = vrot.slane %v1785, 4
    %v1787 = vadd.f32 %v1785, %v1786
    %v1788 = vrot.slane %v1787, 2
    %v1789 = vadd.f32 %v1787, %v1788
    %v1790 = vrot.slane %v1789, 1
    %v1791 = vadd.f32 %v1789, %v1790
    %v1792 = vmul.f32 %v1791, %v825
    %v1793 = vsub.f32 %v1783, %v1792
    %v1794 = vsub.f32 %v1784, %v1792
    %v1795 = vmul.f32 %v1793, %v1793
    %v1796 = vmul.f32 %v1794, %v1794
    %v1797 = vadd.f32 %v1795, %v1796
    %v1798 = vrot.slane %v1797, 4
    %v1799 = vadd.f32 %v1797, %v1798
    %v1800 = vrot.slane %v1799, 2
    %v1801 = vadd.f32 %v1799, %v1800
    %v1802 = vrot.slane %v1801, 1
    %v1803 = vadd.f32 %v1801, %v1802
    %v1804 = vmul.f32 %v1803, %v825
    %v1805 = vadd.f32 %v1804, 1e-05
    %v1806 = vrsqrt.pop %v1805
    %v1807 = vmul.f32 %v1793, %v1806
    %v1808 = vmul.f32 %v1794, %v1806
    %v1809 = vld [vmem:[%s3 + $0xb] sm:$0x1]
    %v1810 = vlaneseq
    %v1811 = vshrl.u32 %v1810, 7
    %v1812 = vsub.s32 0, %v1811
    %v1813 = vrot.slane %v1809, %v1812
    %v1814 = vmul.f32 %v1807, %v1813
    %v1815 = vmul.f32 %v1808, %v1813
    %v1816 = vld [vmem:[%s3 + $0xc] sm:$0x1]
    %v1817 = vlaneseq
    %v1818 = vshrl.u32 %v1817, 7
    %v1819 = vsub.s32 0, %v1818
    %v1820 = vrot.slane %v1816, %v1819
    %v1821 = vadd.f32 %v1814, %v1820
    %v1822 = vadd.f32 %v1815, %v1820
    %v1823 = vpack.c.bf16 %v1822, %v1821
    %s1824 = scalar_lea.vmem %s2, 448
    %v1825 = vld [vmem:[%s1824] sm:$0xf]
    %v1826 = vld [vmem:[%s1824 + $0x4] sm:$0xf]
    %v1827 = vld [vmem:[%s1824 + $0x8] sm:$0xf]
    %v1828 = vld [vmem:[%s1824 + $0xc] sm:$0xf]
    %v1829 = vld [vmem:[%s1824 + $0x10] sm:$0xf]
    %v1830 = vld [vmem:[%s1824 + $0x14] sm:$0xf]
    %v1831 = vld [vmem:[%s1824 + $0x18] sm:$0xf]
    %v1832 = vld [vmem:[%s1824 + $0x1c] sm:$0xf]
    %v1833 = vld [vmem:[%s1824 + $0x20] sm:$0xf]
    %v1834 = vld [vmem:[%s1824 + $0x24] sm:$0xf]
    %v1835 = vld [vmem:[%s1824 + $0x28] sm:$0xf]
    %v1836 = vld [vmem:[%s1824 + $0x2c] sm:$0xf]
    %v1837 = vld [vmem:[%s1824 + $0x30] sm:$0xf]
    %v1838 = vld [vmem:[%s1824 + $0x34] sm:$0xf]
    %v1839 = vld [vmem:[%s1824 + $0x38] sm:$0xf]
    %v1840 = vld [vmem:[%s1824 + $0x3c] sm:$0xf]
    %v1841 = vld [vmem:[%s3 + $0xd] sm:$0x1]
    %v1842 = vlaneseq
    %v1843 = vshrl.u32 %v1842, 7
    %v1844 = vsub.s32 0, %v1843
    %v1845 = vrot.slane %v1841, %v1844
    %v1862 = vunpack.c.l.b16 %v1825
    %v1863 = vunpack.c.l.b16 %v1826
    %v1864 = vunpack.c.l.b16 %v1827
    %v1865 = vunpack.c.l.b16 %v1828
    %v1866 = vunpack.c.l.b16 %v1829
    %v1867 = vunpack.c.l.b16 %v1830
    %v1868 = vunpack.c.l.b16 %v1831
    %v1869 = vunpack.c.l.b16 %v1832
    %v1870 = vunpack.c.l.b16 %v1833
    %v1871 = vunpack.c.l.b16 %v1834
    %v1872 = vunpack.c.l.b16 %v1835
    %v1873 = vunpack.c.l.b16 %v1836
    %v1874 = vunpack.c.l.b16 %v1837
    %v1875 = vunpack.c.l.b16 %v1838
    %v1876 = vunpack.c.l.b16 %v1839
    %v1877 = vunpack.c.l.b16 %v1840
    %v1878 = vpack.c.b16 %v1863, %v1862
    %v1879 = vpack.c.b16 %v1865, %v1864
    %v1880 = vpack.c.b16 %v1867, %v1866
    %v1881 = vpack.c.b16 %v1869, %v1868
    %v1882 = vpack.c.b16 %v1871, %v1870
    %v1883 = vpack.c.b16 %v1873, %v1872
    %v1884 = vpack.c.b16 %v1875, %v1874
    %v1885 = vpack.c.b16 %v1877, %v1876
    %1894 = vmatprep.subr.bf16.mxu0 0
    %1895 = vmatpush1.bf16.msra.mxu0 %v1878
    %1896 = vmatprep.subr.bf16.mxu0 0
    %1897 = vmatpush1.bf16.msra.mxu0 %v1879
    %1898 = vmatprep.subr.bf16.mxu0 0
    %1899 = vmatpush1.bf16.msra.mxu0 %v1880
    %1900 = vmatprep.subr.bf16.mxu0 0
    %1901 = vmatpush1.bf16.msra.mxu0 %v1881
    %1902 = vmatprep.subr.bf16.mxu0 0
    %1903 = vmatpush1.bf16.msra.mxu0 %v1882
    %1904 = vmatprep.subr.bf16.mxu0 0
    %1905 = vmatpush1.bf16.msra.mxu0 %v1883
    %1906 = vmatprep.subr.bf16.mxu0 0
    %1907 = vmatpush1.bf16.msra.mxu0 %v1884
    %1908 = vmatprep.subr.bf16.mxu0 0
    %1909 = vmatpush1.bf16.msra.mxu0 %v1885
    %1910 = vmatprep.subr.bf16.mxu0 0
    %1911 = vmatpush1.bf16.msra.mxu0 0
    %1912 = vmatprep.subr.bf16.mxu0 0
    %1913 = vmatpush1.bf16.msra.mxu0 0
    %1914 = vmatprep.subr.bf16.mxu0 0
    %1915 = vmatpush1.bf16.msra.mxu0 0
    %1916 = vmatprep.subr.bf16.mxu0 0
    %1917 = vmatpush1.bf16.msra.mxu0 0
    %1918 = vmatprep.subr.bf16.mxu0 0
    %1919 = vmatpush1.bf16.msra.mxu0 0
    %1920 = vmatprep.subr.bf16.mxu0 0
    %1921 = vmatpush1.bf16.msra.mxu0 0
    %1922 = vmatprep.subr.bf16.mxu0 0
    %1923 = vmatpush1.bf16.msra.mxu0 0
    %1924 = vmatprep.subr.bf16.mxu0 0
    %1925 = vmatpush1.bf16.msra.mxu0 0
    %1926 = vmatprep.mubr.bf16.mxu0 0
    %1927 = vmatmul.mubr.bf16.gmra.mrb[0].mxu0 %v1823
    %v1928 = vpop.f32.mrb[0].mxu0
    %v1929 = vadd.f32 %v1845, %v1928
    %v1930 = vpop.f32.mrb[0].mxu0
    %v1931 = vpop.f32.mrb[0].mxu0
    %v1932 = vadd.f32 %v1845, %v1931
    %v1933 = vpop.f32.mrb[0].mxu0
    %1934 = vdwg.mxu0
    %v1935 = vmax.f32 %v1929, 0.0
    %v1936 = vmax.f32 %v1932, 0.0
    %v1937 = vpack.c.bf16 %v1936, %v1935
    %s1938 = scalar_lea.vmem %s2, 512
    %v1939 = vld [vmem:[%s1938] sm:$0xf]
    %v1940 = vld [vmem:[%s1938 + $0x4] sm:$0xf]
    %v1941 = vld [vmem:[%s1938 + $0x8] sm:$0xf]
    %v1942 = vld [vmem:[%s1938 + $0xc] sm:$0xf]
    %v1943 = vld [vmem:[%s1938 + $0x10] sm:$0xf]
    %v1944 = vld [vmem:[%s1938 + $0x14] sm:$0xf]
    %v1945 = vld [vmem:[%s1938 + $0x18] sm:$0xf]
    %v1946 = vld [vmem:[%s1938 + $0x1c] sm:$0xf]
    %v1947 = vld [vmem:[%s1938 + $0x20] sm:$0xf]
    %v1948 = vld [vmem:[%s1938 + $0x24] sm:$0xf]
    %v1949 = vld [vmem:[%s1938 + $0x28] sm:$0xf]
    %v1950 = vld [vmem:[%s1938 + $0x2c] sm:$0xf]
    %v1951 = vld [vmem:[%s1938 + $0x30] sm:$0xf]
    %v1952 = vld [vmem:[%s1938 + $0x34] sm:$0xf]
    %v1953 = vld [vmem:[%s1938 + $0x38] sm:$0xf]
    %v1954 = vld [vmem:[%s1938 + $0x3c] sm:$0xf]
    %v1955 = vld [vmem:[%s3 + $0xe] sm:$0x1]
    %v1956 = vlaneseq
    %v1957 = vshrl.u32 %v1956, 7
    %v1958 = vsub.s32 0, %v1957
    %v1959 = vrot.slane %v1955, %v1958
    %v1976 = vunpack.c.l.b16 %v1939
    %v1977 = vunpack.c.l.b16 %v1940
    %v1978 = vunpack.c.l.b16 %v1941
    %v1979 = vunpack.c.l.b16 %v1942
    %v1980 = vunpack.c.l.b16 %v1943
    %v1981 = vunpack.c.l.b16 %v1944
    %v1982 = vunpack.c.l.b16 %v1945
    %v1983 = vunpack.c.l.b16 %v1946
    %v1984 = vunpack.c.l.b16 %v1947
    %v1985 = vunpack.c.l.b16 %v1948
    %v1986 = vunpack.c.l.b16 %v1949
    %v1987 = vunpack.c.l.b16 %v1950
    %v1988 = vunpack.c.l.b16 %v1951
    %v1989 = vunpack.c.l.b16 %v1952
    %v1990 = vunpack.c.l.b16 %v1953
    %v1991 = vunpack.c.l.b16 %v1954
    %v1992 = vpack.c.b16 %v1977, %v1976
    %v1993 = vpack.c.b16 %v1979, %v1978
    %v1994 = vpack.c.b16 %v1981, %v1980
    %v1995 = vpack.c.b16 %v1983, %v1982
    %v1996 = vpack.c.b16 %v1985, %v1984
    %v1997 = vpack.c.b16 %v1987, %v1986
    %v1998 = vpack.c.b16 %v1989, %v1988
    %v1999 = vpack.c.b16 %v1991, %v1990
    %2008 = vmatprep.subr.bf16.mxu0 0
    %2009 = vmatpush1.bf16.msra.mxu0 %v1992
    %2010 = vmatprep.subr.bf16.mxu0 0
    %2011 = vmatpush1.bf16.msra.mxu0 %v1993
    %2012 = vmatprep.subr.bf16.mxu0 0
    %2013 = vmatpush1.bf16.msra.mxu0 %v1994
    %2014 = vmatprep.subr.bf16.mxu0 0
    %2015 = vmatpush1.bf16.msra.mxu0 %v1995
    %2016 = vmatprep.subr.bf16.mxu0 0
    %2017 = vmatpush1.bf16.msra.mxu0 %v1996
    %2018 = vmatprep.subr.bf16.mxu0 0
    %2019 = vmatpush1.bf16.msra.mxu0 %v1997
    %2020 = vmatprep.subr.bf16.mxu0 0
    %2021 = vmatpush1.bf16.msra.mxu0 %v1998
    %2022 = vmatprep.subr.bf16.mxu0 0
    %2023 = vmatpush1.bf16.msra.mxu0 %v1999
    %2024 = vmatprep.subr.bf16.mxu0 0
    %2025 = vmatpush1.bf16.msra.mxu0 0
    %2026 = vmatprep.subr.bf16.mxu0 0
    %2027 = vmatpush1.bf16.msra.mxu0 0
    %2028 = vmatprep.subr.bf16.mxu0 0
    %2029 = vmatpush1.bf16.msra.mxu0 0
    %2030 = vmatprep.subr.bf16.mxu0 0
    %2031 = vmatpush1.bf16.msra.mxu0 0
    %2032 = vmatprep.subr.bf16.mxu0 0
    %2033 = vmatpush1.bf16.msra.mxu0 0
    %2034 = vmatprep.subr.bf16.mxu0 0
    %2035 = vmatpush1.bf16.msra.mxu0 0
    %2036 = vmatprep.subr.bf16.mxu0 0
    %2037 = vmatpush1.bf16.msra.mxu0 0
    %2038 = vmatprep.subr.bf16.mxu0 0
    %2039 = vmatpush1.bf16.msra.mxu0 0
    %2040 = vmatprep.mubr.bf16.mxu0 0
    %2041 = vmatmul.mubr.bf16.gmra.mrb[0].mxu0 %v1937
    %v2042 = vpop.f32.mrb[0].mxu0
    %v2043 = vadd.f32 %v1959, %v2042
    %v2044 = vpop.f32.mrb[0].mxu0
    %v2045 = vpop.f32.mrb[0].mxu0
    %v2046 = vadd.f32 %v1959, %v2045
    %v2047 = vpop.f32.mrb[0].mxu0
    %2048 = vdwg.mxu0
    %v2049 = vadd.f32 %v1821, %v2043
    %v2050 = vadd.f32 %v1822, %v2046
    %v2051 = vadd.f32 %v2049, %v2050
    %v2052 = vrot.slane %v2051, 4
    %v2053 = vadd.f32 %v2051, %v2052
    %v2054 = vrot.slane %v2053, 2
    %v2055 = vadd.f32 %v2053, %v2054
    %v2056 = vrot.slane %v2055, 1
    %v2057 = vadd.f32 %v2055, %v2056
    %v2058 = vmul.f32 %v2057, %v825
    %v2059 = vsub.f32 %v2049, %v2058
    %v2060 = vsub.f32 %v2050, %v2058
    %v2061 = vmul.f32 %v2059, %v2059
    %v2062 = vmul.f32 %v2060, %v2060
    %v2063 = vadd.f32 %v2061, %v2062
    %v2064 = vrot.slane %v2063, 4
    %v2065 = vadd.f32 %v2063, %v2064
    %v2066 = vrot.slane %v2065, 2
    %v2067 = vadd.f32 %v2065, %v2066
    %v2068 = vrot.slane %v2067, 1
    %v2069 = vadd.f32 %v2067, %v2068
    %v2070 = vmul.f32 %v2069, %v825
    %v2071 = vadd.f32 %v2070, 1e-05
    %v2072 = vrsqrt.pop %v2071
    %v2073 = vmul.f32 %v2059, %v2072
    %v2074 = vmul.f32 %v2060, %v2072
    %v2075 = vld [vmem:[%s3 + $0xf] sm:$0x1]
    %v2076 = vlaneseq
    %v2077 = vshrl.u32 %v2076, 7
    %v2078 = vsub.s32 0, %v2077
    %v2079 = vrot.slane %v2075, %v2078
    %v2080 = vmul.f32 %v2073, %v2079
    %v2081 = vmul.f32 %v2074, %v2079
    %v2082 = vld [vmem:[%s3 + $0x10] sm:$0x1]
    %v2083 = vlaneseq
    %v2084 = vshrl.u32 %v2083, 7
    %v2085 = vsub.s32 0, %v2084
    %v2086 = vrot.slane %v2082, %v2085
    %v2087 = vadd.f32 %v2080, %v2086
    %v2088 = vadd.f32 %v2081, %v2086
    %v2089 = vrot.slane %v2087, 4
    %v2090 = vadd.f32 %v2087, %v2089
    %v2091 = vrot.slane %v2090, 2
    %v2092 = vadd.f32 %v2090, %v2091
    %v2093 = vrot.slane %v2092, 1
    %v2094 = vadd.f32 %v2092, %v2093
    %v2095 = vpack.c.bf16 %v2094, %v2094
    %s2096 = scalar_lea.vmem %s2, 576
    %v2097 = vld [vmem:[%s2096] sm:$0xf]
    %v2098 = vld [vmem:[%s2096 + $0x4] sm:$0xf]
    %v2099 = vld [vmem:[%s2096 + $0x8] sm:$0xf]
    %v2100 = vld [vmem:[%s2096 + $0xc] sm:$0xf]
    %v2101 = vld [vmem:[%s2096 + $0x10] sm:$0xf]
    %v2102 = vld [vmem:[%s2096 + $0x14] sm:$0xf]
    %v2103 = vld [vmem:[%s2096 + $0x18] sm:$0xf]
    %v2104 = vld [vmem:[%s2096 + $0x1c] sm:$0xf]
    %v2105 = vld [vmem:[%s2096 + $0x20] sm:$0xf]
    %v2106 = vld [vmem:[%s2096 + $0x24] sm:$0xf]
    %v2107 = vld [vmem:[%s2096 + $0x28] sm:$0xf]
    %v2108 = vld [vmem:[%s2096 + $0x2c] sm:$0xf]
    %v2109 = vld [vmem:[%s2096 + $0x30] sm:$0xf]
    %v2110 = vld [vmem:[%s2096 + $0x34] sm:$0xf]
    %v2111 = vld [vmem:[%s2096 + $0x38] sm:$0xf]
    %v2112 = vld [vmem:[%s2096 + $0x3c] sm:$0xf]
    %v2113 = vld [vmem:[%s3 + $0x11] sm:$0x1]
    %v2130 = vunpack.c.l.b16 %v2097
    %v2131 = vunpack.c.l.b16 %v2098
    %v2132 = vunpack.c.l.b16 %v2099
    %v2133 = vunpack.c.l.b16 %v2100
    %v2134 = vunpack.c.l.b16 %v2101
    %v2135 = vunpack.c.l.b16 %v2102
    %v2136 = vunpack.c.l.b16 %v2103
    %v2137 = vunpack.c.l.b16 %v2104
    %v2138 = vunpack.c.l.b16 %v2105
    %v2139 = vunpack.c.l.b16 %v2106
    %v2140 = vunpack.c.l.b16 %v2107
    %v2141 = vunpack.c.l.b16 %v2108
    %v2142 = vunpack.c.l.b16 %v2109
    %v2143 = vunpack.c.l.b16 %v2110
    %v2144 = vunpack.c.l.b16 %v2111
    %v2145 = vunpack.c.l.b16 %v2112
    %v2146 = vpack.c.b16 %v2131, %v2130
    %v2147 = vpack.c.b16 %v2133, %v2132
    %v2148 = vpack.c.b16 %v2135, %v2134
    %v2149 = vpack.c.b16 %v2137, %v2136
    %v2150 = vpack.c.b16 %v2139, %v2138
    %v2151 = vpack.c.b16 %v2141, %v2140
    %v2152 = vpack.c.b16 %v2143, %v2142
    %v2153 = vpack.c.b16 %v2145, %v2144
    %2162 = vmatprep.subr.bf16.mxu0 0
    %2163 = vmatpush1.bf16.msra.mxu0 %v2146
    %2164 = vmatprep.subr.bf16.mxu0 0
    %2165 = vmatpush1.bf16.msra.mxu0 %v2147
    %2166 = vmatprep.subr.bf16.mxu0 0
    %2167 = vmatpush1.bf16.msra.mxu0 %v2148
    %2168 = vmatprep.subr.bf16.mxu0 0
    %2169 = vmatpush1.bf16.msra.mxu0 %v2149
    %2170 = vmatprep.subr.bf16.mxu0 0
    %2171 = vmatpush1.bf16.msra.mxu0 %v2150
    %2172 = vmatprep.subr.bf16.mxu0 0
    %2173 = vmatpush1.bf16.msra.mxu0 %v2151
    %2174 = vmatprep.subr.bf16.mxu0 0
    %2175 = vmatpush1.bf16.msra.mxu0 %v2152
    %2176 = vmatprep.subr.bf16.mxu0 0
    %2177 = vmatpush1.bf16.msra.mxu0 %v2153
    %2178 = vmatprep.subr.bf16.mxu0 0
    %2179 = vmatpush1.bf16.msra.mxu0 0
    %2180 = vmatprep.subr.bf16.mxu0 0
    %2181 = vmatpush1.bf16.msra.mxu0 0
    %2182 = vmatprep.subr.bf16.mxu0 0
    %2183 = vmatpush1.bf16.msra.mxu0 0
    %2184 = vmatprep.subr.bf16.mxu0 0
    %2185 = vmatpush1.bf16.msra.mxu0 0
    %2186 = vmatprep.subr.bf16.mxu0 0
    %2187 = vmatpush1.bf16.msra.mxu0 0
    %2188 = vmatprep.subr.bf16.mxu0 0
    %2189 = vmatpush1.bf16.msra.mxu0 0
    %2190 = vmatprep.subr.bf16.mxu0 0
    %2191 = vmatpush1.bf16.msra.mxu0 0
    %2192 = vmatprep.subr.bf16.mxu0 0
    %2193 = vmatpush1.bf16.msra.mxu0 0
    %2194 = vmatprep.mubr.bf16.mxu0 0
    %2195 = vmatmul.mubr.bf16.gmra.mrb[0].mxu0 %v2095
    %v2196 = vpop.f32.mrb[0].mxu0
    %v2197 = vadd.f32 %v2113, %v2196
    %v2198 = vpop.f32.mrb[0].mxu0
    %v2199 = vpop.f32.mrb[0].mxu0
    %v2200 = vpop.f32.mrb[0].mxu0
    %2201 = vdwg.mxu0
    %v2202 = vmax.f32 %v2197, 0.0
    %v2203 = vpack.c.bf16 %v2202, %v2202
    %s2204 = scalar_lea.vmem %s2, 640
    %v2205 = vld [vmem:[%s2204] sm:$0xf]
    %v2206 = vld [vmem:[%s2204 + $0x4] sm:$0xf]
    %v2207 = vld [vmem:[%s2204 + $0x8] sm:$0xf]
    %v2208 = vld [vmem:[%s2204 + $0xc] sm:$0xf]
    %v2209 = vld [vmem:[%s2204 + $0x10] sm:$0xf]
    %v2210 = vld [vmem:[%s2204 + $0x14] sm:$0xf]
    %v2211 = vld [vmem:[%s2204 + $0x18] sm:$0xf]
    %v2212 = vld [vmem:[%s2204 + $0x1c] sm:$0xf]
    %v2213 = vld [vmem:[%s2204 + $0x20] sm:$0xf]
    %v2214 = vld [vmem:[%s2204 + $0x24] sm:$0xf]
    %v2215 = vld [vmem:[%s2204 + $0x28] sm:$0xf]
    %v2216 = vld [vmem:[%s2204 + $0x2c] sm:$0xf]
    %v2217 = vld [vmem:[%s2204 + $0x30] sm:$0xf]
    %v2218 = vld [vmem:[%s2204 + $0x34] sm:$0xf]
    %v2219 = vld [vmem:[%s2204 + $0x38] sm:$0xf]
    %v2220 = vld [vmem:[%s2204 + $0x3c] sm:$0xf]
    %v2221 = vld [vmem:[%s3 + $0x12] sm:$0x1]
    %v2238 = vunpack.c.l.b16 %v2205
    %v2239 = vunpack.c.l.b16 %v2206
    %v2240 = vunpack.c.l.b16 %v2207
    %v2241 = vunpack.c.l.b16 %v2208
    %v2242 = vunpack.c.l.b16 %v2209
    %v2243 = vunpack.c.l.b16 %v2210
    %v2244 = vunpack.c.l.b16 %v2211
    %v2245 = vunpack.c.l.b16 %v2212
    %v2246 = vunpack.c.l.b16 %v2213
    %v2247 = vunpack.c.l.b16 %v2214
    %v2248 = vunpack.c.l.b16 %v2215
    %v2249 = vunpack.c.l.b16 %v2216
    %v2250 = vunpack.c.l.b16 %v2217
    %v2251 = vunpack.c.l.b16 %v2218
    %v2252 = vunpack.c.l.b16 %v2219
    %v2253 = vunpack.c.l.b16 %v2220
    %v2254 = vpack.c.b16 %v2239, %v2238
    %v2255 = vpack.c.b16 %v2241, %v2240
    %v2256 = vpack.c.b16 %v2243, %v2242
    %v2257 = vpack.c.b16 %v2245, %v2244
    %v2258 = vpack.c.b16 %v2247, %v2246
    %v2259 = vpack.c.b16 %v2249, %v2248
    %v2260 = vpack.c.b16 %v2251, %v2250
    %v2261 = vpack.c.b16 %v2253, %v2252
    %2270 = vmatprep.subr.bf16.mxu0 0
    %2271 = vmatpush1.bf16.msra.mxu0 %v2254
    %2272 = vmatprep.subr.bf16.mxu0 0
    %2273 = vmatpush1.bf16.msra.mxu0 %v2255
    %2274 = vmatprep.subr.bf16.mxu0 0
    %2275 = vmatpush1.bf16.msra.mxu0 %v2256
    %2276 = vmatprep.subr.bf16.mxu0 0
    %2277 = vmatpush1.bf16.msra.mxu0 %v2257
    %2278 = vmatprep.subr.bf16.mxu0 0
    %2279 = vmatpush1.bf16.msra.mxu0 %v2258
    %2280 = vmatprep.subr.bf16.mxu0 0
    %2281 = vmatpush1.bf16.msra.mxu0 %v2259
    %2282 = vmatprep.subr.bf16.mxu0 0
    %2283 = vmatpush1.bf16.msra.mxu0 %v2260
    %2284 = vmatprep.subr.bf16.mxu0 0
    %2285 = vmatpush1.bf16.msra.mxu0 %v2261
    %2286 = vmatprep.subr.bf16.mxu0 0
    %2287 = vmatpush1.bf16.msra.mxu0 0
    %2288 = vmatprep.subr.bf16.mxu0 0
    %2289 = vmatpush1.bf16.msra.mxu0 0
    %2290 = vmatprep.subr.bf16.mxu0 0
    %2291 = vmatpush1.bf16.msra.mxu0 0
    %2292 = vmatprep.subr.bf16.mxu0 0
    %2293 = vmatpush1.bf16.msra.mxu0 0
    %2294 = vmatprep.subr.bf16.mxu0 0
    %2295 = vmatpush1.bf16.msra.mxu0 0
    %2296 = vmatprep.subr.bf16.mxu0 0
    %2297 = vmatpush1.bf16.msra.mxu0 0
    %2298 = vmatprep.subr.bf16.mxu0 0
    %2299 = vmatpush1.bf16.msra.mxu0 0
    %2300 = vmatprep.subr.bf16.mxu0 0
    %2301 = vmatpush1.bf16.msra.mxu0 0
    %2302 = vmatprep.mubr.bf16.mxu0 0
    %2303 = vmatmul.mubr.bf16.gmra.mrb[0].mxu0 %v2203
    %v2304 = vpop.f32.mrb[0].mxu0
    %v2305 = vadd.f32 %v2221, %v2304
    %v2306 = vpop.f32.mrb[0].mxu0
    %v2307 = vpop.f32.mrb[0].mxu0
    %v2308 = vpop.f32.mrb[0].mxu0
    %2309 = vdwg.mxu0
    %vm2310 = vcmask 24576
    %2311 = vst.msk [vmem:[#allocation6] sm:$0x1] %vm2310, %v2305
    %v2312 = vrot.slane %v2088, 4
    %v2313 = vadd.f32 %v2088, %v2312
    %v2314 = vrot.slane %v2313, 2
    %v2315 = vadd.f32 %v2313, %v2314
    %v2316 = vrot.slane %v2315, 1
    %v2317 = vadd.f32 %v2315, %v2316
    %v2318 = vpack.c.bf16 %v2317, %v2317
    %v2319 = vld [vmem:[%s2096] sm:$0xf]
    %v2320 = vld [vmem:[%s2096 + $0x4] sm:$0xf]
    %v2321 = vld [vmem:[%s2096 + $0x8] sm:$0xf]
    %v2322 = vld [vmem:[%s2096 + $0xc] sm:$0xf]
    %v2323 = vld [vmem:[%s2096 + $0x10] sm:$0xf]
    %v2324 = vld [vmem:[%s2096 + $0x14] sm:$0xf]
    %v2325 = vld [vmem:[%s2096 + $0x18] sm:$0xf]
    %v2326 = vld [vmem:[%s2096 + $0x1c] sm:$0xf]
    %v2327 = vld [vmem:[%s2096 + $0x20] sm:$0xf]
    %v2328 = vld [vmem:[%s2096 + $0x24] sm:$0xf]
    %v2329 = vld [vmem:[%s2096 + $0x28] sm:$0xf]
    %v2330 = vld [vmem:[%s2096 + $0x2c] sm:$0xf]
    %v2331 = vld [vmem:[%s2096 + $0x30] sm:$0xf]
    %v2332 = vld [vmem:[%s2096 + $0x34] sm:$0xf]
    %v2333 = vld [vmem:[%s2096 + $0x38] sm:$0xf]
    %v2334 = vld [vmem:[%s2096 + $0x3c] sm:$0xf]
    %v2335 = vld [vmem:[%s3 + $0x11] sm:$0x1]
    %v2352 = vunpack.c.l.b16 %v2319
    %v2353 = vunpack.c.l.b16 %v2320
    %v2354 = vunpack.c.l.b16 %v2321
    %v2355 = vunpack.c.l.b16 %v2322
    %v2356 = vunpack.c.l.b16 %v2323
    %v2357 = vunpack.c.l.b16 %v2324
    %v2358 = vunpack.c.l.b16 %v2325
    %v2359 = vunpack.c.l.b16 %v2326
    %v2360 = vunpack.c.l.b16 %v2327
    %v2361 = vunpack.c.l.b16 %v2328
    %v2362 = vunpack.c.l.b16 %v2329
    %v2363 = vunpack.c.l.b16 %v2330
    %v2364 = vunpack.c.l.b16 %v2331
    %v2365 = vunpack.c.l.b16 %v2332
    %v2366 = vunpack.c.l.b16 %v2333
    %v2367 = vunpack.c.l.b16 %v2334
    %v2368 = vpack.c.b16 %v2353, %v2352
    %v2369 = vpack.c.b16 %v2355, %v2354
    %v2370 = vpack.c.b16 %v2357, %v2356
    %v2371 = vpack.c.b16 %v2359, %v2358
    %v2372 = vpack.c.b16 %v2361, %v2360
    %v2373 = vpack.c.b16 %v2363, %v2362
    %v2374 = vpack.c.b16 %v2365, %v2364
    %v2375 = vpack.c.b16 %v2367, %v2366
    %2384 = vmatprep.subr.bf16.mxu0 0
    %2385 = vmatpush1.bf16.msra.mxu0 %v2368
    %2386 = vmatprep.subr.bf16.mxu0 0
    %2387 = vmatpush1.bf16.msra.mxu0 %v2369
    %2388 = vmatprep.subr.bf16.mxu0 0
    %2389 = vmatpush1.bf16.msra.mxu0 %v2370
    %2390 = vmatprep.subr.bf16.mxu0 0
    %2391 = vmatpush1.bf16.msra.mxu0 %v2371
    %2392 = vmatprep.subr.bf16.mxu0 0
    %2393 = vmatpush1.bf16.msra.mxu0 %v2372
    %2394 = vmatprep.subr.bf16.mxu0 0
    %2395 = vmatpush1.bf16.msra.mxu0 %v2373
    %2396 = vmatprep.subr.bf16.mxu0 0
    %2397 = vmatpush1.bf16.msra.mxu0 %v2374
    %2398 = vmatprep.subr.bf16.mxu0 0
    %2399 = vmatpush1.bf16.msra.mxu0 %v2375
    %2400 = vmatprep.subr.bf16.mxu0 0
    %2401 = vmatpush1.bf16.msra.mxu0 0
    %2402 = vmatprep.subr.bf16.mxu0 0
    %2403 = vmatpush1.bf16.msra.mxu0 0
    %2404 = vmatprep.subr.bf16.mxu0 0
    %2405 = vmatpush1.bf16.msra.mxu0 0
    %2406 = vmatprep.subr.bf16.mxu0 0
    %2407 = vmatpush1.bf16.msra.mxu0 0
    %2408 = vmatprep.subr.bf16.mxu0 0
    %2409 = vmatpush1.bf16.msra.mxu0 0
    %2410 = vmatprep.subr.bf16.mxu0 0
    %2411 = vmatpush1.bf16.msra.mxu0 0
    %2412 = vmatprep.subr.bf16.mxu0 0
    %2413 = vmatpush1.bf16.msra.mxu0 0
    %2414 = vmatprep.subr.bf16.mxu0 0
    %2415 = vmatpush1.bf16.msra.mxu0 0
    %2416 = vmatprep.mubr.bf16.mxu0 0
    %2417 = vmatmul.mubr.bf16.gmra.mrb[0].mxu0 %v2318
    %v2418 = vpop.f32.mrb[0].mxu0
    %v2419 = vadd.f32 %v2335, %v2418
    %v2420 = vpop.f32.mrb[0].mxu0
    %v2421 = vpop.f32.mrb[0].mxu0
    %v2422 = vpop.f32.mrb[0].mxu0
    %2423 = vdwg.mxu0
    %v2424 = vmax.f32 %v2419, 0.0
    %v2425 = vpack.c.bf16 %v2424, %v2424
    %v2426 = vld [vmem:[%s2204] sm:$0xf]
    %v2427 = vld [vmem:[%s2204 + $0x4] sm:$0xf]
    %v2428 = vld [vmem:[%s2204 + $0x8] sm:$0xf]
    %v2429 = vld [vmem:[%s2204 + $0xc] sm:$0xf]
    %v2430 = vld [vmem:[%s2204 + $0x10] sm:$0xf]
    %v2431 = vld [vmem:[%s2204 + $0x14] sm:$0xf]
    %v2432 = vld [vmem:[%s2204 + $0x18] sm:$0xf]
    %v2433 = vld [vmem:[%s2204 + $0x1c] sm:$0xf]
    %v2434 = vld [vmem:[%s2204 + $0x20] sm:$0xf]
    %v2435 = vld [vmem:[%s2204 + $0x24] sm:$0xf]
    %v2436 = vld [vmem:[%s2204 + $0x28] sm:$0xf]
    %v2437 = vld [vmem:[%s2204 + $0x2c] sm:$0xf]
    %v2438 = vld [vmem:[%s2204 + $0x30] sm:$0xf]
    %v2439 = vld [vmem:[%s2204 + $0x34] sm:$0xf]
    %v2440 = vld [vmem:[%s2204 + $0x38] sm:$0xf]
    %v2441 = vld [vmem:[%s2204 + $0x3c] sm:$0xf]
    %v2442 = vld [vmem:[%s3 + $0x12] sm:$0x1]
    %v2459 = vunpack.c.l.b16 %v2426
    %v2460 = vunpack.c.l.b16 %v2427
    %v2461 = vunpack.c.l.b16 %v2428
    %v2462 = vunpack.c.l.b16 %v2429
    %v2463 = vunpack.c.l.b16 %v2430
    %v2464 = vunpack.c.l.b16 %v2431
    %v2465 = vunpack.c.l.b16 %v2432
    %v2466 = vunpack.c.l.b16 %v2433
    %v2467 = vunpack.c.l.b16 %v2434
    %v2468 = vunpack.c.l.b16 %v2435
    %v2469 = vunpack.c.l.b16 %v2436
    %v2470 = vunpack.c.l.b16 %v2437
    %v2471 = vunpack.c.l.b16 %v2438
    %v2472 = vunpack.c.l.b16 %v2439
    %v2473 = vunpack.c.l.b16 %v2440
    %v2474 = vunpack.c.l.b16 %v2441
    %v2475 = vpack.c.b16 %v2460, %v2459
    %v2476 = vpack.c.b16 %v2462, %v2461
    %v2477 = vpack.c.b16 %v2464, %v2463
    %v2478 = vpack.c.b16 %v2466, %v2465
    %v2479 = vpack.c.b16 %v2468, %v2467
    %v2480 = vpack.c.b16 %v2470, %v2469
    %v2481 = vpack.c.b16 %v2472, %v2471
    %v2482 = vpack.c.b16 %v2474, %v2473
    %2491 = vmatprep.subr.bf16.mxu0 0
    %2492 = vmatpush1.bf16.msra.mxu0 %v2475
    %2493 = vmatprep.subr.bf16.mxu0 0
    %2494 = vmatpush1.bf16.msra.mxu0 %v2476
    %2495 = vmatprep.subr.bf16.mxu0 0
    %2496 = vmatpush1.bf16.msra.mxu0 %v2477
    %2497 = vmatprep.subr.bf16.mxu0 0
    %2498 = vmatpush1.bf16.msra.mxu0 %v2478
    %2499 = vmatprep.subr.bf16.mxu0 0
    %2500 = vmatpush1.bf16.msra.mxu0 %v2479
    %2501 = vmatprep.subr.bf16.mxu0 0
    %2502 = vmatpush1.bf16.msra.mxu0 %v2480
    %2503 = vmatprep.subr.bf16.mxu0 0
    %2504 = vmatpush1.bf16.msra.mxu0 %v2481
    %2505 = vmatprep.subr.bf16.mxu0 0
    %2506 = vmatpush1.bf16.msra.mxu0 %v2482
    %2507 = vmatprep.subr.bf16.mxu0 0
    %2508 = vmatpush1.bf16.msra.mxu0 0
    %2509 = vmatprep.subr.bf16.mxu0 0
    %2510 = vmatpush1.bf16.msra.mxu0 0
    %2511 = vmatprep.subr.bf16.mxu0 0
    %2512 = vmatpush1.bf16.msra.mxu0 0
    %2513 = vmatprep.subr.bf16.mxu0 0
    %2514 = vmatpush1.bf16.msra.mxu0 0
    %2515 = vmatprep.subr.bf16.mxu0 0
    %2516 = vmatpush1.bf16.msra.mxu0 0
    %2517 = vmatprep.subr.bf16.mxu0 0
    %2518 = vmatpush1.bf16.msra.mxu0 0
    %2519 = vmatprep.subr.bf16.mxu0 0
    %2520 = vmatpush1.bf16.msra.mxu0 0
    %2521 = vmatprep.subr.bf16.mxu0 0
    %2522 = vmatpush1.bf16.msra.mxu0 0
    %2523 = vmatprep.mubr.bf16.mxu0 0
    %2524 = vmatmul.mubr.bf16.gmra.mrb[0].mxu0 %v2425
    %v2525 = vpop.f32.mrb[0].mxu0
    %v2526 = vadd.f32 %v2442, %v2525
    %v2527 = vpop.f32.mrb[0].mxu0
    %v2528 = vpop.f32.mrb[0].mxu0
    %v2529 = vpop.f32.mrb[0].mxu0
    %2530 = vdwg.mxu0
    %2531 = vst.msk [vmem:[#allocation6 + $0x1] sm:$0x1] %vm2310, %v2526
    // Predicated region
    $region18: #{gt_model_forward.1} parent=1 // pred_check
      _
    $region19: #{gt_model_forward.1} parent=1 // pred_check_branch
      %2533 = sbr.rel (0) target = $region21
    $region20: #{gt_model_forward.1} parent=1 // pred_region
      %s2535 = ssub.s32 32, 32
      %2536 = vsyncadd [#allocation7], %s2535
      %s2538 = sshll.u32 [#allocation6], 4
      %s2539 = int_to_ptr.vmem [resolvable:$true] %s2538
      %2541 = dma.vmem_to_hbm [thread:$0]  %s2539, 32, %s4, [#allocation7]
    $region21: #{gt_model_forward.1} parent=1 // pred_fallthru
      _
    // Predicated region
    $region22: #{gt_model_forward.1} parent=1 // pred_check
      _
    $region23: #{gt_model_forward.1} parent=1 // pred_check_branch
      %2543 = sbr.rel (0) target = $region25
    $region24: #{gt_model_forward.1} parent=1 // pred_region
      %2544 = dma.done [#allocation7], 32
    $region25: #{gt_model_forward.1} parent=1 // pred_fallthru
      _
    %2545 = vsyncpa [#allocation7], 1

</llo_original>
